<compile_context>
chip_gen: v7x
topology: tpu7x:2x2x1
jax: 0.10.0
libtpu: 0.0.40
codegen_flags: <defaults>
</compile_context>

<pallas_src>
import math
from functools import partial

import jax
import jax.numpy as jnp
from jax.experimental import pallas as pl
from jax.experimental.pallas import tpu as pltpu

BN_EPS = 1e-5


def _round_up(x, m):
    return ((x + m - 1) // m) * m


def _vmem_limit_bytes():
    """Generation-aware VMEM budget: ~3/4 of physical VMEM, capped at 100 MiB."""
    default = 48 * 1024 * 1024          # safe on every generation (v7x has 64 MiB/core)
    try:
        cap = int(pltpu.get_tpu_info().vmem_capacity_bytes)
    except Exception:                   # API/attribute differences across versions
        return default
    return max(16 * 1024 * 1024, min((cap * 3) // 4, 100 * 1024 * 1024))


def _strip_vmem_bytes(TH, W, Cin, Cout, COUT_P, K, pad):
    """Rough per-grid-step VMEM footprint of the fused conv+BN+ReLU pass."""
    THp, Wp = TH + 2 * pad, W + 2 * pad
    rows = TH * W
    return (2 * THp * Wp * Cin * 2       # input strip block, double buffered (bf16)
            + 2 * K * COUT_P * 2         # weights (conservatively counted x2)
            + rows * K * 2               # im2col patch scratch (bf16)
            + 2 * rows * COUT_P * 4      # f32 matmul result + relayout headroom
            + 2 * rows * Cout * 4)       # output block, double buffered (f32)


def _pick_strip_height(H, W, Cin, Cout, COUT_P, K, pad, vmem_limit, max_rows):
    """Largest strip height TH dividing H whose blocks fit the VMEM budget."""
    budget = (vmem_limit * 3) // 5       # leave headroom for Mosaic temporaries
    best = 1
    for TH in range(1, H + 1):
        if H % TH:
            continue
        if TH > 1 and TH * W > max_rows:
            continue
        if TH > 1 and _strip_vmem_bytes(TH, W, Cin, Cout, COUT_P, K, pad) > budget:
            continue
        best = max(best, TH)
    return best


def _fill_patch(x_ref, patch_ref, TH, W, KH, KW):
    """im2col for one haloed strip: fill the (TH*W, KH*KW*Cin) bf16 patch scratch.

    x_ref block: (1, TH+KH-1, W+KW-1, Cin).  Each shifted window is written once into
    its K-column slot; the single K=KH*KW*Cin matmul that follows replaces the 9
    separate K=Cin matmuls (and 9 VALU-side accumulations) of the previous version.
    """
    Cin = x_ref.shape[-1]
    x = x_ref[0]                                    # (THp, Wp, Cin) bf16
    t = 0
    for dh in range(KH):                            # static 3x3 tap loop
        for dw in range(KW):
            win = x[dh:dh + TH, dw:dw + W, :]       # (TH, W, Cin)
            patch_ref[:, t * Cin:(t + 1) * Cin] = win.reshape(TH * W, Cin)
            t += 1


def _conv_stats_kernel(xs_ref, w_ref, stats_ref, patch_ref, *, TH, W, KH, KW):
    """Pass 1: conv of one strip (single K=9*Cin MXU matmul) -> BN partial statistics.

    stats_ref block (1, 2, COUT_P) holds [channel sum, centered sum of squares].
    The conv output stays in VMEM — nothing big is written back to HBM.
    """
    _fill_patch(xs_ref, patch_ref, TH, W, KH, KW)
    y = jnp.dot(patch_ref[...], w_ref[...],
                preferred_element_type=jnp.float32)          # (TH*W, COUT_P) f32
    s = jnp.sum(y, axis=0, keepdims=True)                    # (1, COUT_P)
    d = y - s * (1.0 / (TH * W))                             # center within this strip
    stats_ref[0, 0:1, :] = s
    stats_ref[0, 1:2, :] = jnp.sum(d * d, axis=0, keepdims=True)


def _conv_bn_relu_kernel(xs_ref, w_ref, scale_ref, shift_ref, o_ref, patch_ref,
                         *, TH, W, KH, KW):
    """Pass 2: conv (recomputed) + fused BN affine + ReLU; writes only :Cout channels."""
    Cout = o_ref.shape[-1]
    _fill_patch(xs_ref, patch_ref, TH, W, KH, KW)
    y = jnp.dot(patch_ref[...], w_ref[...],
                preferred_element_type=jnp.float32)          # (TH*W, COUT_P) f32
    y = jnp.maximum(y * scale_ref[...] + shift_ref[...], 0.0)
    o_ref[0] = y[:, :Cout].reshape(TH, W, Cout)              # unpadded-Cout store


def conv_block_forward(x_nchw, weight, bias, gamma, beta, kernel_size=3, max_rows=2048):
    """ConvBlock forward: Conv2d(k, stride 1, 'same') + BatchNorm2d(batch stats) + ReLU.

    x_nchw: (N, Cin, H, W) f32; weight: (Cout, Cin, KH, KW); bias/gamma/beta: (Cout,).
    Returns (N, Cout, H, W) f32 (NCHW, PyTorch interface parity).
    """
    N, Cin, H, W = x_nchw.shape
    Cout, Cin_w, KH, KW = weight.shape
    assert Cin == Cin_w and KH == kernel_size and KW == kernel_size
    pad = kernel_size // 2               # 'same' padding, stride 1
    if max_rows is None:
        max_rows = 2048

    # Conv bias is mathematically cancelled by the training-mode BatchNorm mean
    # subtraction immediately after it, so it is not sent to the kernel.
    # TODO(synk): re-add bias (and running stats) if eval-mode BN is ever required.
    del bias

    COUT_P = _round_up(Cout, 128)        # lane-dense MXU output tile
    K = KH * KW * Cin                    # single-matmul contraction depth
    Wp = W + 2 * pad
    M = N * H * W

    vmem_limit = _vmem_limit_bytes()
    TH = _pick_strip_height(H, W, Cin, Cout, COUT_P, K, pad, vmem_limit, max_rows)
    S = H // TH
    THp = TH + 2 * pad
    NS = N * S
    ROWS = TH * W

    # ---- wrapper-side layout plumbing (cheap, done once) ----
    x_nhwc = jnp.transpose(x_nchw.astype(jnp.bfloat16), (0, 2, 3, 1))    # (N,H,W,Cin)
    xp = jnp.pad(x_nhwc, ((0, 0), (pad, pad), (pad, pad), (0, 0)))       # zero pad
    # Overlapping haloed row strips: (N, S, THp, Wp, Cin) -> (NS, THp, Wp, Cin).
    row_idx = jnp.arange(S)[:, None] * TH + jnp.arange(THp)[None, :]
    xs = xp[:, row_idx].reshape(NS, THp, Wp, Cin)

    # weight (Cout,Cin,KH,KW) -> (KH,KW,Cin,Cout) -> (K, Cout), zero-pad Cout -> COUT_P.
    w_r = jnp.transpose(weight, (2, 3, 1, 0)).reshape(K, Cout).astype(jnp.bfloat16)
    w_p = jnp.zeros((K, COUT_P), jnp.bfloat16).at[:, :Cout].set(w_r)
    gamma_p = jnp.zeros((COUT_P,), jnp.float32).at[:Cout].set(gamma.astype(jnp.float32))
    beta_p = jnp.zeros((COUT_P,), jnp.float32).at[:Cout].set(beta.astype(jnp.float32))

    cparams = pltpu.CompilerParams(
        dimension_semantics=("parallel",),
        vmem_limit_bytes=vmem_limit,
    )
    conv_flops = 2 * M * K * COUT_P
    strip_bytes = xs.size * 2 + w_p.size * 2

    # ---- pass 1: per-strip BN partial statistics (conv output stays in VMEM) ----
    stats = pl.pallas_call(
        partial(_conv_stats_kernel, TH=TH, W=W, KH=KH, KW=KW),
        out_shape=jax.ShapeDtypeStruct((NS, 2, COUT_P), jnp.float32),
        grid=(NS,),
        in_specs=[
            pl.BlockSpec((1, THp, Wp, Cin), lambda i: (i, 0, 0, 0)),
            pl.BlockSpec((K, COUT_P), lambda i: (0, 0)),
        ],
        out_specs=pl.BlockSpec((1, 2, COUT_P), lambda i: (i, 0, 0)),
        scratch_shapes=[pltpu.VMEM((ROWS, K), jnp.bfloat16)],
        compiler_params=cparams,
        cost_estimate=pl.CostEstimate(
            flops=conv_flops, transcendentals=0,
            bytes_accessed=strip_bytes + NS * 2 * COUT_P * 4),
    )(xs, w_p)

    # ---- per-channel scale/shift (tiny, plain JAX); pooled-variance merge ----
    sums = stats[:, 0, :]                                   # (NS, COUT_P)
    css = stats[:, 1, :]                                    # centered SS per strip
    mean = jnp.sum(sums, axis=0) / M
    mu_b = sums / ROWS
    var = (jnp.sum(css, axis=0)
           + ROWS * jnp.sum((mu_b - mean) ** 2, axis=0)) / M   # biased, as in BN training
    var = jnp.maximum(var, 0.0)
    inv_std = jax.lax.rsqrt(var + BN_EPS)
    scale = (gamma_p * inv_std).reshape(1, COUT_P)
    shift = (beta_p - mean * gamma_p * inv_std).reshape(1, COUT_P)

    # ---- pass 2: conv + BN + ReLU fused; HBM sees only the unpadded Cout channels ----
    out = pl.pallas_call(
        partial(_conv_bn_relu_kernel, TH=TH, W=W, KH=KH, KW=KW),
        out_shape=jax.ShapeDtypeStruct((NS, TH, W, Cout), jnp.float32),
        grid=(NS,),
        in_specs=[
            pl.BlockSpec((1, THp, Wp, Cin), lambda i: (i, 0, 0, 0)),
            pl.BlockSpec((K, COUT_P), lambda i: (0, 0)),
            pl.BlockSpec((1, COUT_P), lambda i: (0, 0)),
            pl.BlockSpec((1, COUT_P), lambda i: (0, 0)),
        ],
        out_specs=pl.BlockSpec((1, TH, W, Cout), lambda i: (i, 0, 0, 0)),
        scratch_shapes=[pltpu.VMEM((ROWS, K), jnp.bfloat16)],
        compiler_params=cparams,
        cost_estimate=pl.CostEstimate(
            flops=conv_flops, transcendentals=0,
            bytes_accessed=strip_bytes + M * Cout * 4 + 2 * COUT_P * 4),
    )(xs, w_p, scale, shift)

    # (NS, TH, W, Cout) -> (N, H, W, Cout) -> NCHW (kept for PyTorch interface parity).
    out_nhwc = out.reshape(N, H, W, Cout)
    return jnp.transpose(out_nhwc, (0, 3, 1, 2))


def _reference(x, weight, bias, gamma, beta):
    """Plain-JAX f32 reference: Conv2d(+bias) -> BatchNorm2d(batch stats) -> ReLU."""
    pad = weight.shape[-1] // 2
    y = jax.lax.conv_general_dilated(
        x, weight, window_strides=(1, 1), padding=((pad, pad), (pad, pad)),
        dimension_numbers=("NCHW", "OIHW", "NCHW"))
    y = y + bias.reshape(1, -1, 1, 1)
    mean = jnp.mean(y, axis=(0, 2, 3), keepdims=True)
    var = jnp.mean((y - mean) ** 2, axis=(0, 2, 3), keepdims=True)
    y_hat = (y - mean) * jax.lax.rsqrt(var + BN_EPS)
    return jnp.maximum(gamma.reshape(1, -1, 1, 1) * y_hat + beta.reshape(1, -1, 1, 1),
                       0.0)


if __name__ == "__main__":
    def run_case(key, N, Cin, H, W, Cout, KS, max_rows=2048):
        kx, kw, kb = jax.random.split(key, 3)
        x = jax.random.normal(kx, (N, Cin, H, W), dtype=jnp.float32)

        # Kaiming-uniform-style init (like nn.Conv2d defaults).
        fan_in = Cin * KS * KS
        bound = 1.0 / math.sqrt(fan_in)
        weight = jax.random.uniform(kw, (Cout, Cin, KS, KS), jnp.float32, -bound, bound)
        bias = jax.random.uniform(kb, (Cout,), jnp.float32, -bound, bound)
        gamma = jnp.ones((Cout,), jnp.float32)   # BatchNorm2d default init
        beta = jnp.zeros((Cout,), jnp.float32)

        fwd = jax.jit(conv_block_forward, static_argnames=("kernel_size", "max_rows"))
        out = jax.block_until_ready(
            fwd(x, weight, bias, gamma, beta, kernel_size=KS, max_rows=max_rows))

        assert out.shape == (N, Cout, H, W)
        assert bool(jnp.all(out >= 0.0))         # ReLU sanity check
        ref = jax.block_until_ready(_reference(x, weight, bias, gamma, beta))
        max_err = float(jnp.max(jnp.abs(out - ref)))
        assert max_err < 0.1, f"max abs error vs reference too large: {max_err}"

    key = jax.random.PRNGKey(0)
    k1, k2 = jax.random.split(key)
    # Shapes from the module spec: batch=2, in=4, out=8, 16x16, k=3, stride 1, 'same'.
    run_case(k1, N=2, Cin=4, H=16, W=16, Cout=8, KS=3)
    # Same shapes with a small row budget to force the haloed multi-strip path
    # (TH=4 -> 4 strips per image, 8 "parallel" grid steps).
    run_case(k2, N=2, Cin=4, H=16, W=16, Cout=8, KS=3, max_rows=64)
    print("KERNEL_OK")
</pallas_src>

<mosaic_0001>
module attributes {stable_mosaic.version = 11 : i64} {
  func.func @_conv_stats_kernel(%arg0: i32, %arg1: memref<1x18x18x4xbf16, #tpu.memory_space<vmem>>, %arg2: memref<36x128xbf16, #tpu.memory_space<vmem>>, %arg3: memref<1x2x128xf32, #tpu.memory_space<vmem>>, %arg4: memref<256x36xbf16, #tpu.memory_space<vmem>>) attributes {dimension_semantics = [#tpu.dimension_semantics<parallel>], iteration_bounds = array<i64: 2>, scalar_prefetch = 0 : i64, scratch_operands = 1 : i64, tpu.core_type = #tpu.core_type<tc>, window_params = [{transform_indices = @transform_0, window_bounds = array<i64: 1, 18, 18, 4>}, {pipeline_mode = #tpu.pipeline_mode<synchronous>, transform_indices = @transform_1, window_bounds = array<i64: 36, 128>}, {transform_indices = @transform_2, window_bounds = array<i64: 1, 2, 128>}]} {
    %c0 = arith.constant 0 : index
    %c0_0 = arith.constant 0 : index
    %c0_1 = arith.constant 0 : index
    %c0_2 = arith.constant 0 : index
    %0 = vector.load %arg1[%c0, %c0_0, %c0_1, %c0_2] : memref<1x18x18x4xbf16, #tpu.memory_space<vmem>>, vector<1x18x18x4xbf16>
    %1 = vector.shape_cast %0 : vector<1x18x18x4xbf16> to vector<18x18x4xbf16>
    %2 = vector.extract_strided_slice %1 {offsets = [0, 0, 0], sizes = [16, 16, 4], strides = [1, 1, 1]} : vector<18x18x4xbf16> to vector<16x16x4xbf16>
    %3 = vector.shape_cast %2 : vector<16x16x4xbf16> to vector<256x4xbf16>
    %c0_3 = arith.constant 0 : index
    %c0_4 = arith.constant 0 : index
    %4 = vector.load %arg4[%c0_3, %c0_4] : memref<256x36xbf16, #tpu.memory_space<vmem>>, vector<256x4xbf16>
    tpu.vector_store %arg4[%c0_3, %c0_4], %3 {strides = array<i32>} : memref<256x36xbf16, #tpu.memory_space<vmem>>, vector<256x4xbf16>,
    %5 = vector.extract_strided_slice %1 {offsets = [0, 1, 0], sizes = [16, 16, 4], strides = [1, 1, 1]} : vector<18x18x4xbf16> to vector<16x16x4xbf16>
    %6 = vector.shape_cast %5 : vector<16x16x4xbf16> to vector<256x4xbf16>
    %c0_5 = arith.constant 0 : index
    %c4 = arith.constant 4 : index
    %7 = vector.load %arg4[%c0_5, %c4] : memref<256x36xbf16, #tpu.memory_space<vmem>>, vector<256x4xbf16>
    tpu.vector_store %arg4[%c0_5, %c4], %6 {strides = array<i32>} : memref<256x36xbf16, #tpu.memory_space<vmem>>, vector<256x4xbf16>,
    %8 = vector.extract_strided_slice %1 {offsets = [0, 2, 0], sizes = [16, 16, 4], strides = [1, 1, 1]} : vector<18x18x4xbf16> to vector<16x16x4xbf16>
    %9 = vector.shape_cast %8 : vector<16x16x4xbf16> to vector<256x4xbf16>
    %c0_6 = arith.constant 0 : index
    %c8 = arith.constant 8 : index
    %10 = vector.load %arg4[%c0_6, %c8] : memref<256x36xbf16, #tpu.memory_space<vmem>>, vector<256x4xbf16>
    tpu.vector_store %arg4[%c0_6, %c8], %9 {strides = array<i32>} : memref<256x36xbf16, #tpu.memory_space<vmem>>, vector<256x4xbf16>,
    %11 = vector.extract_strided_slice %1 {offsets = [1, 0, 0], sizes = [16, 16, 4], strides = [1, 1, 1]} : vector<18x18x4xbf16> to vector<16x16x4xbf16>
    %12 = vector.shape_cast %11 : vector<16x16x4xbf16> to vector<256x4xbf16>
    %c0_7 = arith.constant 0 : index
    %c12 = arith.constant 12 : index
    %13 = vector.load %arg4[%c0_7, %c12] : memref<256x36xbf16, #tpu.memory_space<vmem>>, vector<256x4xbf16>
    tpu.vector_store %arg4[%c0_7, %c12], %12 {strides = array<i32>} : memref<256x36xbf16, #tpu.memory_space<vmem>>, vector<256x4xbf16>,
    %14 = vector.extract_strided_slice %1 {offsets = [1, 1, 0], sizes = [16, 16, 4], strides = [1, 1, 1]} : vector<18x18x4xbf16> to vector<16x16x4xbf16>
    %15 = vector.shape_cast %14 : vector<16x16x4xbf16> to vector<256x4xbf16>
    %c0_8 = arith.constant 0 : index
    %c16 = arith.constant 16 : index
    %16 = vector.load %arg4[%c0_8, %c16] : memref<256x36xbf16, #tpu.memory_space<vmem>>, vector<256x4xbf16>
    tpu.vector_store %arg4[%c0_8, %c16], %15 {strides = array<i32>} : memref<256x36xbf16, #tpu.memory_space<vmem>>, vector<256x4xbf16>,
    %17 = vector.extract_strided_slice %1 {offsets = [1, 2, 0], sizes = [16, 16, 4], strides = [1, 1, 1]} : vector<18x18x4xbf16> to vector<16x16x4xbf16>
    %18 = vector.shape_cast %17 : vector<16x16x4xbf16> to vector<256x4xbf16>
    %c0_9 = arith.constant 0 : index
    %c20 = arith.constant 20 : index
    %19 = vector.load %arg4[%c0_9, %c20] : memref<256x36xbf16, #tpu.memory_space<vmem>>, vector<256x4xbf16>
    tpu.vector_store %arg4[%c0_9, %c20], %18 {strides = array<i32>} : memref<256x36xbf16, #tpu.memory_space<vmem>>, vector<256x4xbf16>,
    %20 = vector.extract_strided_slice %1 {offsets = [2, 0, 0], sizes = [16, 16, 4], strides = [1, 1, 1]} : vector<18x18x4xbf16> to vector<16x16x4xbf16>
    %21 = vector.shape_cast %20 : vector<16x16x4xbf16> to vector<256x4xbf16>
    %c0_10 = arith.constant 0 : index
    %c24 = arith.constant 24 : index
    %22 = vector.load %arg4[%c0_10, %c24] : memref<256x36xbf16, #tpu.memory_space<vmem>>, vector<256x4xbf16>
    tpu.vector_store %arg4[%c0_10, %c24], %21 {strides = array<i32>} : memref<256x36xbf16, #tpu.memory_space<vmem>>, vector<256x4xbf16>,
    %23 = vector.extract_strided_slice %1 {offsets = [2, 1, 0], sizes = [16, 16, 4], strides = [1, 1, 1]} : vector<18x18x4xbf16> to vector<16x16x4xbf16>
    %24 = vector.shape_cast %23 : vector<16x16x4xbf16> to vector<256x4xbf16>
    %c0_11 = arith.constant 0 : index
    %c28 = arith.constant 28 : index
    %25 = vector.load %arg4[%c0_11, %c28] : memref<256x36xbf16, #tpu.memory_space<vmem>>, vector<256x4xbf16>
    tpu.vector_store %arg4[%c0_11, %c28], %24 {strides = array<i32>} : memref<256x36xbf16, #tpu.memory_space<vmem>>, vector<256x4xbf16>,
    %26 = vector.extract_strided_slice %1 {offsets = [2, 2, 0], sizes = [16, 16, 4], strides = [1, 1, 1]} : vector<18x18x4xbf16> to vector<16x16x4xbf16>
    %27 = vector.shape_cast %26 : vector<16x16x4xbf16> to vector<256x4xbf16>
    %c0_12 = arith.constant 0 : index
    %c32 = arith.constant 32 : index
    %28 = vector.load %arg4[%c0_12, %c32] : memref<256x36xbf16, #tpu.memory_space<vmem>>, vector<256x4xbf16>
    tpu.vector_store %arg4[%c0_12, %c32], %27 {strides = array<i32>} : memref<256x36xbf16, #tpu.memory_space<vmem>>, vector<256x4xbf16>,
    %c0_13 = arith.constant 0 : index
    %c0_14 = arith.constant 0 : index
    %29 = vector.load %arg4[%c0_13, %c0_14] : memref<256x36xbf16, #tpu.memory_space<vmem>>, vector<256x36xbf16>
    %c0_15 = arith.constant 0 : index
    %c0_16 = arith.constant 0 : index
    %30 = vector.load %arg2[%c0_15, %c0_16] : memref<36x128xbf16, #tpu.memory_space<vmem>>, vector<36x128xbf16>
    %cst = arith.constant dense<0.000000e+00> : vector<256x128xf32>
    %31 = tpu.matmul %29, %30, %cst {dimension_numbers = #tpu.dot_dimension_numbers<[1], [0], [0], [1], [0, 0, 1, 1], [], []>} : vector<256x36xbf16>, vector<36x128xbf16>, vector<256x128xf32> -> vector<256x128xf32>
    %cst_17 = arith.constant dense<0.000000e+00> : vector<128xf32>
    %32 = vector.multi_reduction <add>, %31, %cst_17 [0] : vector<256x128xf32> to vector<128xf32>
    %33 = vector.shape_cast %32 : vector<128xf32> to vector<1x128xf32>
    %cst_18 = arith.constant 3.906250e-03 : f32
    %34 = vector.broadcast %cst_18 : f32 to vector<1x128xf32>
    %35 = arith.mulf %33, %34 : vector<1x128xf32>
    %36 = vector.broadcast %35 : vector<1x128xf32> to vector<256x128xf32>
    %37 = arith.subf %31, %36 : vector<256x128xf32>
    %c0_19 = arith.constant 0 : index
    %c0_20 = arith.constant 0 : index
    %c0_21 = arith.constant 0 : index
    %38 = vector.load %arg3[%c0_19, %c0_20, %c0_21] : memref<1x2x128xf32, #tpu.memory_space<vmem>>, vector<1x1x128xf32>
    %39 = vector.shape_cast %38 : vector<1x1x128xf32> to vector<1x128xf32>
    %40 = vector.shape_cast %33 : vector<1x128xf32> to vector<1x1x128xf32>
    tpu.vector_store %arg3[%c0_19, %c0_20, %c0_21], %40 {strides = array<i32>} : memref<1x2x128xf32, #tpu.memory_space<vmem>>, vector<1x1x128xf32>,
    %41 = arith.mulf %37, %37 : vector<256x128xf32>
    %cst_22 = arith.constant dense<0.000000e+00> : vector<128xf32>
    %42 = vector.multi_reduction <add>, %41, %cst_22 [0] : vector<256x128xf32> to vector<128xf32>
    %43 = vector.shape_cast %42 : vector<128xf32> to vector<1x128xf32>
    %c0_23 = arith.constant 0 : index
    %c1 = arith.constant 1 : index
    %c0_24 = arith.constant 0 : index
    %44 = vector.load %arg3[%c0_23, %c1, %c0_24] : memref<1x2x128xf32, #tpu.memory_space<vmem>>, vector<1x1x128xf32>
    %45 = vector.shape_cast %44 : vector<1x1x128xf32> to vector<1x128xf32>
    %46 = vector.shape_cast %43 : vector<1x128xf32> to vector<1x1x128xf32>
    tpu.vector_store %arg3[%c0_23, %c1, %c0_24], %46 {strides = array<i32>} : memref<1x2x128xf32, #tpu.memory_space<vmem>>, vector<1x1x128xf32>,
    return
  }
  func.func @transform_0(%arg0: i32) -> (i32, i32, i32, i32) {
    %c0_i32 = arith.constant 0 : i32
    %c0_i32_0 = arith.constant 0 : i32
    %c0_i32_1 = arith.constant 0 : i32
    %c0_i32_2 = arith.constant 0 : i32
    return %arg0, %c0_i32, %c0_i32_0, %c0_i32_1 : i32, i32, i32, i32
  }
  func.func @transform_1(%arg0: i32) -> (i32, i32) {
    %c0_i32 = arith.constant 0 : i32
    %c0_i32_0 = arith.constant 0 : i32
    %c0_i32_1 = arith.constant 0 : i32
    return %c0_i32, %c0_i32_0 : i32, i32
  }
  func.func @transform_2(%arg0: i32) -> (i32, i32, i32) {
    %c0_i32 = arith.constant 0 : i32
    %c0_i32_0 = arith.constant 0 : i32
    %c0_i32_1 = arith.constant 0 : i32
    return %arg0, %c0_i32, %c0_i32_0 : i32, i32, i32
  }
}

module attributes {stable_mosaic.version = 11 : i64} {
  func.func @_conv_bn_relu_kernel(%arg0: i32, %arg1: memref<1x18x18x4xbf16, #tpu.memory_space<vmem>>, %arg2: memref<36x128xbf16, #tpu.memory_space<vmem>>, %arg3: memref<1x128xf32, #tpu.memory_space<vmem>>, %arg4: memref<1x128xf32, #tpu.memory_space<vmem>>, %arg5: memref<1x16x16x8xf32, #tpu.memory_space<vmem>>, %arg6: memref<256x36xbf16, #tpu.memory_space<vmem>>) attributes {dimension_semantics = [#tpu.dimension_semantics<parallel>], iteration_bounds = array<i64: 2>, scalar_prefetch = 0 : i64, scratch_operands = 1 : i64, tpu.core_type = #tpu.core_type<tc>, window_params = [{transform_indices = @transform_0, window_bounds = array<i64: 1, 18, 18, 4>}, {pipeline_mode = #tpu.pipeline_mode<synchronous>, transform_indices = @transform_1, window_bounds = array<i64: 36, 128>}, {pipeline_mode = #tpu.pipeline_mode<synchronous>, transform_indices = @transform_2, window_bounds = array<i64: 1, 128>}, {pipeline_mode = #tpu.pipeline_mode<synchronous>, transform_indices = @transform_3, window_bounds = array<i64: 1, 128>}, {transform_indices = @transform_4, window_bounds = array<i64: 1, 16, 16, 8>}]} {
    %c0 = arith.constant 0 : index
    %c0_0 = arith.constant 0 : index
    %c0_1 = arith.constant 0 : index
    %c0_2 = arith.constant 0 : index
    %0 = vector.load %arg1[%c0, %c0_0, %c0_1, %c0_2] : memref<1x18x18x4xbf16, #tpu.memory_space<vmem>>, vector<1x18x18x4xbf16>
    %1 = vector.shape_cast %0 : vector<1x18x18x4xbf16> to vector<18x18x4xbf16>
    %2 = vector.extract_strided_slice %1 {offsets = [0, 0, 0], sizes = [16, 16, 4], strides = [1, 1, 1]} : vector<18x18x4xbf16> to vector<16x16x4xbf16>
    %3 = vector.shape_cast %2 : vector<16x16x4xbf16> to vector<256x4xbf16>
    %c0_3 = arith.constant 0 : index
    %c0_4 = arith.constant 0 : index
    %4 = vector.load %arg6[%c0_3, %c0_4] : memref<256x36xbf16, #tpu.memory_space<vmem>>, vector<256x4xbf16>
    tpu.vector_store %arg6[%c0_3, %c0_4], %3 {strides = array<i32>} : memref<256x36xbf16, #tpu.memory_space<vmem>>, vector<256x4xbf16>,
    %5 = vector.extract_strided_slice %1 {offsets = [0, 1, 0], sizes = [16, 16, 4], strides = [1, 1, 1]} : vector<18x18x4xbf16> to vector<16x16x4xbf16>
    %6 = vector.shape_cast %5 : vector<16x16x4xbf16> to vector<256x4xbf16>
    %c0_5 = arith.constant 0 : index
    %c4 = arith.constant 4 : index
    %7 = vector.load %arg6[%c0_5, %c4] : memref<256x36xbf16, #tpu.memory_space<vmem>>, vector<256x4xbf16>
    tpu.vector_store %arg6[%c0_5, %c4], %6 {strides = array<i32>} : memref<256x36xbf16, #tpu.memory_space<vmem>>, vector<256x4xbf16>,
    %8 = vector.extract_strided_slice %1 {offsets = [0, 2, 0], sizes = [16, 16, 4], strides = [1, 1, 1]} : vector<18x18x4xbf16> to vector<16x16x4xbf16>
    %9 = vector.shape_cast %8 : vector<16x16x4xbf16> to vector<256x4xbf16>
    %c0_6 = arith.constant 0 : index
    %c8 = arith.constant 8 : index
    %10 = vector.load %arg6[%c0_6, %c8] : memref<256x36xbf16, #tpu.memory_space<vmem>>, vector<256x4xbf16>
    tpu.vector_store %arg6[%c0_6, %c8], %9 {strides = array<i32>} : memref<256x36xbf16, #tpu.memory_space<vmem>>, vector<256x4xbf16>,
    %11 = vector.extract_strided_slice %1 {offsets = [1, 0, 0], sizes = [16, 16, 4], strides = [1, 1, 1]} : vector<18x18x4xbf16> to vector<16x16x4xbf16>
    %12 = vector.shape_cast %11 : vector<16x16x4xbf16> to vector<256x4xbf16>
    %c0_7 = arith.constant 0 : index
    %c12 = arith.constant 12 : index
    %13 = vector.load %arg6[%c0_7, %c12] : memref<256x36xbf16, #tpu.memory_space<vmem>>, vector<256x4xbf16>
    tpu.vector_store %arg6[%c0_7, %c12], %12 {strides = array<i32>} : memref<256x36xbf16, #tpu.memory_space<vmem>>, vector<256x4xbf16>,
    %14 = vector.extract_strided_slice %1 {offsets = [1, 1, 0], sizes = [16, 16, 4], strides = [1, 1, 1]} : vector<18x18x4xbf16> to vector<16x16x4xbf16>
    %15 = vector.shape_cast %14 : vector<16x16x4xbf16> to vector<256x4xbf16>
    %c0_8 = arith.constant 0 : index
    %c16 = arith.constant 16 : index
    %16 = vector.load %arg6[%c0_8, %c16] : memref<256x36xbf16, #tpu.memory_space<vmem>>, vector<256x4xbf16>
    tpu.vector_store %arg6[%c0_8, %c16], %15 {strides = array<i32>} : memref<256x36xbf16, #tpu.memory_space<vmem>>, vector<256x4xbf16>,
    %17 = vector.extract_strided_slice %1 {offsets = [1, 2, 0], sizes = [16, 16, 4], strides = [1, 1, 1]} : vector<18x18x4xbf16> to vector<16x16x4xbf16>
    %18 = vector.shape_cast %17 : vector<16x16x4xbf16> to vector<256x4xbf16>
    %c0_9 = arith.constant 0 : index
    %c20 = arith.constant 20 : index
    %19 = vector.load %arg6[%c0_9, %c20] : memref<256x36xbf16, #tpu.memory_space<vmem>>, vector<256x4xbf16>
    tpu.vector_store %arg6[%c0_9, %c20], %18 {strides = array<i32>} : memref<256x36xbf16, #tpu.memory_space<vmem>>, vector<256x4xbf16>,
    %20 = vector.extract_strided_slice %1 {offsets = [2, 0, 0], sizes = [16, 16, 4], strides = [1, 1, 1]} : vector<18x18x4xbf16> to vector<16x16x4xbf16>
    %21 = vector.shape_cast %20 : vector<16x16x4xbf16> to vector<256x4xbf16>
    %c0_10 = arith.constant 0 : index
    %c24 = arith.constant 24 : index
    %22 = vector.load %arg6[%c0_10, %c24] : memref<256x36xbf16, #tpu.memory_space<vmem>>, vector<256x4xbf16>
    tpu.vector_store %arg6[%c0_10, %c24], %21 {strides = array<i32>} : memref<256x36xbf16, #tpu.memory_space<vmem>>, vector<256x4xbf16>,
    %23 = vector.extract_strided_slice %1 {offsets = [2, 1, 0], sizes = [16, 16, 4], strides = [1, 1, 1]} : vector<18x18x4xbf16> to vector<16x16x4xbf16>
    %24 = vector.shape_cast %23 : vector<16x16x4xbf16> to vector<256x4xbf16>
    %c0_11 = arith.constant 0 : index
    %c28 = arith.constant 28 : index
    %25 = vector.load %arg6[%c0_11, %c28] : memref<256x36xbf16, #tpu.memory_space<vmem>>, vector<256x4xbf16>
    tpu.vector_store %arg6[%c0_11, %c28], %24 {strides = array<i32>} : memref<256x36xbf16, #tpu.memory_space<vmem>>, vector<256x4xbf16>,
    %26 = vector.extract_strided_slice %1 {offsets = [2, 2, 0], sizes = [16, 16, 4], strides = [1, 1, 1]} : vector<18x18x4xbf16> to vector<16x16x4xbf16>
    %27 = vector.shape_cast %26 : vector<16x16x4xbf16> to vector<256x4xbf16>
    %c0_12 = arith.constant 0 : index
    %c32 = arith.constant 32 : index
    %28 = vector.load %arg6[%c0_12, %c32] : memref<256x36xbf16, #tpu.memory_space<vmem>>, vector<256x4xbf16>
    tpu.vector_store %arg6[%c0_12, %c32], %27 {strides = array<i32>} : memref<256x36xbf16, #tpu.memory_space<vmem>>, vector<256x4xbf16>,
    %c0_13 = arith.constant 0 : index
    %c0_14 = arith.constant 0 : index
    %29 = vector.load %arg6[%c0_13, %c0_14] : memref<256x36xbf16, #tpu.memory_space<vmem>>, vector<256x36xbf16>
    %c0_15 = arith.constant 0 : index
    %c0_16 = arith.constant 0 : index
    %30 = vector.load %arg2[%c0_15, %c0_16] : memref<36x128xbf16, #tpu.memory_space<vmem>>, vector<36x128xbf16>
    %cst = arith.constant dense<0.000000e+00> : vector<256x128xf32>
    %31 = tpu.matmul %29, %30, %cst {dimension_numbers = #tpu.dot_dimension_numbers<[1], [0], [0], [1], [0, 0, 1, 1], [], []>} : vector<256x36xbf16>, vector<36x128xbf16>, vector<256x128xf32> -> vector<256x128xf32>
    %c0_17 = arith.constant 0 : index
    %c0_18 = arith.constant 0 : index
    %32 = vector.load %arg3[%c0_17, %c0_18] : memref<1x128xf32, #tpu.memory_space<vmem>>, vector<1x128xf32>
    %33 = vector.broadcast %32 : vector<1x128xf32> to vector<256x128xf32>
    %34 = arith.mulf %31, %33 : vector<256x128xf32>
    %c0_19 = arith.constant 0 : index
    %c0_20 = arith.constant 0 : index
    %35 = vector.load %arg4[%c0_19, %c0_20] : memref<1x128xf32, #tpu.memory_space<vmem>>, vector<1x128xf32>
    %36 = vector.broadcast %35 : vector<1x128xf32> to vector<256x128xf32>
    %37 = arith.addf %34, %36 : vector<256x128xf32>
    %cst_21 = arith.constant 0.000000e+00 : f32
    %38 = vector.broadcast %cst_21 : f32 to vector<256x128xf32>
    %39 = arith.maximumf %37, %38 : vector<256x128xf32>
    %40 = vector.extract_strided_slice %39 {offsets = [0, 0], sizes = [256, 8], strides = [1, 1]} : vector<256x128xf32> to vector<256x8xf32>
    %41 = vector.shape_cast %40 : vector<256x8xf32> to vector<16x16x8xf32>
    %c0_22 = arith.constant 0 : index
    %c0_23 = arith.constant 0 : index
    %c0_24 = arith.constant 0 : index
    %c0_25 = arith.constant 0 : index
    %42 = vector.load %arg5[%c0_22, %c0_23, %c0_24, %c0_25] : memref<1x16x16x8xf32, #tpu.memory_space<vmem>>, vector<1x16x16x8xf32>
    %43 = vector.shape_cast %42 : vector<1x16x16x8xf32> to vector<16x16x8xf32>
    %44 = vector.shape_cast %41 : vector<16x16x8xf32> to vector<1x16x16x8xf32>
    tpu.vector_store %arg5[%c0_22, %c0_23, %c0_24, %c0_25], %44 {strides = array<i32>} : memref<1x16x16x8xf32, #tpu.memory_space<vmem>>, vector<1x16x16x8xf32>,
    return
  }
  func.func @transform_0(%arg0: i32) -> (i32, i32, i32, i32) {
    %c0_i32 = arith.constant 0 : i32
    %c0_i32_0 = arith.constant 0 : i32
    %c0_i32_1 = arith.constant 0 : i32
    %c0_i32_2 = arith.constant 0 : i32
    return %arg0, %c0_i32, %c0_i32_0, %c0_i32_1 : i32, i32, i32, i32
  }
  func.func @transform_1(%arg0: i32) -> (i32, i32) {
    %c0_i32 = arith.constant 0 : i32
    %c0_i32_0 = arith.constant 0 : i32
    %c0_i32_1 = arith.constant 0 : i32
    return %c0_i32, %c0_i32_0 : i32, i32
  }
  func.func @transform_2(%arg0: i32) -> (i32, i32) {
    %c0_i32 = arith.constant 0 : i32
    %c0_i32_0 = arith.constant 0 : i32
    %c0_i32_1 = arith.constant 0 : i32
    return %c0_i32, %c0_i32_0 : i32, i32
  }
  func.func @transform_3(%arg0: i32) -> (i32, i32) {
    %c0_i32 = arith.constant 0 : i32
    %c0_i32_0 = arith.constant 0 : i32
    %c0_i32_1 = arith.constant 0 : i32
    return %c0_i32, %c0_i32_0 : i32, i32
  }
  func.func @transform_4(%arg0: i32) -> (i32, i32, i32, i32) {
    %c0_i32 = arith.constant 0 : i32
    %c0_i32_0 = arith.constant 0 : i32
    %c0_i32_1 = arith.constant 0 : i32
    %c0_i32_2 = arith.constant 0 : i32
    return %arg0, %c0_i32, %c0_i32_0, %c0_i32_1 : i32, i32, i32, i32
  }
}

</mosaic_0001>

<llo_original>
// kernel: conv_block_forward.3
$region0: #{conv_block_forward.3}
  #allocation0 [shape = 'u32[]', space=smem, size = 0x4, offset = 0x4, fixed_abs, tag = 'smem constant byte address 0x4 - core index']
  #allocation1 [shape = 'u32[144,128]{1,0:T(1,128)}', space=vmem, size = 0x12000, scoped, tag = 'internal scratch']
  #allocation2 [shape = 'bf16[256,36]{1,0:T(16,128)(2,1)}', space=vmem, size = 0x10000, scoped, tag = 'scratch operand']
  %s0 = inlined_call_operand.vmem [shape: bf16[2,18,18,4], index: 0, kind: input, shape index: {}]
  %s1 = inlined_call_operand.vmem [shape: bf16[36,128], index: 1, kind: input, shape index: {}]
  %s2 = inlined_call_operand.vmem [shape: f32[1,128], index: 2, kind: input, shape index: {}]
  %s3 = inlined_call_operand.vmem [shape: f32[1,128], index: 3, kind: input, shape index: {}]
  %s4 = inlined_call_operand.vmem [shape: f32[2,16,16,8], index: 4, kind: output, shape index: {}]
  %s5 = sld [smem:[#allocation0]]
  $region49: #{conv_block_forward.3} parent=0
    _
  %s7 = ssub.s32 1, %s5
  %s8 = scalar_select 0, %s7, %s5
  loop: start=0, step=1, limit=4
  $region2: #{conv_block_forward.3} parent=0 // loop_pre_header
    _
  $region3: #{conv_block_forward.3} parent=0 // loop_header
    %s10 = sphi 0, %s14
    %p11 = scmp.ge.s32.totalorder %s10, 4
    %s20 = sphi 0, %s22
    %s23 = sphi 0, %s20
    %s24 = sphi 0, %s23
    %s40 = sphi 0, %s24
    %s44 = sphi 0, %s44
    %s46 = sphi 0, %s44
    %s47 = sphi 0, %s46
    %s61 = sphi 0, %s47
    %s65 = sphi 0, %s65
    %s67 = sphi 0, %s65
    %s68 = sphi 0, %s67
    %s82 = sphi 0, %s68
    %s86 = sphi 0, %s86
    %s88 = sphi 0, %s86
    %s89 = sphi 0, %s88
    %s103 = sphi 0, %s89
    %s109 = sphi 0, %s111
    %s112 = sphi 0, %s109
    %s113 = sphi 0, %s112
    %s129 = sphi 0, %s113
  $region4: #{conv_block_forward.3} parent=0 // loop_header_branch
    %13 = sbr.rel (%p11) target = $region8
  $region5: #{conv_block_forward.3} parent=0 // loop_body
    %s15 = ssub.s32 %s10, 1
    %s16 = ssub.s32 %s10, 2
    %s17 = sadd.s32 %s10, 1
    %s18 = ssub.s32 %s10, %s17
    %p19 = scmp.eq.s32.totalorder %s18, 0
    %s21 = sadd.s32 %s20, 1
    %s22 = scalar_select %p19, %s20, %s21
    %p25 = pneg %p19
    %p26 = scmp.eq.s32.totalorder %s10, 1
    %p27 = por %p25, %p26
    %p28 = scmp.ne.s32.totalorder %s20, %s23
    %p29 = scmp.eq.s32.totalorder %s10, 0
    %p30 = por %p28, %p29
    %p31 = scmp.ne.s32.totalorder %s20, %s23
    %p32 = scmp.eq.s32.totalorder %s15, 1
    %p33 = por %p31, %p32
    %p34 = scmp.ne.s32.totalorder %s23, %s24
    %p35 = scmp.eq.s32.totalorder %s15, 0
    %p36 = por %p34, %p35
    %p37 = scmp.ne.s32.totalorder %s23, %s24
    %p38 = scmp.eq.s32.totalorder %s16, 1
    %p39 = por %p37, %p38
    %p41 = scmp.ne.s32.totalorder %s24, %s40
    %p42 = scmp.eq.s32.totalorder %s16, 0
    %p43 = por %p41, %p42
    %s45 = sadd.s32 %s44, 1
    %p48 = scmp.eq.s32.totalorder %s10, 1
    %p49 = scmp.ne.s32.totalorder %s44, %s46
    %p50 = scmp.eq.s32.totalorder %s10, 0
    %p51 = por %p49, %p50
    %p52 = scmp.ne.s32.totalorder %s44, %s46
    %p53 = scmp.eq.s32.totalorder %s15, 1
    %p54 = por %p52, %p53
    %p55 = scmp.ne.s32.totalorder %s46, %s47
    %p56 = scmp.eq.s32.totalorder %s15, 0
    %p57 = por %p55, %p56
    %p58 = scmp.ne.s32.totalorder %s46, %s47
    %p59 = scmp.eq.s32.totalorder %s16, 1
    %p60 = por %p58, %p59
    %p62 = scmp.ne.s32.totalorder %s47, %s61
    %p63 = scmp.eq.s32.totalorder %s16, 0
    %p64 = por %p62, %p63
    %s66 = sadd.s32 %s65, 1
    %p69 = scmp.eq.s32.totalorder %s10, 1
    %p70 = scmp.ne.s32.totalorder %s65, %s67
    %p71 = scmp.eq.s32.totalorder %s10, 0
    %p72 = por %p70, %p71
    %p73 = scmp.ne.s32.totalorder %s65, %s67
    %p74 = scmp.eq.s32.totalorder %s15, 1
    %p75 = por %p73, %p74
    %p76 = scmp.ne.s32.totalorder %s67, %s68
    %p77 = scmp.eq.s32.totalorder %s15, 0
    %p78 = por %p76, %p77
    %p79 = scmp.ne.s32.totalorder %s67, %s68
    %p80 = scmp.eq.s32.totalorder %s16, 1
    %p81 = por %p79, %p80
    %p83 = scmp.ne.s32.totalorder %s68, %s82
    %p84 = scmp.eq.s32.totalorder %s16, 0
    %p85 = por %p83, %p84
    %s87 = sadd.s32 %s86, 1
    %p90 = scmp.eq.s32.totalorder %s10, 1
    %p91 = scmp.ne.s32.totalorder %s86, %s88
    %p92 = scmp.eq.s32.totalorder %s10, 0
    %p93 = por %p91, %p92
    %p94 = scmp.ne.s32.totalorder %s86, %s88
    %p95 = scmp.eq.s32.totalorder %s15, 1
    %p96 = por %p94, %p95
    %p97 = scmp.ne.s32.totalorder %s88, %s89
    %p98 = scmp.eq.s32.totalorder %s15, 0
    %p99 = por %p97, %p98
    %p100 = scmp.ne.s32.totalorder %s88, %s89
    %p101 = scmp.eq.s32.totalorder %s16, 1
    %p102 = por %p100, %p101
    %p104 = scmp.ne.s32.totalorder %s89, %s103
    %p105 = scmp.eq.s32.totalorder %s16, 0
    %p106 = por %p104, %p105
    %s107 = ssub.s32 %s10, %s17
    %p108 = scmp.eq.s32.totalorder %s107, 0
    %s110 = sadd.s32 %s109, 1
    %s111 = scalar_select %p108, %s109, %s110
    %p114 = pneg %p108
    %p115 = scmp.eq.s32.totalorder %s10, 1
    %p116 = por %p114, %p115
    %p117 = scmp.ne.s32.totalorder %s109, %s112
    %p118 = scmp.eq.s32.totalorder %s10, 0
    %p119 = por %p117, %p118
    %p120 = scmp.ne.s32.totalorder %s109, %s112
    %p121 = scmp.eq.s32.totalorder %s15, 1
    %p122 = por %p120, %p121
    %p123 = scmp.ne.s32.totalorder %s112, %s113
    %p124 = scmp.eq.s32.totalorder %s15, 0
    %p125 = por %p123, %p124
    %p126 = scmp.ne.s32.totalorder %s112, %s113
    %p127 = scmp.eq.s32.totalorder %s16, 1
    %p128 = por %p126, %p127
    %p130 = scmp.ne.s32.totalorder %s113, %s129
    %p131 = scmp.eq.s32.totalorder %s16, 0
    %p132 = por %p130, %p131
    %p133 = scmp.le.s32.totalorder 1, %s10
    %p134 = scmp.lt.s32.totalorder %s10, 3
    %p135 = pnand %p133, %p134
    %p136 = pneg %p135
    // Predicated region
    $region9: #{conv_block_forward.3} parent=5 // pred_check
      _
    $region10: #{conv_block_forward.3} parent=5 // pred_check_branch
      %138 = sbr.rel (%p135) target = $region12
    $region11: #{conv_block_forward.3} parent=5 // pred_region
      %s139 = ssub.s32 %s10, 1
      // Predicated region
      $region13: #{conv_block_forward.3} parent=11 // pred_check
        %p140 = pneg %p57
      $region14: #{conv_block_forward.3} parent=11 // pred_check_branch
        %142 = sbr.rel (%p140) target = $region16
      $region15: #{conv_block_forward.3} parent=11 // pred_region
        _
      $region16: #{conv_block_forward.3} parent=11 // pred_fallthru
        _
      // Predicated region
      $region17: #{conv_block_forward.3} parent=11 // pred_check
        %p143 = pneg %p78
      $region18: #{conv_block_forward.3} parent=11 // pred_check_branch
        %145 = sbr.rel (%p143) target = $region20
      $region19: #{conv_block_forward.3} parent=11 // pred_region
        _
      $region20: #{conv_block_forward.3} parent=11 // pred_fallthru
        _
      // Predicated region
      $region21: #{conv_block_forward.3} parent=11 // pred_check
        %p146 = pneg %p99
      $region22: #{conv_block_forward.3} parent=11 // pred_check_branch
        %148 = sbr.rel (%p146) target = $region24
      $region23: #{conv_block_forward.3} parent=11 // pred_region
        _
      $region24: #{conv_block_forward.3} parent=11 // pred_fallthru
        _
    $region12: #{conv_block_forward.3} parent=5 // pred_fallthru
      _
    %p149 = scmp.lt.s32.totalorder %s10, 2
    // Predicated region
    $region25: #{conv_block_forward.3} parent=5 // pred_check
      %p150 = pneg %p149
    $region26: #{conv_block_forward.3} parent=5 // pred_check_branch
      %152 = sbr.rel (%p150) target = $region28
    $region27: #{conv_block_forward.3} parent=5 // pred_region
      // Predicated region
      $region29: #{conv_block_forward.3} parent=27 // pred_check
        %p153 = pneg %p30
      $region30: #{conv_block_forward.3} parent=27 // pred_check_branch
        %155 = sbr.rel (%p153) target = $region32
      $region31: #{conv_block_forward.3} parent=27 // pred_region
        %p156 = scmp.lt.s32.totalorder %s10, 1
        %s157 = scalar_select %p156, %s10, 1
        %s158 = smul.addr %s157, 54
        %s159 = smul.addr %s158, 4
        %s160 = scalar_lea.vmem %s0, %s159
      $region32: #{conv_block_forward.3} parent=27 // pred_fallthru
        _
    $region28: #{conv_block_forward.3} parent=5 // pred_fallthru
      _
    %p161 = scmp.le.s32.totalorder 1, %s10
    %p162 = scmp.lt.s32.totalorder %s10, 3
    %p163 = pnand %p161, %p162
    %p164 = pneg %p163
    // Predicated region
    $region33: #{conv_block_forward.3} parent=5 // pred_check
      _
    $region34: #{conv_block_forward.3} parent=5 // pred_check_branch
      %166 = sbr.rel (%p163) target = $region36
    $region35: #{conv_block_forward.3} parent=5 // pred_region
      %s167 = ssub.s32 %s10, 1
      %p168 = scmp.lt.s32.totalorder %s15, 1
      %s169 = scalar_select %p168, %s15, 1
      %s170 = smul.addr %s169, 54
      %s171 = smul.addr %s170, 4
      %s172 = scalar_lea.vmem %s0, %s171
      %p173 = pneg %p36
      %p174 = pneg %p33
      %p175 = pneg %p57
      %p176 = pneg %p54
      %p177 = pneg %p78
      %p178 = pneg %p75
      %p179 = pneg %p99
      %p180 = pneg %p96
      %p181 = pneg %p125
      %p182 = pneg %p122
      %p183 = scmp.lt.s32.totalorder %s15, 1
      %s184 = scalar_select %p183, %s15, 1
      %s185 = smul.addr %s184, 32
      %s186 = smul.addr %s185, 8
      %s187 = scalar_lea.vmem %s4, %s186
      %p188 = scmp.lt.s32.totalorder %s15, 1
      %s189 = scalar_select %p188, %s15, 1
      %s190 = smul.addr %s189, 54
      %s191 = smul.addr %s190, 4
      %s192 = scalar_lea.vmem %s0, %s191
      %p193 = scmp.lt.s32.totalorder %s15, 1
      %s194 = scalar_select %p193, %s15, 1
      %s195 = smul.addr %s194, 32
      %s196 = smul.addr %s195, 8
      %s197 = scalar_lea.vmem %s4, %s196
      %v199 = vld [vmem:[%s192] sm:$0xf]
      %v200 = vld [vmem:[%s192 + $0x4] sm:$0xf]
      %v201 = vld [vmem:[%s192 + $0x8] sm:$0x1]
      %v202 = vld [vmem:[%s192 + $0xc] sm:$0xf]
      %v203 = vld [vmem:[%s192 + $0x10] sm:$0xf]
      %v204 = vld [vmem:[%s192 + $0x14] sm:$0x1]
      %v205 = vld [vmem:[%s192 + $0x18] sm:$0xf]
      %v206 = vld [vmem:[%s192 + $0x1c] sm:$0xf]
      %v207 = vld [vmem:[%s192 + $0x20] sm:$0x1]
      %v208 = vld [vmem:[%s192 + $0x24] sm:$0xf]
      %v209 = vld [vmem:[%s192 + $0x28] sm:$0xf]
      %v210 = vld [vmem:[%s192 + $0x2c] sm:$0x1]
      %v211 = vld [vmem:[%s192 + $0x30] sm:$0xf]
      %v212 = vld [vmem:[%s192 + $0x34] sm:$0xf]
      %v213 = vld [vmem:[%s192 + $0x38] sm:$0x1]
      %v214 = vld [vmem:[%s192 + $0x3c] sm:$0xf]
      %v215 = vld [vmem:[%s192 + $0x40] sm:$0xf]
      %v216 = vld [vmem:[%s192 + $0x44] sm:$0x1]
      %v217 = vld [vmem:[%s192 + $0x48] sm:$0xf]
      %v218 = vld [vmem:[%s192 + $0x4c] sm:$0xf]
      %v219 = vld [vmem:[%s192 + $0x50] sm:$0x1]
      %v220 = vld [vmem:[%s192 + $0x54] sm:$0xf]
      %v221 = vld [vmem:[%s192 + $0x58] sm:$0xf]
      %v222 = vld [vmem:[%s192 + $0x5c] sm:$0x1]
      %v223 = vld [vmem:[%s192 + $0x60] sm:$0xf]
      %v224 = vld [vmem:[%s192 + $0x64] sm:$0xf]
      %v225 = vld [vmem:[%s192 + $0x68] sm:$0x1]
      %v226 = vld [vmem:[%s192 + $0x6c] sm:$0xf]
      %v227 = vld [vmem:[%s192 + $0x70] sm:$0xf]
      %v228 = vld [vmem:[%s192 + $0x74] sm:$0x1]
      %v229 = vld [vmem:[%s192 + $0x78] sm:$0xf]
      %v230 = vld [vmem:[%s192 + $0x7c] sm:$0xf]
      %v231 = vld [vmem:[%s192 + $0x80] sm:$0x1]
      %v232 = vld [vmem:[%s192 + $0x84] sm:$0xf]
      %v233 = vld [vmem:[%s192 + $0x88] sm:$0xf]
      %v234 = vld [vmem:[%s192 + $0x8c] sm:$0x1]
      %v235 = vld [vmem:[%s192 + $0x90] sm:$0xf]
      %v236 = vld [vmem:[%s192 + $0x94] sm:$0xf]
      %v237 = vld [vmem:[%s192 + $0x98] sm:$0x1]
      %v238 = vld [vmem:[%s192 + $0x9c] sm:$0xf]
      %v239 = vld [vmem:[%s192 + $0xa0] sm:$0xf]
      %v240 = vld [vmem:[%s192 + $0xa4] sm:$0x1]
      %v241 = vld [vmem:[%s192 + $0xa8] sm:$0xf]
      %v242 = vld [vmem:[%s192 + $0xac] sm:$0xf]
      %v243 = vld [vmem:[%s192 + $0xb0] sm:$0x1]
      %v244 = vld [vmem:[%s192 + $0xb4] sm:$0xf]
      %v245 = vld [vmem:[%s192 + $0xb8] sm:$0xf]
      %v246 = vld [vmem:[%s192 + $0xbc] sm:$0x1]
      %v247 = vld [vmem:[%s192 + $0xc0] sm:$0xf]
      %v248 = vld [vmem:[%s192 + $0xc4] sm:$0xf]
      %v249 = vld [vmem:[%s192 + $0xc8] sm:$0x1]
      %v250 = vld [vmem:[%s192 + $0xcc] sm:$0xf]
      %v251 = vld [vmem:[%s192 + $0xd0] sm:$0xf]
      %v252 = vld [vmem:[%s192 + $0xd4] sm:$0x1]
      %v285 = vunpack.c.l.b16 %v199
      %v286 = vunpack.c.l.b16 %v200
      %v287 = vunpack.c.l.b16 %v202
      %v288 = vunpack.c.l.b16 %v203
      %v289 = vunpack.c.l.b16 %v205
      %v290 = vunpack.c.l.b16 %v206
      %v291 = vunpack.c.l.b16 %v208
      %v292 = vunpack.c.l.b16 %v209
      %v293 = vunpack.c.l.b16 %v211
      %v294 = vunpack.c.l.b16 %v212
      %v295 = vunpack.c.l.b16 %v214
      %v296 = vunpack.c.l.b16 %v215
      %v297 = vunpack.c.l.b16 %v217
      %v298 = vunpack.c.l.b16 %v218
      %v299 = vunpack.c.l.b16 %v220
      %v300 = vunpack.c.l.b16 %v221
      %v301 = vunpack.c.l.b16 %v223
      %v302 = vunpack.c.l.b16 %v224
      %v303 = vunpack.c.l.b16 %v226
      %v304 = vunpack.c.l.b16 %v227
      %v305 = vunpack.c.l.b16 %v229
      %v306 = vunpack.c.l.b16 %v230
      %v307 = vunpack.c.l.b16 %v232
      %v308 = vunpack.c.l.b16 %v233
      %v309 = vunpack.c.l.b16 %v235
      %v310 = vunpack.c.l.b16 %v236
      %v311 = vunpack.c.l.b16 %v238
      %v312 = vunpack.c.l.b16 %v239
      %v313 = vunpack.c.l.b16 %v241
      %v314 = vunpack.c.l.b16 %v242
      %v315 = vunpack.c.l.b16 %v244
      %v316 = vunpack.c.l.b16 %v245
      %v317 = vpack.c.b16 %v286, %v285
      %v318 = vpack.c.b16 %v288, %v287
      %v319 = vpack.c.b16 %v290, %v289
      %v320 = vpack.c.b16 %v292, %v291
      %v321 = vpack.c.b16 %v294, %v293
      %v322 = vpack.c.b16 %v296, %v295
      %v323 = vpack.c.b16 %v298, %v297
      %v324 = vpack.c.b16 %v300, %v299
      %v325 = vpack.c.b16 %v302, %v301
      %v326 = vpack.c.b16 %v304, %v303
      %v327 = vpack.c.b16 %v306, %v305
      %v328 = vpack.c.b16 %v308, %v307
      %v329 = vpack.c.b16 %v310, %v309
      %v330 = vpack.c.b16 %v312, %v311
      %v331 = vpack.c.b16 %v314, %v313
      %v332 = vpack.c.b16 %v316, %v315
      %vm349 = vcmask 31744
      %350 = vst.msk [vmem:[#allocation2] sm:$0xff] %vm349, %v317
      %351 = vst.msk [vmem:[#allocation2 + $0x8] sm:$0xff] %vm349, %v318
      %352 = vst.msk [vmem:[#allocation2 + $0x10] sm:$0xff] %vm349, %v319
      %353 = vst.msk [vmem:[#allocation2 + $0x18] sm:$0xff] %vm349, %v320
      %354 = vst.msk [vmem:[#allocation2 + $0x20] sm:$0xff] %vm349, %v321
      %355 = vst.msk [vmem:[#allocation2 + $0x28] sm:$0xff] %vm349, %v322
      %356 = vst.msk [vmem:[#allocation2 + $0x30] sm:$0xff] %vm349, %v323
      %357 = vst.msk [vmem:[#allocation2 + $0x38] sm:$0xff] %vm349, %v324
      %358 = vst.msk [vmem:[#allocation2 + $0x40] sm:$0xff] %vm349, %v325
      %359 = vst.msk [vmem:[#allocation2 + $0x48] sm:$0xff] %vm349, %v326
      %360 = vst.msk [vmem:[#allocation2 + $0x50] sm:$0xff] %vm349, %v327
      %361 = vst.msk [vmem:[#allocation2 + $0x58] sm:$0xff] %vm349, %v328
      %362 = vst.msk [vmem:[#allocation2 + $0x60] sm:$0xff] %vm349, %v329
      %363 = vst.msk [vmem:[#allocation2 + $0x68] sm:$0xff] %vm349, %v330
      %364 = vst.msk [vmem:[#allocation2 + $0x70] sm:$0xff] %vm349, %v331
      %365 = vst.msk [vmem:[#allocation2 + $0x78] sm:$0xff] %vm349, %v332
      %vm366 = vsmask.f32 3328
      %vm367 = vsmask.f32 7440
      %vm368 = vmor %vm366, %vm367
      %v370 = vshrl.u32 %v199, 16
      %v372 = vrot.slane %v370, 4
      %v373 = vshll.u32 %v199, 16
      %v375 = vrot.slane %v373, 5
      %v376 = vor.u32 %v372, %v375
      %v377 = vrot.slane %v376, 4
      %v379 = vshll.u32 %v200, 16
      %v381 = vrot.slane %v379, 5
      %v382 = vsel %vm368, %v377, %v381
      %v383 = vshrl.u32 %v200, 16
      %v385 = vrot.slane %v383, 4
      %v386 = vor.u32 %v385, %v381
      %v387 = vrot.slane %v386, 4
      %v389 = vshll.u32 %v201, 16
      %v391 = vrot.slane %v389, 5
      %v392 = vsel %vm368, %v387, %v391
      %v394 = vshrl.u32 %v202, 16
      %v396 = vrot.slane %v394, 4
      %v397 = vshll.u32 %v202, 16
      %v399 = vrot.slane %v397, 5
      %v400 = vor.u32 %v396, %v399
      %v401 = vrot.slane %v400, 4
      %v403 = vshll.u32 %v203, 16
      %v405 = vrot.slane %v403, 5
      %v406 = vsel %vm368, %v401, %v405
      %v407 = vshrl.u32 %v203, 16
      %v409 = vrot.slane %v407, 4
      %v410 = vor.u32 %v409, %v405
      %v411 = vrot.slane %v410, 4
      %v413 = vshll.u32 %v204, 16
      %v415 = vrot.slane %v413, 5
      %v416 = vsel %vm368, %v411, %v415
      %v418 = vshrl.u32 %v205, 16
      %v420 = vrot.slane %v418, 4
      %v421 = vshll.u32 %v205, 16
      %v423 = vrot.slane %v421, 5
      %v424 = vor.u32 %v420, %v423
      %v425 = vrot.slane %v424, 4
      %v427 = vshll.u32 %v206, 16
      %v429 = vrot.slane %v427, 5
      %v430 = vsel %vm368, %v425, %v429
      %v431 = vshrl.u32 %v206, 16
      %v433 = vrot.slane %v431, 4
      %v434 = vor.u32 %v433, %v429
      %v435 = vrot.slane %v434, 4
      %v437 = vshll.u32 %v207, 16
      %v439 = vrot.slane %v437, 5
      %v440 = vsel %vm368, %v435, %v439
      %v442 = vshrl.u32 %v208, 16
      %v444 = vrot.slane %v442, 4
      %v445 = vshll.u32 %v208, 16
      %v447 = vrot.slane %v445, 5
      %v448 = vor.u32 %v444, %v447
      %v449 = vrot.slane %v448, 4
      %v451 = vshll.u32 %v209, 16
      %v453 = vrot.slane %v451, 5
      %v454 = vsel %vm368, %v449, %v453
      %v455 = vshrl.u32 %v209, 16
      %v457 = vrot.slane %v455, 4
      %v458 = vor.u32 %v457, %v453
      %v459 = vrot.slane %v458, 4
      %v461 = vshll.u32 %v210, 16
      %v463 = vrot.slane %v461, 5
      %v464 = vsel %vm368, %v459, %v463
      %v466 = vshrl.u32 %v211, 16
      %v468 = vrot.slane %v466, 4
      %v469 = vshll.u32 %v211, 16
      %v471 = vrot.slane %v469, 5
      %v472 = vor.u32 %v468, %v471
      %v473 = vrot.slane %v472, 4
      %v475 = vshll.u32 %v212, 16
      %v477 = vrot.slane %v475, 5
      %v478 = vsel %vm368, %v473, %v477
      %v479 = vshrl.u32 %v212, 16
      %v481 = vrot.slane %v479, 4
      %v482 = vor.u32 %v481, %v477
      %v483 = vrot.slane %v482, 4
      %v485 = vshll.u32 %v213, 16
      %v487 = vrot.slane %v485, 5
      %v488 = vsel %vm368, %v483, %v487
      %v490 = vshrl.u32 %v214, 16
      %v492 = vrot.slane %v490, 4
      %v493 = vshll.u32 %v214, 16
      %v495 = vrot.slane %v493, 5
      %v496 = vor.u32 %v492, %v495
      %v497 = vrot.slane %v496, 4
      %v499 = vshll.u32 %v215, 16
      %v501 = vrot.slane %v499, 5
      %v502 = vsel %vm368, %v497, %v501
      %v503 = vshrl.u32 %v215, 16
      %v505 = vrot.slane %v503, 4
      %v506 = vor.u32 %v505, %v501
      %v507 = vrot.slane %v506, 4
      %v509 = vshll.u32 %v216, 16
      %v511 = vrot.slane %v509, 5
      %v512 = vsel %vm368, %v507, %v511
      %v514 = vshrl.u32 %v217, 16
      %v516 = vrot.slane %v514, 4
      %v517 = vshll.u32 %v217, 16
      %v519 = vrot.slane %v517, 5
      %v520 = vor.u32 %v516, %v519
      %v521 = vrot.slane %v520, 4
      %v523 = vshll.u32 %v218, 16
      %v525 = vrot.slane %v523, 5
      %v526 = vsel %vm368, %v521, %v525
      %v527 = vshrl.u32 %v218, 16
      %v529 = vrot.slane %v527, 4
      %v530 = vor.u32 %v529, %v525
      %v531 = vrot.slane %v530, 4
      %v533 = vshll.u32 %v219, 16
      %v535 = vrot.slane %v533, 5
      %v536 = vsel %vm368, %v531, %v535
      %v538 = vshrl.u32 %v220, 16
      %v540 = vrot.slane %v538, 4
      %v541 = vshll.u32 %v220, 16
      %v543 = vrot.slane %v541, 5
      %v544 = vor.u32 %v540, %v543
      %v545 = vrot.slane %v544, 4
      %v547 = vshll.u32 %v221, 16
      %v549 = vrot.slane %v547, 5
      %v550 = vsel %vm368, %v545, %v549
      %v551 = vshrl.u32 %v221, 16
      %v553 = vrot.slane %v551, 4
      %v554 = vor.u32 %v553, %v549
      %v555 = vrot.slane %v554, 4
      %v557 = vshll.u32 %v222, 16
      %v559 = vrot.slane %v557, 5
      %v560 = vsel %vm368, %v555, %v559
      %v562 = vshrl.u32 %v223, 16
      %v564 = vrot.slane %v562, 4
      %v565 = vshll.u32 %v223, 16
      %v567 = vrot.slane %v565, 5
      %v568 = vor.u32 %v564, %v567
      %v569 = vrot.slane %v568, 4
      %v571 = vshll.u32 %v224, 16
      %v573 = vrot.slane %v571, 5
      %v574 = vsel %vm368, %v569, %v573
      %v575 = vshrl.u32 %v224, 16
      %v577 = vrot.slane %v575, 4
      %v578 = vor.u32 %v577, %v573
      %v579 = vrot.slane %v578, 4
      %v581 = vshll.u32 %v225, 16
      %v583 = vrot.slane %v581, 5
      %v584 = vsel %vm368, %v579, %v583
      %v586 = vshrl.u32 %v226, 16
      %v588 = vrot.slane %v586, 4
      %v589 = vshll.u32 %v226, 16
      %v591 = vrot.slane %v589, 5
      %v592 = vor.u32 %v588, %v591
      %v593 = vrot.slane %v592, 4
      %v595 = vshll.u32 %v227, 16
      %v597 = vrot.slane %v595, 5
      %v598 = vsel %vm368, %v593, %v597
      %v599 = vshrl.u32 %v227, 16
      %v601 = vrot.slane %v599, 4
      %v602 = vor.u32 %v601, %v597
      %v603 = vrot.slane %v602, 4
      %v605 = vshll.u32 %v228, 16
      %v607 = vrot.slane %v605, 5
      %v608 = vsel %vm368, %v603, %v607
      %v610 = vshrl.u32 %v229, 16
      %v612 = vrot.slane %v610, 4
      %v613 = vshll.u32 %v229, 16
      %v615 = vrot.slane %v613, 5
      %v616 = vor.u32 %v612, %v615
      %v617 = vrot.slane %v616, 4
      %v619 = vshll.u32 %v230, 16
      %v621 = vrot.slane %v619, 5
      %v622 = vsel %vm368, %v617, %v621
      %v623 = vshrl.u32 %v230, 16
      %v625 = vrot.slane %v623, 4
      %v626 = vor.u32 %v625, %v621
      %v627 = vrot.slane %v626, 4
      %v629 = vshll.u32 %v231, 16
      %v631 = vrot.slane %v629, 5
      %v632 = vsel %vm368, %v627, %v631
      %v634 = vshrl.u32 %v232, 16
      %v636 = vrot.slane %v634, 4
      %v637 = vshll.u32 %v232, 16
      %v639 = vrot.slane %v637, 5
      %v640 = vor.u32 %v636, %v639
      %v641 = vrot.slane %v640, 4
      %v643 = vshll.u32 %v233, 16
      %v645 = vrot.slane %v643, 5
      %v646 = vsel %vm368, %v641, %v645
      %v647 = vshrl.u32 %v233, 16
      %v649 = vrot.slane %v647, 4
      %v650 = vor.u32 %v649, %v645
      %v651 = vrot.slane %v650, 4
      %v653 = vshll.u32 %v234, 16
      %v655 = vrot.slane %v653, 5
      %v656 = vsel %vm368, %v651, %v655
      %v658 = vshrl.u32 %v235, 16
      %v660 = vrot.slane %v658, 4
      %v661 = vshll.u32 %v235, 16
      %v663 = vrot.slane %v661, 5
      %v664 = vor.u32 %v660, %v663
      %v665 = vrot.slane %v664, 4
      %v667 = vshll.u32 %v236, 16
      %v669 = vrot.slane %v667, 5
      %v670 = vsel %vm368, %v665, %v669
      %v671 = vshrl.u32 %v236, 16
      %v673 = vrot.slane %v671, 4
      %v674 = vor.u32 %v673, %v669
      %v675 = vrot.slane %v674, 4
      %v677 = vshll.u32 %v237, 16
      %v679 = vrot.slane %v677, 5
      %v680 = vsel %vm368, %v675, %v679
      %v682 = vshrl.u32 %v238, 16
      %v684 = vrot.slane %v682, 4
      %v685 = vshll.u32 %v238, 16
      %v687 = vrot.slane %v685, 5
      %v688 = vor.u32 %v684, %v687
      %v689 = vrot.slane %v688, 4
      %v691 = vshll.u32 %v239, 16
      %v693 = vrot.slane %v691, 5
      %v694 = vsel %vm368, %v689, %v693
      %v695 = vshrl.u32 %v239, 16
      %v697 = vrot.slane %v695, 4
      %v698 = vor.u32 %v697, %v693
      %v699 = vrot.slane %v698, 4
      %v701 = vshll.u32 %v240, 16
      %v703 = vrot.slane %v701, 5
      %v704 = vsel %vm368, %v699, %v703
      %v706 = vshrl.u32 %v241, 16
      %v708 = vrot.slane %v706, 4
      %v709 = vshll.u32 %v241, 16
      %v711 = vrot.slane %v709, 5
      %v712 = vor.u32 %v708, %v711
      %v713 = vrot.slane %v712, 4
      %v715 = vshll.u32 %v242, 16
      %v717 = vrot.slane %v715, 5
      %v718 = vsel %vm368, %v713, %v717
      %v719 = vshrl.u32 %v242, 16
      %v721 = vrot.slane %v719, 4
      %v722 = vor.u32 %v721, %v717
      %v723 = vrot.slane %v722, 4
      %v725 = vshll.u32 %v243, 16
      %v727 = vrot.slane %v725, 5
      %v728 = vsel %vm368, %v723, %v727
      %v730 = vshrl.u32 %v244, 16
      %v732 = vrot.slane %v730, 4
      %v733 = vshll.u32 %v244, 16
      %v735 = vrot.slane %v733, 5
      %v736 = vor.u32 %v732, %v735
      %v737 = vrot.slane %v736, 4
      %v739 = vshll.u32 %v245, 16
      %v741 = vrot.slane %v739, 5
      %v742 = vsel %vm368, %v737, %v741
      %v743 = vshrl.u32 %v245, 16
      %v745 = vrot.slane %v743, 4
      %v746 = vor.u32 %v745, %v741
      %v747 = vrot.slane %v746, 4
      %v749 = vshll.u32 %v246, 16
      %v751 = vrot.slane %v749, 5
      %v752 = vsel %vm368, %v747, %v751
      %v753 = vunpack.c.l.b16 %v382
      %v754 = vunpack.c.l.b16 %v392
      %v755 = vunpack.c.l.b16 %v406
      %v756 = vunpack.c.l.b16 %v416
      %v757 = vunpack.c.l.b16 %v430
      %v758 = vunpack.c.l.b16 %v440
      %v759 = vunpack.c.l.b16 %v454
      %v760 = vunpack.c.l.b16 %v464
      %v761 = vunpack.c.l.b16 %v478
      %v762 = vunpack.c.l.b16 %v488
      %v763 = vunpack.c.l.b16 %v502
      %v764 = vunpack.c.l.b16 %v512
      %v765 = vunpack.c.l.b16 %v526
      %v766 = vunpack.c.l.b16 %v536
      %v767 = vunpack.c.l.b16 %v550
      %v768 = vunpack.c.l.b16 %v560
      %v769 = vunpack.c.l.b16 %v574
      %v770 = vunpack.c.l.b16 %v584
      %v771 = vunpack.c.l.b16 %v598
      %v772 = vunpack.c.l.b16 %v608
      %v773 = vunpack.c.l.b16 %v622
      %v774 = vunpack.c.l.b16 %v632
      %v775 = vunpack.c.l.b16 %v646
      %v776 = vunpack.c.l.b16 %v656
      %v777 = vunpack.c.l.b16 %v670
      %v778 = vunpack.c.l.b16 %v680
      %v779 = vunpack.c.l.b16 %v694
      %v780 = vunpack.c.l.b16 %v704
      %v781 = vunpack.c.l.b16 %v718
      %v782 = vunpack.c.l.b16 %v728
      %v783 = vunpack.c.l.b16 %v742
      %v784 = vunpack.c.l.b16 %v752
      %v785 = vpack.c.b16 %v754, %v753
      %v786 = vpack.c.b16 %v756, %v755
      %v787 = vpack.c.b16 %v758, %v757
      %v788 = vpack.c.b16 %v760, %v759
      %v789 = vpack.c.b16 %v762, %v761
      %v790 = vpack.c.b16 %v764, %v763
      %v791 = vpack.c.b16 %v766, %v765
      %v792 = vpack.c.b16 %v768, %v767
      %v793 = vpack.c.b16 %v770, %v769
      %v794 = vpack.c.b16 %v772, %v771
      %v795 = vpack.c.b16 %v774, %v773
      %v796 = vpack.c.b16 %v776, %v775
      %v797 = vpack.c.b16 %v778, %v777
      %v798 = vpack.c.b16 %v780, %v779
      %v799 = vpack.c.b16 %v782, %v781
      %v800 = vpack.c.b16 %v784, %v783
      %801 = vrot.lane.b32.xlu0 %v785, 4
      %v802 = vpop.permute.xlu0 %801
      %803 = vrot.lane.b32.xlu0 %v786, 4
      %v804 = vpop.permute.xlu0 %803
      %805 = vrot.lane.b32.xlu0 %v787, 4
      %v806 = vpop.permute.xlu0 %805
      %807 = vrot.lane.b32.xlu0 %v788, 4
      %v808 = vpop.permute.xlu0 %807
      %809 = vrot.lane.b32.xlu0 %v789, 4
      %v810 = vpop.permute.xlu0 %809
      %811 = vrot.lane.b32.xlu0 %v790, 4
      %v812 = vpop.permute.xlu0 %811
      %813 = vrot.lane.b32.xlu0 %v791, 4
      %v814 = vpop.permute.xlu0 %813
      %815 = vrot.lane.b32.xlu0 %v792, 4
      %v816 = vpop.permute.xlu0 %815
      %817 = vrot.lane.b32.xlu0 %v793, 4
      %v818 = vpop.permute.xlu0 %817
      %819 = vrot.lane.b32.xlu0 %v794, 4
      %v820 = vpop.permute.xlu0 %819
      %821 = vrot.lane.b32.xlu0 %v795, 4
      %v822 = vpop.permute.xlu0 %821
      %823 = vrot.lane.b32.xlu0 %v796, 4
      %v824 = vpop.permute.xlu0 %823
      %825 = vrot.lane.b32.xlu0 %v797, 4
      %v826 = vpop.permute.xlu0 %825
      %827 = vrot.lane.b32.xlu0 %v798, 4
      %v828 = vpop.permute.xlu0 %827
      %829 = vrot.lane.b32.xlu0 %v799, 4
      %v830 = vpop.permute.xlu0 %829
      %831 = vrot.lane.b32.xlu0 %v800, 4
      %v832 = vpop.permute.xlu0 %831
      %vm849 = vcmask 64544
      %850 = vst.msk [vmem:[#allocation2] sm:$0xff] %vm849, %v802
      %851 = vst.msk [vmem:[#allocation2 + $0x8] sm:$0xff] %vm849, %v804
      %852 = vst.msk [vmem:[#allocation2 + $0x10] sm:$0xff] %vm849, %v806
      %853 = vst.msk [vmem:[#allocation2 + $0x18] sm:$0xff] %vm849, %v808
      %854 = vst.msk [vmem:[#allocation2 + $0x20] sm:$0xff] %vm849, %v810
      %855 = vst.msk [vmem:[#allocation2 + $0x28] sm:$0xff] %vm849, %v812
      %856 = vst.msk [vmem:[#allocation2 + $0x30] sm:$0xff] %vm849, %v814
      %857 = vst.msk [vmem:[#allocation2 + $0x38] sm:$0xff] %vm849, %v816
      %858 = vst.msk [vmem:[#allocation2 + $0x40] sm:$0xff] %vm849, %v818
      %859 = vst.msk [vmem:[#allocation2 + $0x48] sm:$0xff] %vm849, %v820
      %860 = vst.msk [vmem:[#allocation2 + $0x50] sm:$0xff] %vm849, %v822
      %861 = vst.msk [vmem:[#allocation2 + $0x58] sm:$0xff] %vm849, %v824
      %862 = vst.msk [vmem:[#allocation2 + $0x60] sm:$0xff] %vm849, %v826
      %863 = vst.msk [vmem:[#allocation2 + $0x68] sm:$0xff] %vm849, %v828
      %864 = vst.msk [vmem:[#allocation2 + $0x70] sm:$0xff] %vm849, %v830
      %865 = vst.msk [vmem:[#allocation2 + $0x78] sm:$0xff] %vm849, %v832
      %vm882 = vcmask 1042432
      %vm883 = vcmask 1046532
      %vm884 = vmor %vm882, %vm883
      %v885 = vrot.slane %v199, 5
      %v886 = vrot.slane %v885, 4
      %v887 = vrot.slane %v200, 5
      %v888 = vsel %vm884, %v886, %v887
      %v889 = vrot.slane %v887, 4
      %v890 = vrot.slane %v201, 5
      %v891 = vsel %vm884, %v889, %v890
      %v892 = vrot.slane %v202, 5
      %v893 = vrot.slane %v892, 4
      %v894 = vrot.slane %v203, 5
      %v895 = vsel %vm884, %v893, %v894
      %v896 = vrot.slane %v894, 4
      %v897 = vrot.slane %v204, 5
      %v898 = vsel %vm884, %v896, %v897
      %v899 = vrot.slane %v205, 5
      %v900 = vrot.slane %v899, 4
      %v901 = vrot.slane %v206, 5
      %v902 = vsel %vm884, %v900, %v901
      %v903 = vrot.slane %v901, 4
      %v904 = vrot.slane %v207, 5
      %v905 = vsel %vm884, %v903, %v904
      %v906 = vrot.slane %v208, 5
      %v907 = vrot.slane %v906, 4
      %v908 = vrot.slane %v209, 5
      %v909 = vsel %vm884, %v907, %v908
      %v910 = vrot.slane %v908, 4
      %v911 = vrot.slane %v210, 5
      %v912 = vsel %vm884, %v910, %v911
      %v913 = vrot.slane %v211, 5
      %v914 = vrot.slane %v913, 4
      %v915 = vrot.slane %v212, 5
      %v916 = vsel %vm884, %v914, %v915
      %v917 = vrot.slane %v915, 4
      %v918 = vrot.slane %v213, 5
      %v919 = vsel %vm884, %v917, %v918
      %v920 = vrot.slane %v214, 5
      %v921 = vrot.slane %v920, 4
      %v922 = vrot.slane %v215, 5
      %v923 = vsel %vm884, %v921, %v922
      %v924 = vrot.slane %v922, 4
      %v925 = vrot.slane %v216, 5
      %v926 = vsel %vm884, %v924, %v925
      %v927 = vrot.slane %v217, 5
      %v928 = vrot.slane %v927, 4
      %v929 = vrot.slane %v218, 5
      %v930 = vsel %vm884, %v928, %v929
      %v931 = vrot.slane %v929, 4
      %v932 = vrot.slane %v219, 5
      %v933 = vsel %vm884, %v931, %v932
      %v934 = vrot.slane %v220, 5
      %v935 = vrot.slane %v934, 4
      %v936 = vrot.slane %v221, 5
      %v937 = vsel %vm884, %v935, %v936
      %v938 = vrot.slane %v936, 4
      %v939 = vrot.slane %v222, 5
      %v940 = vsel %vm884, %v938, %v939
      %v941 = vrot.slane %v223, 5
      %v942 = vrot.slane %v941, 4
      %v943 = vrot.slane %v224, 5
      %v944 = vsel %vm884, %v942, %v943
      %v945 = vrot.slane %v943, 4
      %v946 = vrot.slane %v225, 5
      %v947 = vsel %vm884, %v945, %v946
      %v948 = vrot.slane %v226, 5
      %v949 = vrot.slane %v948, 4
      %v950 = vrot.slane %v227, 5
      %v951 = vsel %vm884, %v949, %v950
      %v952 = vrot.slane %v950, 4
      %v953 = vrot.slane %v228, 5
      %v954 = vsel %vm884, %v952, %v953
      %v955 = vrot.slane %v229, 5
      %v956 = vrot.slane %v955, 4
      %v957 = vrot.slane %v230, 5
      %v958 = vsel %vm884, %v956, %v957
      %v959 = vrot.slane %v957, 4
      %v960 = vrot.slane %v231, 5
      %v961 = vsel %vm884, %v959, %v960
      %v962 = vrot.slane %v232, 5
      %v963 = vrot.slane %v962, 4
      %v964 = vrot.slane %v233, 5
      %v965 = vsel %vm884, %v963, %v964
      %v966 = vrot.slane %v964, 4
      %v967 = vrot.slane %v234, 5
      %v968 = vsel %vm884, %v966, %v967
      %v969 = vrot.slane %v235, 5
      %v970 = vrot.slane %v969, 4
      %v971 = vrot.slane %v236, 5
      %v972 = vsel %vm884, %v970, %v971
      %v973 = vrot.slane %v971, 4
      %v974 = vrot.slane %v237, 5
      %v975 = vsel %vm884, %v973, %v974
      %v976 = vrot.slane %v238, 5
      %v977 = vrot.slane %v976, 4
      %v978 = vrot.slane %v239, 5
      %v979 = vsel %vm884, %v977, %v978
      %v980 = vrot.slane %v978, 4
      %v981 = vrot.slane %v240, 5
      %v982 = vsel %vm884, %v980, %v981
      %v983 = vrot.slane %v241, 5
      %v984 = vrot.slane %v983, 4
      %v985 = vrot.slane %v242, 5
      %v986 = vsel %vm884, %v984, %v985
      %v987 = vrot.slane %v985, 4
      %v988 = vrot.slane %v243, 5
      %v989 = vsel %vm884, %v987, %v988
      %v990 = vrot.slane %v244, 5
      %v991 = vrot.slane %v990, 4
      %v992 = vrot.slane %v245, 5
      %v993 = vsel %vm884, %v991, %v992
      %v994 = vrot.slane %v992, 4
      %v995 = vrot.slane %v246, 5
      %v996 = vsel %vm884, %v994, %v995
      %v997 = vunpack.c.l.b16 %v888
      %v998 = vunpack.c.l.b16 %v891
      %v999 = vunpack.c.l.b16 %v895
      %v1000 = vunpack.c.l.b16 %v898
      %v1001 = vunpack.c.l.b16 %v902
      %v1002 = vunpack.c.l.b16 %v905
      %v1003 = vunpack.c.l.b16 %v909
      %v1004 = vunpack.c.l.b16 %v912
      %v1005 = vunpack.c.l.b16 %v916
      %v1006 = vunpack.c.l.b16 %v919
      %v1007 = vunpack.c.l.b16 %v923
      %v1008 = vunpack.c.l.b16 %v926
      %v1009 = vunpack.c.l.b16 %v930
      %v1010 = vunpack.c.l.b16 %v933
      %v1011 = vunpack.c.l.b16 %v937
      %v1012 = vunpack.c.l.b16 %v940
      %v1013 = vunpack.c.l.b16 %v944
      %v1014 = vunpack.c.l.b16 %v947
      %v1015 = vunpack.c.l.b16 %v951
      %v1016 = vunpack.c.l.b16 %v954
      %v1017 = vunpack.c.l.b16 %v958
      %v1018 = vunpack.c.l.b16 %v961
      %v1019 = vunpack.c.l.b16 %v965
      %v1020 = vunpack.c.l.b16 %v968
      %v1021 = vunpack.c.l.b16 %v972
      %v1022 = vunpack.c.l.b16 %v975
      %v1023 = vunpack.c.l.b16 %v979
      %v1024 = vunpack.c.l.b16 %v982
      %v1025 = vunpack.c.l.b16 %v986
      %v1026 = vunpack.c.l.b16 %v989
      %v1027 = vunpack.c.l.b16 %v993
      %v1028 = vunpack.c.l.b16 %v996
      %v1029 = vpack.c.b16 %v998, %v997
      %v1030 = vpack.c.b16 %v1000, %v999
      %v1031 = vpack.c.b16 %v1002, %v1001
      %v1032 = vpack.c.b16 %v1004, %v1003
      %v1033 = vpack.c.b16 %v1006, %v1005
      %v1034 = vpack.c.b16 %v1008, %v1007
      %v1035 = vpack.c.b16 %v1010, %v1009
      %v1036 = vpack.c.b16 %v1012, %v1011
      %v1037 = vpack.c.b16 %v1014, %v1013
      %v1038 = vpack.c.b16 %v1016, %v1015
      %v1039 = vpack.c.b16 %v1018, %v1017
      %v1040 = vpack.c.b16 %v1020, %v1019
      %v1041 = vpack.c.b16 %v1022, %v1021
      %v1042 = vpack.c.b16 %v1024, %v1023
      %v1043 = vpack.c.b16 %v1026, %v1025
      %v1044 = vpack.c.b16 %v1028, %v1027
      %1045 = vrot.lane.b32.xlu0 %v1029, 8
      %v1046 = vpop.permute.xlu0 %1045
      %1047 = vrot.lane.b32.xlu0 %v1030, 8
      %v1048 = vpop.permute.xlu0 %1047
      %1049 = vrot.lane.b32.xlu0 %v1031, 8
      %v1050 = vpop.permute.xlu0 %1049
      %1051 = vrot.lane.b32.xlu0 %v1032, 8
      %v1052 = vpop.permute.xlu0 %1051
      %1053 = vrot.lane.b32.xlu0 %v1033, 8
      %v1054 = vpop.permute.xlu0 %1053
      %1055 = vrot.lane.b32.xlu0 %v1034, 8
      %v1056 = vpop.permute.xlu0 %1055
      %1057 = vrot.lane.b32.xlu0 %v1035, 8
      %v1058 = vpop.permute.xlu0 %1057
      %1059 = vrot.lane.b32.xlu0 %v1036, 8
      %v1060 = vpop.permute.xlu0 %1059
      %1061 = vrot.lane.b32.xlu0 %v1037, 8
      %v1062 = vpop.permute.xlu0 %1061
      %1063 = vrot.lane.b32.xlu0 %v1038, 8
      %v1064 = vpop.permute.xlu0 %1063
      %1065 = vrot.lane.b32.xlu0 %v1039, 8
      %v1066 = vpop.permute.xlu0 %1065
      %1067 = vrot.lane.b32.xlu0 %v1040, 8
      %v1068 = vpop.permute.xlu0 %1067
      %1069 = vrot.lane.b32.xlu0 %v1041, 8
      %v1070 = vpop.permute.xlu0 %1069
      %1071 = vrot.lane.b32.xlu0 %v1042, 8
      %v1072 = vpop.permute.xlu0 %1071
      %1073 = vrot.lane.b32.xlu0 %v1043, 8
      %v1074 = vpop.permute.xlu0 %1073
      %1075 = vrot.lane.b32.xlu0 %v1044, 8
      %v1076 = vpop.permute.xlu0 %1075
      %vm1093 = vcmask 97344
      %1094 = vst.msk [vmem:[#allocation2] sm:$0xff] %vm1093, %v1046
      %1095 = vst.msk [vmem:[#allocation2 + $0x8] sm:$0xff] %vm1093, %v1048
      %1096 = vst.msk [vmem:[#allocation2 + $0x10] sm:$0xff] %vm1093, %v1050
      %1097 = vst.msk [vmem:[#allocation2 + $0x18] sm:$0xff] %vm1093, %v1052
      %1098 = vst.msk [vmem:[#allocation2 + $0x20] sm:$0xff] %vm1093, %v1054
      %1099 = vst.msk [vmem:[#allocation2 + $0x28] sm:$0xff] %vm1093, %v1056
      %1100 = vst.msk [vmem:[#allocation2 + $0x30] sm:$0xff] %vm1093, %v1058
      %1101 = vst.msk [vmem:[#allocation2 + $0x38] sm:$0xff] %vm1093, %v1060
      %1102 = vst.msk [vmem:[#allocation2 + $0x40] sm:$0xff] %vm1093, %v1062
      %1103 = vst.msk [vmem:[#allocation2 + $0x48] sm:$0xff] %vm1093, %v1064
      %1104 = vst.msk [vmem:[#allocation2 + $0x50] sm:$0xff] %vm1093, %v1066
      %1105 = vst.msk [vmem:[#allocation2 + $0x58] sm:$0xff] %vm1093, %v1068
      %1106 = vst.msk [vmem:[#allocation2 + $0x60] sm:$0xff] %vm1093, %v1070
      %1107 = vst.msk [vmem:[#allocation2 + $0x68] sm:$0xff] %vm1093, %v1072
      %1108 = vst.msk [vmem:[#allocation2 + $0x70] sm:$0xff] %vm1093, %v1074
      %1109 = vst.msk [vmem:[#allocation2 + $0x78] sm:$0xff] %vm1093, %v1076
      %v1112 = vunpack.c.l.b16 %v247
      %v1113 = vunpack.c.l.b16 %v248
      %v1114 = vpack.c.b16 %v1113, %v1112
      %1115 = vrot.lane.b32.xlu0 %v318, 12
      %v1116 = vpop.permute.xlu0 %1115
      %1117 = vrot.lane.b32.xlu0 %v319, 12
      %v1118 = vpop.permute.xlu0 %1117
      %1119 = vrot.lane.b32.xlu0 %v320, 12
      %v1120 = vpop.permute.xlu0 %1119
      %1121 = vrot.lane.b32.xlu0 %v321, 12
      %v1122 = vpop.permute.xlu0 %1121
      %1123 = vrot.lane.b32.xlu0 %v322, 12
      %v1124 = vpop.permute.xlu0 %1123
      %1125 = vrot.lane.b32.xlu0 %v323, 12
      %v1126 = vpop.permute.xlu0 %1125
      %1127 = vrot.lane.b32.xlu0 %v324, 12
      %v1128 = vpop.permute.xlu0 %1127
      %1129 = vrot.lane.b32.xlu0 %v325, 12
      %v1130 = vpop.permute.xlu0 %1129
      %1131 = vrot.lane.b32.xlu0 %v326, 12
      %v1132 = vpop.permute.xlu0 %1131
      %1133 = vrot.lane.b32.xlu0 %v327, 12
      %v1134 = vpop.permute.xlu0 %1133
      %1135 = vrot.lane.b32.xlu0 %v328, 12
      %v1136 = vpop.permute.xlu0 %1135
      %1137 = vrot.lane.b32.xlu0 %v329, 12
      %v1138 = vpop.permute.xlu0 %1137
      %1139 = vrot.lane.b32.xlu0 %v330, 12
      %v1140 = vpop.permute.xlu0 %1139
      %1141 = vrot.lane.b32.xlu0 %v331, 12
      %v1142 = vpop.permute.xlu0 %1141
      %1143 = vrot.lane.b32.xlu0 %v332, 12
      %v1144 = vpop.permute.xlu0 %1143
      %1145 = vrot.lane.b32.xlu0 %v1114, 12
      %v1146 = vpop.permute.xlu0 %1145
      %vm1163 = vcmask 130144
      %1164 = vst.msk [vmem:[#allocation2] sm:$0xff] %vm1163, %v1116
      %1165 = vst.msk [vmem:[#allocation2 + $0x8] sm:$0xff] %vm1163, %v1118
      %1166 = vst.msk [vmem:[#allocation2 + $0x10] sm:$0xff] %vm1163, %v1120
      %1167 = vst.msk [vmem:[#allocation2 + $0x18] sm:$0xff] %vm1163, %v1122
      %1168 = vst.msk [vmem:[#allocation2 + $0x20] sm:$0xff] %vm1163, %v1124
      %1169 = vst.msk [vmem:[#allocation2 + $0x28] sm:$0xff] %vm1163, %v1126
      %1170 = vst.msk [vmem:[#allocation2 + $0x30] sm:$0xff] %vm1163, %v1128
      %1171 = vst.msk [vmem:[#allocation2 + $0x38] sm:$0xff] %vm1163, %v1130
      %1172 = vst.msk [vmem:[#allocation2 + $0x40] sm:$0xff] %vm1163, %v1132
      %1173 = vst.msk [vmem:[#allocation2 + $0x48] sm:$0xff] %vm1163, %v1134
      %1174 = vst.msk [vmem:[#allocation2 + $0x50] sm:$0xff] %vm1163, %v1136
      %1175 = vst.msk [vmem:[#allocation2 + $0x58] sm:$0xff] %vm1163, %v1138
      %1176 = vst.msk [vmem:[#allocation2 + $0x60] sm:$0xff] %vm1163, %v1140
      %1177 = vst.msk [vmem:[#allocation2 + $0x68] sm:$0xff] %vm1163, %v1142
      %1178 = vst.msk [vmem:[#allocation2 + $0x70] sm:$0xff] %vm1163, %v1144
      %1179 = vst.msk [vmem:[#allocation2 + $0x78] sm:$0xff] %vm1163, %v1146
      %v1181 = vshrl.u32 %v247, 16
      %v1183 = vrot.slane %v1181, 4
      %v1184 = vshll.u32 %v247, 16
      %v1186 = vrot.slane %v1184, 5
      %v1187 = vor.u32 %v1183, %v1186
      %v1188 = vrot.slane %v1187, 4
      %v1190 = vshll.u32 %v248, 16
      %v1192 = vrot.slane %v1190, 5
      %v1193 = vsel %vm368, %v1188, %v1192
      %v1194 = vshrl.u32 %v248, 16
      %v1196 = vrot.slane %v1194, 4
      %v1197 = vor.u32 %v1196, %v1192
      %v1198 = vrot.slane %v1197, 4
      %v1200 = vshll.u32 %v249, 16
      %v1202 = vrot.slane %v1200, 5
      %v1203 = vsel %vm368, %v1198, %v1202
      %v1204 = vunpack.c.l.b16 %v1193
      %v1205 = vunpack.c.l.b16 %v1203
      %v1206 = vpack.c.b16 %v1205, %v1204
      %1207 = vrot.lane.b32.xlu0 %v786, 16
      %v1208 = vpop.permute.xlu0 %1207
      %1209 = vrot.lane.b32.xlu0 %v787, 16
      %v1210 = vpop.permute.xlu0 %1209
      %1211 = vrot.lane.b32.xlu0 %v788, 16
      %v1212 = vpop.permute.xlu0 %1211
      %1213 = vrot.lane.b32.xlu0 %v789, 16
      %v1214 = vpop.permute.xlu0 %1213
      %1215 = vrot.lane.b32.xlu0 %v790, 16
      %v1216 = vpop.permute.xlu0 %1215
      %1217 = vrot.lane.b32.xlu0 %v791, 16
      %v1218 = vpop.permute.xlu0 %1217
      %1219 = vrot.lane.b32.xlu0 %v792, 16
      %v1220 = vpop.permute.xlu0 %1219
      %1221 = vrot.lane.b32.xlu0 %v793, 16
      %v1222 = vpop.permute.xlu0 %1221
      %1223 = vrot.lane.b32.xlu0 %v794, 16
      %v1224 = vpop.permute.xlu0 %1223
      %1225 = vrot.lane.b32.xlu0 %v795, 16
      %v1226 = vpop.permute.xlu0 %1225
      %1227 = vrot.lane.b32.xlu0 %v796, 16
      %v1228 = vpop.permute.xlu0 %1227
      %1229 = vrot.lane.b32.xlu0 %v797, 16
      %v1230 = vpop.permute.xlu0 %1229
      %1231 = vrot.lane.b32.xlu0 %v798, 16
      %v1232 = vpop.permute.xlu0 %1231
      %1233 = vrot.lane.b32.xlu0 %v799, 16
      %v1234 = vpop.permute.xlu0 %1233
      %1235 = vrot.lane.b32.xlu0 %v800, 16
      %v1236 = vpop.permute.xlu0 %1235
      %1237 = vrot.lane.b32.xlu0 %v1206, 16
      %v1238 = vpop.permute.xlu0 %1237
      %vm1255 = vcmask 162944
      %1256 = vst.msk [vmem:[#allocation2] sm:$0xff] %vm1255, %v1208
      %1257 = vst.msk [vmem:[#allocation2 + $0x8] sm:$0xff] %vm1255, %v1210
      %1258 = vst.msk [vmem:[#allocation2 + $0x10] sm:$0xff] %vm1255, %v1212
      %1259 = vst.msk [vmem:[#allocation2 + $0x18] sm:$0xff] %vm1255, %v1214
      %1260 = vst.msk [vmem:[#allocation2 + $0x20] sm:$0xff] %vm1255, %v1216
      %1261 = vst.msk [vmem:[#allocation2 + $0x28] sm:$0xff] %vm1255, %v1218
      %1262 = vst.msk [vmem:[#allocation2 + $0x30] sm:$0xff] %vm1255, %v1220
      %1263 = vst.msk [vmem:[#allocation2 + $0x38] sm:$0xff] %vm1255, %v1222
      %1264 = vst.msk [vmem:[#allocation2 + $0x40] sm:$0xff] %vm1255, %v1224
      %1265 = vst.msk [vmem:[#allocation2 + $0x48] sm:$0xff] %vm1255, %v1226
      %1266 = vst.msk [vmem:[#allocation2 + $0x50] sm:$0xff] %vm1255, %v1228
      %1267 = vst.msk [vmem:[#allocation2 + $0x58] sm:$0xff] %vm1255, %v1230
      %1268 = vst.msk [vmem:[#allocation2 + $0x60] sm:$0xff] %vm1255, %v1232
      %1269 = vst.msk [vmem:[#allocation2 + $0x68] sm:$0xff] %vm1255, %v1234
      %1270 = vst.msk [vmem:[#allocation2 + $0x70] sm:$0xff] %vm1255, %v1236
      %1271 = vst.msk [vmem:[#allocation2 + $0x78] sm:$0xff] %vm1255, %v1238
      %v1273 = vrot.slane %v247, 5
      %v1274 = vrot.slane %v1273, 4
      %v1275 = vrot.slane %v248, 5
      %v1276 = vsel %vm884, %v1274, %v1275
      %v1277 = vrot.slane %v1275, 4
      %v1278 = vrot.slane %v249, 5
      %v1279 = vsel %vm884, %v1277, %v1278
      %v1280 = vunpack.c.l.b16 %v1276
      %v1281 = vunpack.c.l.b16 %v1279
      %v1282 = vpack.c.b16 %v1281, %v1280
      %1283 = vrot.lane.b32.xlu0 %v1030, 20
      %v1284 = vpop.permute.xlu0 %1283
      %1285 = vrot.lane.b32.xlu0 %v1031, 20
      %v1286 = vpop.permute.xlu0 %1285
      %1287 = vrot.lane.b32.xlu0 %v1032, 20
      %v1288 = vpop.permute.xlu0 %1287
      %1289 = vrot.lane.b32.xlu0 %v1033, 20
      %v1290 = vpop.permute.xlu0 %1289
      %1291 = vrot.lane.b32.xlu0 %v1034, 20
      %v1292 = vpop.permute.xlu0 %1291
      %1293 = vrot.lane.b32.xlu0 %v1035, 20
      %v1294 = vpop.permute.xlu0 %1293
      %1295 = vrot.lane.b32.xlu0 %v1036, 20
      %v1296 = vpop.permute.xlu0 %1295
      %1297 = vrot.lane.b32.xlu0 %v1037, 20
      %v1298 = vpop.permute.xlu0 %1297
      %1299 = vrot.lane.b32.xlu0 %v1038, 20
      %v1300 = vpop.permute.xlu0 %1299
      %1301 = vrot.lane.b32.xlu0 %v1039, 20
      %v1302 = vpop.permute.xlu0 %1301
      %1303 = vrot.lane.b32.xlu0 %v1040, 20
      %v1304 = vpop.permute.xlu0 %1303
      %1305 = vrot.lane.b32.xlu0 %v1041, 20
      %v1306 = vpop.permute.xlu0 %1305
      %1307 = vrot.lane.b32.xlu0 %v1042, 20
      %v1308 = vpop.permute.xlu0 %1307
      %1309 = vrot.lane.b32.xlu0 %v1043, 20
      %v1310 = vpop.permute.xlu0 %1309
      %1311 = vrot.lane.b32.xlu0 %v1044, 20
      %v1312 = vpop.permute.xlu0 %1311
      %1313 = vrot.lane.b32.xlu0 %v1282, 20
      %v1314 = vpop.permute.xlu0 %1313
      %vm1331 = vcmask 195744
      %1332 = vst.msk [vmem:[#allocation2] sm:$0xff] %vm1331, %v1284
      %1333 = vst.msk [vmem:[#allocation2 + $0x8] sm:$0xff] %vm1331, %v1286
      %1334 = vst.msk [vmem:[#allocation2 + $0x10] sm:$0xff] %vm1331, %v1288
      %1335 = vst.msk [vmem:[#allocation2 + $0x18] sm:$0xff] %vm1331, %v1290
      %1336 = vst.msk [vmem:[#allocation2 + $0x20] sm:$0xff] %vm1331, %v1292
      %1337 = vst.msk [vmem:[#allocation2 + $0x28] sm:$0xff] %vm1331, %v1294
      %1338 = vst.msk [vmem:[#allocation2 + $0x30] sm:$0xff] %vm1331, %v1296
      %1339 = vst.msk [vmem:[#allocation2 + $0x38] sm:$0xff] %vm1331, %v1298
      %1340 = vst.msk [vmem:[#allocation2 + $0x40] sm:$0xff] %vm1331, %v1300
      %1341 = vst.msk [vmem:[#allocation2 + $0x48] sm:$0xff] %vm1331, %v1302
      %1342 = vst.msk [vmem:[#allocation2 + $0x50] sm:$0xff] %vm1331, %v1304
      %1343 = vst.msk [vmem:[#allocation2 + $0x58] sm:$0xff] %vm1331, %v1306
      %1344 = vst.msk [vmem:[#allocation2 + $0x60] sm:$0xff] %vm1331, %v1308
      %1345 = vst.msk [vmem:[#allocation2 + $0x68] sm:$0xff] %vm1331, %v1310
      %1346 = vst.msk [vmem:[#allocation2 + $0x70] sm:$0xff] %vm1331, %v1312
      %1347 = vst.msk [vmem:[#allocation2 + $0x78] sm:$0xff] %vm1331, %v1314
      %v1350 = vunpack.c.l.b16 %v250
      %v1351 = vunpack.c.l.b16 %v251
      %v1352 = vpack.c.b16 %v1351, %v1350
      %1353 = vrot.lane.b32.xlu0 %v319, 24
      %v1354 = vpop.permute.xlu0 %1353
      %1355 = vrot.lane.b32.xlu0 %v320, 24
      %v1356 = vpop.permute.xlu0 %1355
      %1357 = vrot.lane.b32.xlu0 %v321, 24
      %v1358 = vpop.permute.xlu0 %1357
      %1359 = vrot.lane.b32.xlu0 %v322, 24
      %v1360 = vpop.permute.xlu0 %1359
      %1361 = vrot.lane.b32.xlu0 %v323, 24
      %v1362 = vpop.permute.xlu0 %1361
      %1363 = vrot.lane.b32.xlu0 %v324, 24
      %v1364 = vpop.permute.xlu0 %1363
      %1365 = vrot.lane.b32.xlu0 %v325, 24
      %v1366 = vpop.permute.xlu0 %1365
      %1367 = vrot.lane.b32.xlu0 %v326, 24
      %v1368 = vpop.permute.xlu0 %1367
      %1369 = vrot.lane.b32.xlu0 %v327, 24
      %v1370 = vpop.permute.xlu0 %1369
      %1371 = vrot.lane.b32.xlu0 %v328, 24
      %v1372 = vpop.permute.xlu0 %1371
      %1373 = vrot.lane.b32.xlu0 %v329, 24
      %v1374 = vpop.permute.xlu0 %1373
      %1375 = vrot.lane.b32.xlu0 %v330, 24
      %v1376 = vpop.permute.xlu0 %1375
      %1377 = vrot.lane.b32.xlu0 %v331, 24
      %v1378 = vpop.permute.xlu0 %1377
      %1379 = vrot.lane.b32.xlu0 %v332, 24
      %v1380 = vpop.permute.xlu0 %1379
      %1381 = vrot.lane.b32.xlu0 %v1114, 24
      %v1382 = vpop.permute.xlu0 %1381
      %1383 = vrot.lane.b32.xlu0 %v1352, 24
      %v1384 = vpop.permute.xlu0 %1383
      %vm1401 = vcmask 228544
      %1402 = vst.msk [vmem:[#allocation2] sm:$0xff] %vm1401, %v1354
      %1403 = vst.msk [vmem:[#allocation2 + $0x8] sm:$0xff] %vm1401, %v1356
      %1404 = vst.msk [vmem:[#allocation2 + $0x10] sm:$0xff] %vm1401, %v1358
      %1405 = vst.msk [vmem:[#allocation2 + $0x18] sm:$0xff] %vm1401, %v1360
      %1406 = vst.msk [vmem:[#allocation2 + $0x20] sm:$0xff] %vm1401, %v1362
      %1407 = vst.msk [vmem:[#allocation2 + $0x28] sm:$0xff] %vm1401, %v1364
      %1408 = vst.msk [vmem:[#allocation2 + $0x30] sm:$0xff] %vm1401, %v1366
      %1409 = vst.msk [vmem:[#allocation2 + $0x38] sm:$0xff] %vm1401, %v1368
      %1410 = vst.msk [vmem:[#allocation2 + $0x40] sm:$0xff] %vm1401, %v1370
      %1411 = vst.msk [vmem:[#allocation2 + $0x48] sm:$0xff] %vm1401, %v1372
      %1412 = vst.msk [vmem:[#allocation2 + $0x50] sm:$0xff] %vm1401, %v1374
      %1413 = vst.msk [vmem:[#allocation2 + $0x58] sm:$0xff] %vm1401, %v1376
      %1414 = vst.msk [vmem:[#allocation2 + $0x60] sm:$0xff] %vm1401, %v1378
      %1415 = vst.msk [vmem:[#allocation2 + $0x68] sm:$0xff] %vm1401, %v1380
      %1416 = vst.msk [vmem:[#allocation2 + $0x70] sm:$0xff] %vm1401, %v1382
      %1417 = vst.msk [vmem:[#allocation2 + $0x78] sm:$0xff] %vm1401, %v1384
      %v1419 = vshrl.u32 %v250, 16
      %v1421 = vrot.slane %v1419, 4
      %v1422 = vshll.u32 %v250, 16
      %v1424 = vrot.slane %v1422, 5
      %v1425 = vor.u32 %v1421, %v1424
      %v1426 = vrot.slane %v1425, 4
      %v1428 = vshll.u32 %v251, 16
      %v1430 = vrot.slane %v1428, 5
      %v1431 = vsel %vm368, %v1426, %v1430
      %v1432 = vshrl.u32 %v251, 16
      %v1434 = vrot.slane %v1432, 4
      %v1435 = vor.u32 %v1434, %v1430
      %v1436 = vrot.slane %v1435, 4
      %v1438 = vshll.u32 %v252, 16
      %v1440 = vrot.slane %v1438, 5
      %v1441 = vsel %vm368, %v1436, %v1440
      %v1442 = vunpack.c.l.b16 %v1431
      %v1443 = vunpack.c.l.b16 %v1441
      %v1444 = vpack.c.b16 %v1443, %v1442
      %1445 = vrot.lane.b32.xlu0 %v787, 28
      %v1446 = vpop.permute.xlu0 %1445
      %1447 = vrot.lane.b32.xlu0 %v788, 28
      %v1448 = vpop.permute.xlu0 %1447
      %1449 = vrot.lane.b32.xlu0 %v789, 28
      %v1450 = vpop.permute.xlu0 %1449
      %1451 = vrot.lane.b32.xlu0 %v790, 28
      %v1452 = vpop.permute.xlu0 %1451
      %1453 = vrot.lane.b32.xlu0 %v791, 28
      %v1454 = vpop.permute.xlu0 %1453
      %1455 = vrot.lane.b32.xlu0 %v792, 28
      %v1456 = vpop.permute.xlu0 %1455
      %1457 = vrot.lane.b32.xlu0 %v793, 28
      %v1458 = vpop.permute.xlu0 %1457
      %1459 = vrot.lane.b32.xlu0 %v794, 28
      %v1460 = vpop.permute.xlu0 %1459
      %1461 = vrot.lane.b32.xlu0 %v795, 28
      %v1462 = vpop.permute.xlu0 %1461
      %1463 = vrot.lane.b32.xlu0 %v796, 28
      %v1464 = vpop.permute.xlu0 %1463
      %1465 = vrot.lane.b32.xlu0 %v797, 28
      %v1466 = vpop.permute.xlu0 %1465
      %1467 = vrot.lane.b32.xlu0 %v798, 28
      %v1468 = vpop.permute.xlu0 %1467
      %1469 = vrot.lane.b32.xlu0 %v799, 28
      %v1470 = vpop.permute.xlu0 %1469
      %1471 = vrot.lane.b32.xlu0 %v800, 28
      %v1472 = vpop.permute.xlu0 %1471
      %1473 = vrot.lane.b32.xlu0 %v1206, 28
      %v1474 = vpop.permute.xlu0 %1473
      %1475 = vrot.lane.b32.xlu0 %v1444, 28
      %v1476 = vpop.permute.xlu0 %1475
      %vm1493 = vcmask 261344
      %1494 = vst.msk [vmem:[#allocation2] sm:$0xff] %vm1493, %v1446
      %1495 = vst.msk [vmem:[#allocation2 + $0x8] sm:$0xff] %vm1493, %v1448
      %1496 = vst.msk [vmem:[#allocation2 + $0x10] sm:$0xff] %vm1493, %v1450
      %1497 = vst.msk [vmem:[#allocation2 + $0x18] sm:$0xff] %vm1493, %v1452
      %1498 = vst.msk [vmem:[#allocation2 + $0x20] sm:$0xff] %vm1493, %v1454
      %1499 = vst.msk [vmem:[#allocation2 + $0x28] sm:$0xff] %vm1493, %v1456
      %1500 = vst.msk [vmem:[#allocation2 + $0x30] sm:$0xff] %vm1493, %v1458
      %1501 = vst.msk [vmem:[#allocation2 + $0x38] sm:$0xff] %vm1493, %v1460
      %1502 = vst.msk [vmem:[#allocation2 + $0x40] sm:$0xff] %vm1493, %v1462
      %1503 = vst.msk [vmem:[#allocation2 + $0x48] sm:$0xff] %vm1493, %v1464
      %1504 = vst.msk [vmem:[#allocation2 + $0x50] sm:$0xff] %vm1493, %v1466
      %1505 = vst.msk [vmem:[#allocation2 + $0x58] sm:$0xff] %vm1493, %v1468
      %1506 = vst.msk [vmem:[#allocation2 + $0x60] sm:$0xff] %vm1493, %v1470
      %1507 = vst.msk [vmem:[#allocation2 + $0x68] sm:$0xff] %vm1493, %v1472
      %1508 = vst.msk [vmem:[#allocation2 + $0x70] sm:$0xff] %vm1493, %v1474
      %1509 = vst.msk [vmem:[#allocation2 + $0x78] sm:$0xff] %vm1493, %v1476
      %v1511 = vrot.slane %v250, 5
      %v1512 = vrot.slane %v1511, 4
      %v1513 = vrot.slane %v251, 5
      %v1514 = vsel %vm884, %v1512, %v1513
      %v1515 = vrot.slane %v1513, 4
      %v1516 = vrot.slane %v252, 5
      %v1517 = vsel %vm884, %v1515, %v1516
      %v1518 = vunpack.c.l.b16 %v1514
      %v1519 = vunpack.c.l.b16 %v1517
      %v1520 = vpack.c.b16 %v1519, %v1518
      %1521 = vrot.lane.b32.xlu0 %v1031, 32
      %v1522 = vpop.permute.xlu0 %1521
      %1523 = vrot.lane.b32.xlu0 %v1032, 32
      %v1524 = vpop.permute.xlu0 %1523
      %1525 = vrot.lane.b32.xlu0 %v1033, 32
      %v1526 = vpop.permute.xlu0 %1525
      %1527 = vrot.lane.b32.xlu0 %v1034, 32
      %v1528 = vpop.permute.xlu0 %1527
      %1529 = vrot.lane.b32.xlu0 %v1035, 32
      %v1530 = vpop.permute.xlu0 %1529
      %1531 = vrot.lane.b32.xlu0 %v1036, 32
      %v1532 = vpop.permute.xlu0 %1531
      %1533 = vrot.lane.b32.xlu0 %v1037, 32
      %v1534 = vpop.permute.xlu0 %1533
      %1535 = vrot.lane.b32.xlu0 %v1038, 32
      %v1536 = vpop.permute.xlu0 %1535
      %1537 = vrot.lane.b32.xlu0 %v1039, 32
      %v1538 = vpop.permute.xlu0 %1537
      %1539 = vrot.lane.b32.xlu0 %v1040, 32
      %v1540 = vpop.permute.xlu0 %1539
      %1541 = vrot.lane.b32.xlu0 %v1041, 32
      %v1542 = vpop.permute.xlu0 %1541
      %1543 = vrot.lane.b32.xlu0 %v1042, 32
      %v1544 = vpop.permute.xlu0 %1543
      %1545 = vrot.lane.b32.xlu0 %v1043, 32
      %v1546 = vpop.permute.xlu0 %1545
      %1547 = vrot.lane.b32.xlu0 %v1044, 32
      %v1548 = vpop.permute.xlu0 %1547
      %1549 = vrot.lane.b32.xlu0 %v1282, 32
      %v1550 = vpop.permute.xlu0 %1549
      %1551 = vrot.lane.b32.xlu0 %v1520, 32
      %v1552 = vpop.permute.xlu0 %1551
      %vm1569 = vcmask 294144
      %1570 = vst.msk [vmem:[#allocation2] sm:$0xff] %vm1569, %v1522
      %1571 = vst.msk [vmem:[#allocation2 + $0x8] sm:$0xff] %vm1569, %v1524
      %1572 = vst.msk [vmem:[#allocation2 + $0x10] sm:$0xff] %vm1569, %v1526
      %1573 = vst.msk [vmem:[#allocation2 + $0x18] sm:$0xff] %vm1569, %v1528
      %1574 = vst.msk [vmem:[#allocation2 + $0x20] sm:$0xff] %vm1569, %v1530
      %1575 = vst.msk [vmem:[#allocation2 + $0x28] sm:$0xff] %vm1569, %v1532
      %1576 = vst.msk [vmem:[#allocation2 + $0x30] sm:$0xff] %vm1569, %v1534
      %1577 = vst.msk [vmem:[#allocation2 + $0x38] sm:$0xff] %vm1569, %v1536
      %1578 = vst.msk [vmem:[#allocation2 + $0x40] sm:$0xff] %vm1569, %v1538
      %1579 = vst.msk [vmem:[#allocation2 + $0x48] sm:$0xff] %vm1569, %v1540
      %1580 = vst.msk [vmem:[#allocation2 + $0x50] sm:$0xff] %vm1569, %v1542
      %1581 = vst.msk [vmem:[#allocation2 + $0x58] sm:$0xff] %vm1569, %v1544
      %1582 = vst.msk [vmem:[#allocation2 + $0x60] sm:$0xff] %vm1569, %v1546
      %1583 = vst.msk [vmem:[#allocation2 + $0x68] sm:$0xff] %vm1569, %v1548
      %1584 = vst.msk [vmem:[#allocation2 + $0x70] sm:$0xff] %vm1569, %v1550
      %1585 = vst.msk [vmem:[#allocation2 + $0x78] sm:$0xff] %vm1569, %v1552
      %v1586 = vld [vmem:[#allocation2] sm:$0xff]
      %v1587 = vld [vmem:[#allocation2 + $0x8] sm:$0xff]
      %v1588 = vld [vmem:[#allocation2 + $0x10] sm:$0xff]
      %v1589 = vld [vmem:[#allocation2 + $0x18] sm:$0xff]
      %v1590 = vld [vmem:[#allocation2 + $0x20] sm:$0xff]
      %v1591 = vld [vmem:[#allocation2 + $0x28] sm:$0xff]
      %v1592 = vld [vmem:[#allocation2 + $0x30] sm:$0xff]
      %v1593 = vld [vmem:[#allocation2 + $0x38] sm:$0xff]
      %v1594 = vld [vmem:[#allocation2 + $0x40] sm:$0xff]
      %v1595 = vld [vmem:[#allocation2 + $0x48] sm:$0xff]
      %v1596 = vld [vmem:[#allocation2 + $0x50] sm:$0xff]
      %v1597 = vld [vmem:[#allocation2 + $0x58] sm:$0xff]
      %v1598 = vld [vmem:[#allocation2 + $0x60] sm:$0xff]
      %v1599 = vld [vmem:[#allocation2 + $0x68] sm:$0xff]
      %v1600 = vld [vmem:[#allocation2 + $0x70] sm:$0xff]
      %v1601 = vld [vmem:[#allocation2 + $0x78] sm:$0xff]
      %v1602 = vld [vmem:[%s1] sm:$0xf]
      %v1603 = vld [vmem:[%s1 + $0x4] sm:$0xf]
      %v1604 = vld [vmem:[%s1 + $0x8] sm:$0xf]
      %v1605 = vld [vmem:[%s1 + $0xc] sm:$0xf]
      %v1606 = vld [vmem:[%s1 + $0x10] sm:$0x3]
      %v1612 = vunpack.c.l.b16 %v1602
      %v1613 = vunpack.c.l.b16 %v1603
      %v1614 = vunpack.c.l.b16 %v1604
      %v1615 = vunpack.c.l.b16 %v1605
      %v1616 = vunpack.c.l.b16 %v1606
      %v1617 = vpack.c.b16 %v1613, %v1612
      %v1618 = vpack.c.b16 %v1615, %v1614
      %v1619 = vpack.c.b16 %v1616, %v1616
      %vm1622 = vcmask 293888
      %v1624 = vsel %vm1622, %v1586, 0
      %v1627 = vsel %vm1622, %v1587, 0
      %v1630 = vsel %vm1622, %v1588, 0
      %v1633 = vsel %vm1622, %v1589, 0
      %v1636 = vsel %vm1622, %v1590, 0
      %v1639 = vsel %vm1622, %v1591, 0
      %v1642 = vsel %vm1622, %v1592, 0
      %v1645 = vsel %vm1622, %v1593, 0
      %v1648 = vsel %vm1622, %v1594, 0
      %v1651 = vsel %vm1622, %v1595, 0
      %v1654 = vsel %vm1622, %v1596, 0
      %v1657 = vsel %vm1622, %v1597, 0
      %v1660 = vsel %vm1622, %v1598, 0
      %v1663 = vsel %vm1622, %v1599, 0
      %v1666 = vsel %vm1622, %v1600, 0
      %v1669 = vsel %vm1622, %v1601, 0
      %vm1671 = vcmask 1041408
      %v1673 = vsel %vm1671, %v1619, 0
      %1675 = vmatprep.subr.bf16.mxu0 0
      %1676 = vmatpush1.bf16.msra.mxu0 %v1617
      %1677 = vmatprep.subr.bf16.mxu0 0
      %1678 = vmatpush1.bf16.msra.mxu0 %v1618
      %1679 = vmatprep.subr.bf16.mxu0 0
      %1680 = vmatpush1.bf16.msra.mxu0 %v1673
      %1681 = vmatprep.subr.bf16.mxu0 0
      %1682 = vmatpush1.bf16.msra.mxu0 0
      %1683 = vmatprep.subr.bf16.mxu0 0
      %1684 = vmatpush1.bf16.msra.mxu0 0
      %1685 = vmatprep.subr.bf16.mxu0 0
      %1686 = vmatpush1.bf16.msra.mxu0 0
      %1687 = vmatprep.subr.bf16.mxu0 0
      %1688 = vmatpush1.bf16.msra.mxu0 0
      %1689 = vmatprep.subr.bf16.mxu0 0
      %1690 = vmatpush1.bf16.msra.mxu0 0
      %1691 = vmatprep.subr.bf16.mxu0 0
      %1692 = vmatpush1.bf16.msra.mxu0 0
      %1693 = vmatprep.subr.bf16.mxu0 0
      %1694 = vmatpush1.bf16.msra.mxu0 0
      %1695 = vmatprep.subr.bf16.mxu0 0
      %1696 = vmatpush1.bf16.msra.mxu0 0
      %1697 = vmatprep.subr.bf16.mxu0 0
      %1698 = vmatpush1.bf16.msra.mxu0 0
      %1699 = vmatprep.subr.bf16.mxu0 0
      %1700 = vmatpush1.bf16.msra.mxu0 0
      %1701 = vmatprep.subr.bf16.mxu0 0
      %1702 = vmatpush1.bf16.msra.mxu0 0
      %1703 = vmatprep.subr.bf16.mxu0 0
      %1704 = vmatpush1.bf16.msra.mxu0 0
      %1705 = vmatprep.subr.bf16.mxu0 0
      %1706 = vmatpush1.bf16.msra.mxu0 0
      %1707 = vmatprep.mubr.bf16.mxu0 0
      %1708 = vmatmul.mubr.bf16.gmra.mrb[0].mxu0 %v1624
      %v1709 = vpop.f32.mrb[0].mxu0
      %v1710 = vadd.f32 0.0, %v1709
      %v1711 = vpop.f32.mrb[0].mxu0
      %v1712 = vpop.f32.mrb[0].mxu0
      %v1713 = vadd.f32 0.0, %v1712
      %v1714 = vpop.f32.mrb[0].mxu0
      %1715 = vmatprep.mubr.bf16.mxu0 0
      %1716 = vmatmul.mubr.bf16.gmra.mrb[0].mxu0 %v1627
      %v1717 = vpop.f32.mrb[0].mxu0
      %v1718 = vadd.f32 0.0, %v1717
      %v1719 = vpop.f32.mrb[0].mxu0
      %v1720 = vpop.f32.mrb[0].mxu0
      %v1721 = vadd.f32 0.0, %v1720
      %v1722 = vpop.f32.mrb[0].mxu0
      %1723 = vmatprep.mubr.bf16.mxu0 0
      %1724 = vmatmul.mubr.bf16.gmra.mrb[0].mxu0 %v1630
      %v1725 = vpop.f32.mrb[0].mxu0
      %v1726 = vadd.f32 0.0, %v1725
      %v1727 = vpop.f32.mrb[0].mxu0
      %v1728 = vpop.f32.mrb[0].mxu0
      %v1729 = vadd.f32 0.0, %v1728
      %v1730 = vpop.f32.mrb[0].mxu0
      %1731 = vmatprep.mubr.bf16.mxu0 0
      %1732 = vmatmul.mubr.bf16.gmra.mrb[0].mxu0 %v1633
      %v1733 = vpop.f32.mrb[0].mxu0
      %v1734 = vadd.f32 0.0, %v1733
      %v1735 = vpop.f32.mrb[0].mxu0
      %v1736 = vpop.f32.mrb[0].mxu0
      %v1737 = vadd.f32 0.0, %v1736
      %v1738 = vpop.f32.mrb[0].mxu0
      %1739 = vmatprep.mubr.bf16.mxu0 0
      %1740 = vmatmul.mubr.bf16.gmra.mrb[0].mxu0 %v1636
      %v1741 = vpop.f32.mrb[0].mxu0
      %v1742 = vadd.f32 0.0, %v1741
      %v1743 = vpop.f32.mrb[0].mxu0
      %v1744 = vpop.f32.mrb[0].mxu0
      %v1745 = vadd.f32 0.0, %v1744
      %v1746 = vpop.f32.mrb[0].mxu0
      %1747 = vmatprep.mubr.bf16.mxu0 0
      %1748 = vmatmul.mubr.bf16.gmra.mrb[0].mxu0 %v1639
      %v1749 = vpop.f32.mrb[0].mxu0
      %v1750 = vadd.f32 0.0, %v1749
      %v1751 = vpop.f32.mrb[0].mxu0
      %v1752 = vpop.f32.mrb[0].mxu0
      %v1753 = vadd.f32 0.0, %v1752
      %v1754 = vpop.f32.mrb[0].mxu0
      %1755 = vmatprep.mubr.bf16.mxu0 0
      %1756 = vmatmul.mubr.bf16.gmra.mrb[0].mxu0 %v1642
      %v1757 = vpop.f32.mrb[0].mxu0
      %v1758 = vadd.f32 0.0, %v1757
      %v1759 = vpop.f32.mrb[0].mxu0
      %v1760 = vpop.f32.mrb[0].mxu0
      %v1761 = vadd.f32 0.0, %v1760
      %v1762 = vpop.f32.mrb[0].mxu0
      %1763 = vmatprep.mubr.bf16.mxu0 0
      %1764 = vmatmul.mubr.bf16.gmra.mrb[0].mxu0 %v1645
      %v1765 = vpop.f32.mrb[0].mxu0
      %v1766 = vadd.f32 0.0, %v1765
      %v1767 = vpop.f32.mrb[0].mxu0
      %v1768 = vpop.f32.mrb[0].mxu0
      %v1769 = vadd.f32 0.0, %v1768
      %v1770 = vpop.f32.mrb[0].mxu0
      %1771 = vmatprep.mubr.bf16.mxu0 0
      %1772 = vmatmul.mubr.bf16.gmra.mrb[0].mxu0 %v1648
      %v1773 = vpop.f32.mrb[0].mxu0
      %v1774 = vadd.f32 0.0, %v1773
      %v1775 = vpop.f32.mrb[0].mxu0
      %v1776 = vpop.f32.mrb[0].mxu0
      %v1777 = vadd.f32 0.0, %v1776
      %v1778 = vpop.f32.mrb[0].mxu0
      %1779 = vmatprep.mubr.bf16.mxu0 0
      %1780 = vmatmul.mubr.bf16.gmra.mrb[0].mxu0 %v1651
      %v1781 = vpop.f32.mrb[0].mxu0
      %v1782 = vadd.f32 0.0, %v1781
      %v1783 = vpop.f32.mrb[0].mxu0
      %v1784 = vpop.f32.mrb[0].mxu0
      %v1785 = vadd.f32 0.0, %v1784
      %v1786 = vpop.f32.mrb[0].mxu0
      %1787 = vmatprep.mubr.bf16.mxu0 0
      %1788 = vmatmul.mubr.bf16.gmra.mrb[0].mxu0 %v1654
      %v1789 = vpop.f32.mrb[0].mxu0
      %v1790 = vadd.f32 0.0, %v1789
      %v1791 = vpop.f32.mrb[0].mxu0
      %v1792 = vpop.f32.mrb[0].mxu0
      %v1793 = vadd.f32 0.0, %v1792
      %v1794 = vpop.f32.mrb[0].mxu0
      %1795 = vmatprep.mubr.bf16.mxu0 0
      %1796 = vmatmul.mubr.bf16.gmra.mrb[0].mxu0 %v1657
      %v1797 = vpop.f32.mrb[0].mxu0
      %v1798 = vadd.f32 0.0, %v1797
      %v1799 = vpop.f32.mrb[0].mxu0
      %v1800 = vpop.f32.mrb[0].mxu0
      %v1801 = vadd.f32 0.0, %v1800
      %v1802 = vpop.f32.mrb[0].mxu0
      %1803 = vmatprep.mubr.bf16.mxu0 0
      %1804 = vmatmul.mubr.bf16.gmra.mrb[0].mxu0 %v1660
      %v1805 = vpop.f32.mrb[0].mxu0
      %v1806 = vadd.f32 0.0, %v1805
      %v1807 = vpop.f32.mrb[0].mxu0
      %v1808 = vpop.f32.mrb[0].mxu0
      %v1809 = vadd.f32 0.0, %v1808
      %v1810 = vpop.f32.mrb[0].mxu0
      %1811 = vmatprep.mubr.bf16.mxu0 0
      %1812 = vmatmul.mubr.bf16.gmra.mrb[0].mxu0 %v1663
      %v1813 = vpop.f32.mrb[0].mxu0
      %v1814 = vadd.f32 0.0, %v1813
      %v1815 = vpop.f32.mrb[0].mxu0
      %v1816 = vpop.f32.mrb[0].mxu0
      %v1817 = vadd.f32 0.0, %v1816
      %v1818 = vpop.f32.mrb[0].mxu0
      %1819 = vmatprep.mubr.bf16.mxu0 0
      %1820 = vmatmul.mubr.bf16.gmra.mrb[0].mxu0 %v1666
      %v1821 = vpop.f32.mrb[0].mxu0
      %v1822 = vadd.f32 0.0, %v1821
      %v1823 = vpop.f32.mrb[0].mxu0
      %v1824 = vpop.f32.mrb[0].mxu0
      %v1825 = vadd.f32 0.0, %v1824
      %v1826 = vpop.f32.mrb[0].mxu0
      %1827 = vmatprep.mubr.bf16.mxu0 0
      %1828 = vmatmul.mubr.bf16.gmra.mrb[0].mxu0 %v1669
      %v1829 = vpop.f32.mrb[0].mxu0
      %v1830 = vadd.f32 0.0, %v1829
      %v1831 = vpop.f32.mrb[0].mxu0
      %v1832 = vpop.f32.mrb[0].mxu0
      %v1833 = vadd.f32 0.0, %v1832
      %v1834 = vpop.f32.mrb[0].mxu0
      %1835 = vdwg.mxu0
      %v1836 = vld [vmem:[%s2] sm:$0x1]
      %v1838 = vlaneseq
      %v1839 = vshrl.u32 %v1838, 7
      %v1840 = vsub.s32 0, %v1839
      %v1841 = vrot.slane %v1836, %v1840
      %v1843 = vmul.f32 %v1710, %v1841
      %v1844 = vmul.f32 %v1713, %v1841
      %v1845 = vmul.f32 %v1718, %v1841
      %v1846 = vmul.f32 %v1721, %v1841
      %v1847 = vmul.f32 %v1726, %v1841
      %v1848 = vmul.f32 %v1729, %v1841
      %v1849 = vmul.f32 %v1734, %v1841
      %v1850 = vmul.f32 %v1737, %v1841
      %v1851 = vmul.f32 %v1742, %v1841
      %v1852 = vmul.f32 %v1745, %v1841
      %v1853 = vmul.f32 %v1750, %v1841
      %v1854 = vmul.f32 %v1753, %v1841
      %v1855 = vmul.f32 %v1758, %v1841
      %v1856 = vmul.f32 %v1761, %v1841
      %v1857 = vmul.f32 %v1766, %v1841
      %v1858 = vmul.f32 %v1769, %v1841
      %v1859 = vmul.f32 %v1774, %v1841
      %v1860 = vmul.f32 %v1777, %v1841
      %v1861 = vmul.f32 %v1782, %v1841
      %v1862 = vmul.f32 %v1785, %v1841
      %v1863 = vmul.f32 %v1790, %v1841
      %v1864 = vmul.f32 %v1793, %v1841
      %v1865 = vmul.f32 %v1798, %v1841
      %v1866 = vmul.f32 %v1801, %v1841
      %v1867 = vmul.f32 %v1806, %v1841
      %v1868 = vmul.f32 %v1809, %v1841
      %v1869 = vmul.f32 %v1814, %v1841
      %v1870 = vmul.f32 %v1817, %v1841
      %v1871 = vmul.f32 %v1822, %v1841
      %v1872 = vmul.f32 %v1825, %v1841
      %v1873 = vmul.f32 %v1830, %v1841
      %v1874 = vmul.f32 %v1833, %v1841
      %v1875 = vld [vmem:[%s3] sm:$0x1]
      %v1877 = vlaneseq
      %v1878 = vshrl.u32 %v1877, 7
      %v1879 = vsub.s32 0, %v1878
      %v1880 = vrot.slane %v1875, %v1879
      %v1882 = vadd.f32 %v1843, %v1880
      %v1883 = vadd.f32 %v1844, %v1880
      %v1884 = vadd.f32 %v1845, %v1880
      %v1885 = vadd.f32 %v1846, %v1880
      %v1886 = vadd.f32 %v1847, %v1880
      %v1887 = vadd.f32 %v1848, %v1880
      %v1888 = vadd.f32 %v1849, %v1880
      %v1889 = vadd.f32 %v1850, %v1880
      %v1890 = vadd.f32 %v1851, %v1880
      %v1891 = vadd.f32 %v1852, %v1880
      %v1892 = vadd.f32 %v1853, %v1880
      %v1893 = vadd.f32 %v1854, %v1880
      %v1894 = vadd.f32 %v1855, %v1880
      %v1895 = vadd.f32 %v1856, %v1880
      %v1896 = vadd.f32 %v1857, %v1880
      %v1897 = vadd.f32 %v1858, %v1880
      %v1898 = vadd.f32 %v1859, %v1880
      %v1899 = vadd.f32 %v1860, %v1880
      %v1900 = vadd.f32 %v1861, %v1880
      %v1901 = vadd.f32 %v1862, %v1880
      %v1902 = vadd.f32 %v1863, %v1880
      %v1903 = vadd.f32 %v1864, %v1880
      %v1904 = vadd.f32 %v1865, %v1880
      %v1905 = vadd.f32 %v1866, %v1880
      %v1906 = vadd.f32 %v1867, %v1880
      %v1907 = vadd.f32 %v1868, %v1880
      %v1908 = vadd.f32 %v1869, %v1880
      %v1909 = vadd.f32 %v1870, %v1880
      %v1910 = vadd.f32 %v1871, %v1880
      %v1911 = vadd.f32 %v1872, %v1880
      %v1912 = vadd.f32 %v1873, %v1880
      %v1913 = vadd.f32 %v1874, %v1880
      %v1914 = vmax.f32 %v1882, 0.0
      %v1915 = vmax.f32 %v1883, 0.0
      %v1916 = vmax.f32 %v1884, 0.0
      %v1917 = vmax.f32 %v1885, 0.0
      %v1918 = vmax.f32 %v1886, 0.0
      %v1919 = vmax.f32 %v1887, 0.0
      %v1920 = vmax.f32 %v1888, 0.0
      %v1921 = vmax.f32 %v1889, 0.0
      %v1922 = vmax.f32 %v1890, 0.0
      %v1923 = vmax.f32 %v1891, 0.0
      %v1924 = vmax.f32 %v1892, 0.0
      %v1925 = vmax.f32 %v1893, 0.0
      %v1926 = vmax.f32 %v1894, 0.0
      %v1927 = vmax.f32 %v1895, 0.0
      %v1928 = vmax.f32 %v1896, 0.0
      %v1929 = vmax.f32 %v1897, 0.0
      %v1930 = vmax.f32 %v1898, 0.0
      %v1931 = vmax.f32 %v1899, 0.0
      %v1932 = vmax.f32 %v1900, 0.0
      %v1933 = vmax.f32 %v1901, 0.0
      %v1934 = vmax.f32 %v1902, 0.0
      %v1935 = vmax.f32 %v1903, 0.0
      %v1936 = vmax.f32 %v1904, 0.0
      %v1937 = vmax.f32 %v1905, 0.0
      %v1938 = vmax.f32 %v1906, 0.0
      %v1939 = vmax.f32 %v1907, 0.0
      %v1940 = vmax.f32 %v1908, 0.0
      %v1941 = vmax.f32 %v1909, 0.0
      %v1942 = vmax.f32 %v1910, 0.0
      %v1943 = vmax.f32 %v1911, 0.0
      %v1944 = vmax.f32 %v1912, 0.0
      %v1945 = vmax.f32 %v1913, 0.0
      %vm1946 = vcmask 64512
      %1947 = vst.msk [vmem:[%s197] sm:$0xff] %vm1946, %v1914
      %1948 = vst.msk [vmem:[%s197 + $0x8] sm:$0xff] %vm1946, %v1915
      %1949 = vst.msk [vmem:[%s197 + $0x10] sm:$0xff] %vm1946, %v1916
      %1950 = vst.msk [vmem:[%s197 + $0x18] sm:$0xff] %vm1946, %v1917
      %1951 = vst.msk [vmem:[%s197 + $0x20] sm:$0xff] %vm1946, %v1918
      %1952 = vst.msk [vmem:[%s197 + $0x28] sm:$0xff] %vm1946, %v1919
      %1953 = vst.msk [vmem:[%s197 + $0x30] sm:$0xff] %vm1946, %v1920
      %1954 = vst.msk [vmem:[%s197 + $0x38] sm:$0xff] %vm1946, %v1921
      %1955 = vst.msk [vmem:[%s197 + $0x40] sm:$0xff] %vm1946, %v1922
      %1956 = vst.msk [vmem:[%s197 + $0x48] sm:$0xff] %vm1946, %v1923
      %1957 = vst.msk [vmem:[%s197 + $0x50] sm:$0xff] %vm1946, %v1924
      %1958 = vst.msk [vmem:[%s197 + $0x58] sm:$0xff] %vm1946, %v1925
      %1959 = vst.msk [vmem:[%s197 + $0x60] sm:$0xff] %vm1946, %v1926
      %1960 = vst.msk [vmem:[%s197 + $0x68] sm:$0xff] %vm1946, %v1927
      %1961 = vst.msk [vmem:[%s197 + $0x70] sm:$0xff] %vm1946, %v1928
      %1962 = vst.msk [vmem:[%s197 + $0x78] sm:$0xff] %vm1946, %v1929
      %1963 = vst.msk [vmem:[%s197 + $0x80] sm:$0xff] %vm1946, %v1930
      %1964 = vst.msk [vmem:[%s197 + $0x88] sm:$0xff] %vm1946, %v1931
      %1965 = vst.msk [vmem:[%s197 + $0x90] sm:$0xff] %vm1946, %v1932
      %1966 = vst.msk [vmem:[%s197 + $0x98] sm:$0xff] %vm1946, %v1933
      %1967 = vst.msk [vmem:[%s197 + $0xa0] sm:$0xff] %vm1946, %v1934
      %1968 = vst.msk [vmem:[%s197 + $0xa8] sm:$0xff] %vm1946, %v1935
      %1969 = vst.msk [vmem:[%s197 + $0xb0] sm:$0xff] %vm1946, %v1936
      %1970 = vst.msk [vmem:[%s197 + $0xb8] sm:$0xff] %vm1946, %v1937
      %1971 = vst.msk [vmem:[%s197 + $0xc0] sm:$0xff] %vm1946, %v1938
      %1972 = vst.msk [vmem:[%s197 + $0xc8] sm:$0xff] %vm1946, %v1939
      %1973 = vst.msk [vmem:[%s197 + $0xd0] sm:$0xff] %vm1946, %v1940
      %1974 = vst.msk [vmem:[%s197 + $0xd8] sm:$0xff] %vm1946, %v1941
      %1975 = vst.msk [vmem:[%s197 + $0xe0] sm:$0xff] %vm1946, %v1942
      %1976 = vst.msk [vmem:[%s197 + $0xe8] sm:$0xff] %vm1946, %v1943
      %1977 = vst.msk [vmem:[%s197 + $0xf0] sm:$0xff] %vm1946, %v1944
      %1978 = vst.msk [vmem:[%s197 + $0xf8] sm:$0xff] %vm1946, %v1945
      %p1979 = scmp.lt.s32.totalorder %s15, 1
      %s1980 = scalar_select %p1979, %s15, 1
      %s1981 = smul.addr %s1980, 32
      %s1982 = smul.addr %s1981, 8
      %s1983 = scalar_lea.vmem %s4, %s1982
      // Predicated region
      $region37: #{conv_block_forward.3} parent=35 // pred_check
        %p1984 = pneg %p122
      $region38: #{conv_block_forward.3} parent=35 // pred_check_branch
        %1986 = sbr.rel (%p1984) target = $region40
      $region39: #{conv_block_forward.3} parent=35 // pred_region
        _
      $region40: #{conv_block_forward.3} parent=35 // pred_fallthru
        _
    $region36: #{conv_block_forward.3} parent=5 // pred_fallthru
      _
    %p1987 = scmp.le.s32.totalorder 2, %s10
    // Predicated region
    $region41: #{conv_block_forward.3} parent=5 // pred_check
      %p1988 = pneg %p1987
    $region42: #{conv_block_forward.3} parent=5 // pred_check_branch
      %1990 = sbr.rel (%p1988) target = $region44
    $region43: #{conv_block_forward.3} parent=5 // pred_region
      %s1991 = ssub.s32 %s10, 2
      // Predicated region
      $region45: #{conv_block_forward.3} parent=43 // pred_check
        %p1992 = pneg %p128
      $region46: #{conv_block_forward.3} parent=43 // pred_check_branch
        %1994 = sbr.rel (%p1992) target = $region48
      $region47: #{conv_block_forward.3} parent=43 // pred_region
        %p1995 = scmp.lt.s32.totalorder %s16, 1
        %s1996 = scalar_select %p1995, %s16, 1
        %s1997 = smul.addr %s1996, 32
        %s1998 = smul.addr %s1997, 8
        %s1999 = scalar_lea.vmem %s4, %s1998
      $region48: #{conv_block_forward.3} parent=43 // pred_fallthru
        _
    $region44: #{conv_block_forward.3} parent=5 // pred_fallthru
      _
  $region6: #{conv_block_forward.3} parent=0 // loop_footer
    %s14 = sadd.s32 1, %s10
  $region7: #{conv_block_forward.3} parent=0 // loop_footer_branch
    %9 = sbr.rel target = $region3
  $region8: #{conv_block_forward.3} parent=0 // loop_exit
    _

// kernel: conv_block_forward.2
$region0: #{conv_block_forward.2}
  #allocation0 [shape = 'u32[]', space=smem, size = 0x4, offset = 0x4, fixed_abs, tag = 'smem constant byte address 0x4 - core index']
  #allocation1 [shape = 'u32[144,128]{1,0:T(1,128)}', space=vmem, size = 0x12000, scoped, tag = 'internal scratch']
  #allocation2 [shape = 'bf16[256,36]{1,0:T(16,128)(2,1)}', space=vmem, size = 0x10000, scoped, tag = 'scratch operand']
  %s0 = inlined_call_operand.vmem [shape: bf16[2,18,18,4], index: 0, kind: input, shape index: {}]
  %s1 = inlined_call_operand.vmem [shape: bf16[36,128], index: 1, kind: input, shape index: {}]
  %s2 = inlined_call_operand.vmem [shape: f32[2,2,128], index: 2, kind: output, shape index: {}]
  %s3 = sld [smem:[#allocation0]]
  $region41: #{conv_block_forward.2} parent=0
    _
  %s5 = ssub.s32 1, %s3
  %s6 = scalar_select 0, %s5, %s3
  loop: start=0, step=1, limit=4
  $region2: #{conv_block_forward.2} parent=0 // loop_pre_header
    _
  $region3: #{conv_block_forward.2} parent=0 // loop_header
    %s8 = sphi 0, %s12
    %p9 = scmp.ge.s32.totalorder %s8, 4
    %s18 = sphi 0, %s20
    %s21 = sphi 0, %s18
    %s22 = sphi 0, %s21
    %s38 = sphi 0, %s22
    %s42 = sphi 0, %s42
    %s44 = sphi 0, %s42
    %s45 = sphi 0, %s44
    %s59 = sphi 0, %s45
    %s65 = sphi 0, %s67
    %s68 = sphi 0, %s65
    %s69 = sphi 0, %s68
    %s85 = sphi 0, %s69
  $region4: #{conv_block_forward.2} parent=0 // loop_header_branch
    %11 = sbr.rel (%p9) target = $region8
  $region5: #{conv_block_forward.2} parent=0 // loop_body
    %s13 = ssub.s32 %s8, 1
    %s14 = ssub.s32 %s8, 2
    %s15 = sadd.s32 %s8, 1
    %s16 = ssub.s32 %s8, %s15
    %p17 = scmp.eq.s32.totalorder %s16, 0
    %s19 = sadd.s32 %s18, 1
    %s20 = scalar_select %p17, %s18, %s19
    %p23 = pneg %p17
    %p24 = scmp.eq.s32.totalorder %s8, 1
    %p25 = por %p23, %p24
    %p26 = scmp.ne.s32.totalorder %s18, %s21
    %p27 = scmp.eq.s32.totalorder %s8, 0
    %p28 = por %p26, %p27
    %p29 = scmp.ne.s32.totalorder %s18, %s21
    %p30 = scmp.eq.s32.totalorder %s13, 1
    %p31 = por %p29, %p30
    %p32 = scmp.ne.s32.totalorder %s21, %s22
    %p33 = scmp.eq.s32.totalorder %s13, 0
    %p34 = por %p32, %p33
    %p35 = scmp.ne.s32.totalorder %s21, %s22
    %p36 = scmp.eq.s32.totalorder %s14, 1
    %p37 = por %p35, %p36
    %p39 = scmp.ne.s32.totalorder %s22, %s38
    %p40 = scmp.eq.s32.totalorder %s14, 0
    %p41 = por %p39, %p40
    %s43 = sadd.s32 %s42, 1
    %p46 = scmp.eq.s32.totalorder %s8, 1
    %p47 = scmp.ne.s32.totalorder %s42, %s44
    %p48 = scmp.eq.s32.totalorder %s8, 0
    %p49 = por %p47, %p48
    %p50 = scmp.ne.s32.totalorder %s42, %s44
    %p51 = scmp.eq.s32.totalorder %s13, 1
    %p52 = por %p50, %p51
    %p53 = scmp.ne.s32.totalorder %s44, %s45
    %p54 = scmp.eq.s32.totalorder %s13, 0
    %p55 = por %p53, %p54
    %p56 = scmp.ne.s32.totalorder %s44, %s45
    %p57 = scmp.eq.s32.totalorder %s14, 1
    %p58 = por %p56, %p57
    %p60 = scmp.ne.s32.totalorder %s45, %s59
    %p61 = scmp.eq.s32.totalorder %s14, 0
    %p62 = por %p60, %p61
    %s63 = ssub.s32 %s8, %s15
    %p64 = scmp.eq.s32.totalorder %s63, 0
    %s66 = sadd.s32 %s65, 1
    %s67 = scalar_select %p64, %s65, %s66
    %p70 = pneg %p64
    %p71 = scmp.eq.s32.totalorder %s8, 1
    %p72 = por %p70, %p71
    %p73 = scmp.ne.s32.totalorder %s65, %s68
    %p74 = scmp.eq.s32.totalorder %s8, 0
    %p75 = por %p73, %p74
    %p76 = scmp.ne.s32.totalorder %s65, %s68
    %p77 = scmp.eq.s32.totalorder %s13, 1
    %p78 = por %p76, %p77
    %p79 = scmp.ne.s32.totalorder %s68, %s69
    %p80 = scmp.eq.s32.totalorder %s13, 0
    %p81 = por %p79, %p80
    %p82 = scmp.ne.s32.totalorder %s68, %s69
    %p83 = scmp.eq.s32.totalorder %s14, 1
    %p84 = por %p82, %p83
    %p86 = scmp.ne.s32.totalorder %s69, %s85
    %p87 = scmp.eq.s32.totalorder %s14, 0
    %p88 = por %p86, %p87
    %p89 = scmp.le.s32.totalorder 1, %s8
    %p90 = scmp.lt.s32.totalorder %s8, 3
    %p91 = pnand %p89, %p90
    %p92 = pneg %p91
    // Predicated region
    $region9: #{conv_block_forward.2} parent=5 // pred_check
      _
    $region10: #{conv_block_forward.2} parent=5 // pred_check_branch
      %94 = sbr.rel (%p91) target = $region12
    $region11: #{conv_block_forward.2} parent=5 // pred_region
      %s95 = ssub.s32 %s8, 1
      // Predicated region
      $region13: #{conv_block_forward.2} parent=11 // pred_check
        %p96 = pneg %p55
      $region14: #{conv_block_forward.2} parent=11 // pred_check_branch
        %98 = sbr.rel (%p96) target = $region16
      $region15: #{conv_block_forward.2} parent=11 // pred_region
        _
      $region16: #{conv_block_forward.2} parent=11 // pred_fallthru
        _
    $region12: #{conv_block_forward.2} parent=5 // pred_fallthru
      _
    %p99 = scmp.lt.s32.totalorder %s8, 2
    // Predicated region
    $region17: #{conv_block_forward.2} parent=5 // pred_check
      %p100 = pneg %p99
    $region18: #{conv_block_forward.2} parent=5 // pred_check_branch
      %102 = sbr.rel (%p100) target = $region20
    $region19: #{conv_block_forward.2} parent=5 // pred_region
      // Predicated region
      $region21: #{conv_block_forward.2} parent=19 // pred_check
        %p103 = pneg %p28
      $region22: #{conv_block_forward.2} parent=19 // pred_check_branch
        %105 = sbr.rel (%p103) target = $region24
      $region23: #{conv_block_forward.2} parent=19 // pred_region
        %p106 = scmp.lt.s32.totalorder %s8, 1
        %s107 = scalar_select %p106, %s8, 1
        %s108 = smul.addr %s107, 54
        %s109 = smul.addr %s108, 4
        %s110 = scalar_lea.vmem %s0, %s109
      $region24: #{conv_block_forward.2} parent=19 // pred_fallthru
        _
    $region20: #{conv_block_forward.2} parent=5 // pred_fallthru
      _
    %p111 = scmp.le.s32.totalorder 1, %s8
    %p112 = scmp.lt.s32.totalorder %s8, 3
    %p113 = pnand %p111, %p112
    %p114 = pneg %p113
    // Predicated region
    $region25: #{conv_block_forward.2} parent=5 // pred_check
      _
    $region26: #{conv_block_forward.2} parent=5 // pred_check_branch
      %116 = sbr.rel (%p113) target = $region28
    $region27: #{conv_block_forward.2} parent=5 // pred_region
      %s117 = ssub.s32 %s8, 1
      %p118 = scmp.lt.s32.totalorder %s13, 1
      %s119 = scalar_select %p118, %s13, 1
      %s120 = smul.addr %s119, 54
      %s121 = smul.addr %s120, 4
      %s122 = scalar_lea.vmem %s0, %s121
      %p123 = pneg %p34
      %p124 = pneg %p31
      %p125 = pneg %p55
      %p126 = pneg %p52
      %p127 = pneg %p81
      %p128 = pneg %p78
      %p129 = scmp.lt.s32.totalorder %s13, 1
      %s130 = scalar_select %p129, %s13, 1
      %s131 = smul.addr %s130, 2
      %s132 = scalar_lea.vmem %s2, %s131
      %p133 = scmp.lt.s32.totalorder %s13, 1
      %s134 = scalar_select %p133, %s13, 1
      %s135 = smul.addr %s134, 54
      %s136 = smul.addr %s135, 4
      %s137 = scalar_lea.vmem %s0, %s136
      %p138 = scmp.lt.s32.totalorder %s13, 1
      %s139 = scalar_select %p138, %s13, 1
      %s140 = smul.addr %s139, 2
      %s141 = scalar_lea.vmem %s2, %s140
      %v143 = vld [vmem:[%s137] sm:$0xf]
      %v144 = vld [vmem:[%s137 + $0x4] sm:$0xf]
      %v145 = vld [vmem:[%s137 + $0x8] sm:$0x1]
      %v146 = vld [vmem:[%s137 + $0xc] sm:$0xf]
      %v147 = vld [vmem:[%s137 + $0x10] sm:$0xf]
      %v148 = vld [vmem:[%s137 + $0x14] sm:$0x1]
      %v149 = vld [vmem:[%s137 + $0x18] sm:$0xf]
      %v150 = vld [vmem:[%s137 + $0x1c] sm:$0xf]
      %v151 = vld [vmem:[%s137 + $0x20] sm:$0x1]
      %v152 = vld [vmem:[%s137 + $0x24] sm:$0xf]
      %v153 = vld [vmem:[%s137 + $0x28] sm:$0xf]
      %v154 = vld [vmem:[%s137 + $0x2c] sm:$0x1]
      %v155 = vld [vmem:[%s137 + $0x30] sm:$0xf]
      %v156 = vld [vmem:[%s137 + $0x34] sm:$0xf]
      %v157 = vld [vmem:[%s137 + $0x38] sm:$0x1]
      %v158 = vld [vmem:[%s137 + $0x3c] sm:$0xf]
      %v159 = vld [vmem:[%s137 + $0x40] sm:$0xf]
      %v160 = vld [vmem:[%s137 + $0x44] sm:$0x1]
      %v161 = vld [vmem:[%s137 + $0x48] sm:$0xf]
      %v162 = vld [vmem:[%s137 + $0x4c] sm:$0xf]
      %v163 = vld [vmem:[%s137 + $0x50] sm:$0x1]
      %v164 = vld [vmem:[%s137 + $0x54] sm:$0xf]
      %v165 = vld [vmem:[%s137 + $0x58] sm:$0xf]
      %v166 = vld [vmem:[%s137 + $0x5c] sm:$0x1]
      %v167 = vld [vmem:[%s137 + $0x60] sm:$0xf]
      %v168 = vld [vmem:[%s137 + $0x64] sm:$0xf]
      %v169 = vld [vmem:[%s137 + $0x68] sm:$0x1]
      %v170 = vld [vmem:[%s137 + $0x6c] sm:$0xf]
      %v171 = vld [vmem:[%s137 + $0x70] sm:$0xf]
      %v172 = vld [vmem:[%s137 + $0x74] sm:$0x1]
      %v173 = vld [vmem:[%s137 + $0x78] sm:$0xf]
      %v174 = vld [vmem:[%s137 + $0x7c] sm:$0xf]
      %v175 = vld [vmem:[%s137 + $0x80] sm:$0x1]
      %v176 = vld [vmem:[%s137 + $0x84] sm:$0xf]
      %v177 = vld [vmem:[%s137 + $0x88] sm:$0xf]
      %v178 = vld [vmem:[%s137 + $0x8c] sm:$0x1]
      %v179 = vld [vmem:[%s137 + $0x90] sm:$0xf]
      %v180 = vld [vmem:[%s137 + $0x94] sm:$0xf]
      %v181 = vld [vmem:[%s137 + $0x98] sm:$0x1]
      %v182 = vld [vmem:[%s137 + $0x9c] sm:$0xf]
      %v183 = vld [vmem:[%s137 + $0xa0] sm:$0xf]
      %v184 = vld [vmem:[%s137 + $0xa4] sm:$0x1]
      %v185 = vld [vmem:[%s137 + $0xa8] sm:$0xf]
      %v186 = vld [vmem:[%s137 + $0xac] sm:$0xf]
      %v187 = vld [vmem:[%s137 + $0xb0] sm:$0x1]
      %v188 = vld [vmem:[%s137 + $0xb4] sm:$0xf]
      %v189 = vld [vmem:[%s137 + $0xb8] sm:$0xf]
      %v190 = vld [vmem:[%s137 + $0xbc] sm:$0x1]
      %v191 = vld [vmem:[%s137 + $0xc0] sm:$0xf]
      %v192 = vld [vmem:[%s137 + $0xc4] sm:$0xf]
      %v193 = vld [vmem:[%s137 + $0xc8] sm:$0x1]
      %v194 = vld [vmem:[%s137 + $0xcc] sm:$0xf]
      %v195 = vld [vmem:[%s137 + $0xd0] sm:$0xf]
      %v196 = vld [vmem:[%s137 + $0xd4] sm:$0x1]
      %v229 = vunpack.c.l.b16 %v143
      %v230 = vunpack.c.l.b16 %v144
      %v231 = vunpack.c.l.b16 %v146
      %v232 = vunpack.c.l.b16 %v147
      %v233 = vunpack.c.l.b16 %v149
      %v234 = vunpack.c.l.b16 %v150
      %v235 = vunpack.c.l.b16 %v152
      %v236 = vunpack.c.l.b16 %v153
      %v237 = vunpack.c.l.b16 %v155
      %v238 = vunpack.c.l.b16 %v156
      %v239 = vunpack.c.l.b16 %v158
      %v240 = vunpack.c.l.b16 %v159
      %v241 = vunpack.c.l.b16 %v161
      %v242 = vunpack.c.l.b16 %v162
      %v243 = vunpack.c.l.b16 %v164
      %v244 = vunpack.c.l.b16 %v165
      %v245 = vunpack.c.l.b16 %v167
      %v246 = vunpack.c.l.b16 %v168
      %v247 = vunpack.c.l.b16 %v170
      %v248 = vunpack.c.l.b16 %v171
      %v249 = vunpack.c.l.b16 %v173
      %v250 = vunpack.c.l.b16 %v174
      %v251 = vunpack.c.l.b16 %v176
      %v252 = vunpack.c.l.b16 %v177
      %v253 = vunpack.c.l.b16 %v179
      %v254 = vunpack.c.l.b16 %v180
      %v255 = vunpack.c.l.b16 %v182
      %v256 = vunpack.c.l.b16 %v183
      %v257 = vunpack.c.l.b16 %v185
      %v258 = vunpack.c.l.b16 %v186
      %v259 = vunpack.c.l.b16 %v188
      %v260 = vunpack.c.l.b16 %v189
      %v261 = vpack.c.b16 %v230, %v229
      %v262 = vpack.c.b16 %v232, %v231
      %v263 = vpack.c.b16 %v234, %v233
      %v264 = vpack.c.b16 %v236, %v235
      %v265 = vpack.c.b16 %v238, %v237
      %v266 = vpack.c.b16 %v240, %v239
      %v267 = vpack.c.b16 %v242, %v241
      %v268 = vpack.c.b16 %v244, %v243
      %v269 = vpack.c.b16 %v246, %v245
      %v270 = vpack.c.b16 %v248, %v247
      %v271 = vpack.c.b16 %v250, %v249
      %v272 = vpack.c.b16 %v252, %v251
      %v273 = vpack.c.b16 %v254, %v253
      %v274 = vpack.c.b16 %v256, %v255
      %v275 = vpack.c.b16 %v258, %v257
      %v276 = vpack.c.b16 %v260, %v259
      %vm293 = vcmask 31744
      %294 = vst.msk [vmem:[#allocation2] sm:$0xff] %vm293, %v261
      %295 = vst.msk [vmem:[#allocation2 + $0x8] sm:$0xff] %vm293, %v262
      %296 = vst.msk [vmem:[#allocation2 + $0x10] sm:$0xff] %vm293, %v263
      %297 = vst.msk [vmem:[#allocation2 + $0x18] sm:$0xff] %vm293, %v264
      %298 = vst.msk [vmem:[#allocation2 + $0x20] sm:$0xff] %vm293, %v265
      %299 = vst.msk [vmem:[#allocation2 + $0x28] sm:$0xff] %vm293, %v266
      %300 = vst.msk [vmem:[#allocation2 + $0x30] sm:$0xff] %vm293, %v267
      %301 = vst.msk [vmem:[#allocation2 + $0x38] sm:$0xff] %vm293, %v268
      %302 = vst.msk [vmem:[#allocation2 + $0x40] sm:$0xff] %vm293, %v269
      %303 = vst.msk [vmem:[#allocation2 + $0x48] sm:$0xff] %vm293, %v270
      %304 = vst.msk [vmem:[#allocation2 + $0x50] sm:$0xff] %vm293, %v271
      %305 = vst.msk [vmem:[#allocation2 + $0x58] sm:$0xff] %vm293, %v272
      %306 = vst.msk [vmem:[#allocation2 + $0x60] sm:$0xff] %vm293, %v273
      %307 = vst.msk [vmem:[#allocation2 + $0x68] sm:$0xff] %vm293, %v274
      %308 = vst.msk [vmem:[#allocation2 + $0x70] sm:$0xff] %vm293, %v275
      %309 = vst.msk [vmem:[#allocation2 + $0x78] sm:$0xff] %vm293, %v276
      %vm310 = vsmask.f32 3328
      %vm311 = vsmask.f32 7440
      %vm312 = vmor %vm310, %vm311
      %v314 = vshrl.u32 %v143, 16
      %v316 = vrot.slane %v314, 4
      %v317 = vshll.u32 %v143, 16
      %v319 = vrot.slane %v317, 5
      %v320 = vor.u32 %v316, %v319
      %v321 = vrot.slane %v320, 4
      %v323 = vshll.u32 %v144, 16
      %v325 = vrot.slane %v323, 5
      %v326 = vsel %vm312, %v321, %v325
      %v327 = vshrl.u32 %v144, 16
      %v329 = vrot.slane %v327, 4
      %v330 = vor.u32 %v329, %v325
      %v331 = vrot.slane %v330, 4
      %v333 = vshll.u32 %v145, 16
      %v335 = vrot.slane %v333, 5
      %v336 = vsel %vm312, %v331, %v335
      %v338 = vshrl.u32 %v146, 16
      %v340 = vrot.slane %v338, 4
      %v341 = vshll.u32 %v146, 16
      %v343 = vrot.slane %v341, 5
      %v344 = vor.u32 %v340, %v343
      %v345 = vrot.slane %v344, 4
      %v347 = vshll.u32 %v147, 16
      %v349 = vrot.slane %v347, 5
      %v350 = vsel %vm312, %v345, %v349
      %v351 = vshrl.u32 %v147, 16
      %v353 = vrot.slane %v351, 4
      %v354 = vor.u32 %v353, %v349
      %v355 = vrot.slane %v354, 4
      %v357 = vshll.u32 %v148, 16
      %v359 = vrot.slane %v357, 5
      %v360 = vsel %vm312, %v355, %v359
      %v362 = vshrl.u32 %v149, 16
      %v364 = vrot.slane %v362, 4
      %v365 = vshll.u32 %v149, 16
      %v367 = vrot.slane %v365, 5
      %v368 = vor.u32 %v364, %v367
      %v369 = vrot.slane %v368, 4
      %v371 = vshll.u32 %v150, 16
      %v373 = vrot.slane %v371, 5
      %v374 = vsel %vm312, %v369, %v373
      %v375 = vshrl.u32 %v150, 16
      %v377 = vrot.slane %v375, 4
      %v378 = vor.u32 %v377, %v373
      %v379 = vrot.slane %v378, 4
      %v381 = vshll.u32 %v151, 16
      %v383 = vrot.slane %v381, 5
      %v384 = vsel %vm312, %v379, %v383
      %v386 = vshrl.u32 %v152, 16
      %v388 = vrot.slane %v386, 4
      %v389 = vshll.u32 %v152, 16
      %v391 = vrot.slane %v389, 5
      %v392 = vor.u32 %v388, %v391
      %v393 = vrot.slane %v392, 4
      %v395 = vshll.u32 %v153, 16
      %v397 = vrot.slane %v395, 5
      %v398 = vsel %vm312, %v393, %v397
      %v399 = vshrl.u32 %v153, 16
      %v401 = vrot.slane %v399, 4
      %v402 = vor.u32 %v401, %v397
      %v403 = vrot.slane %v402, 4
      %v405 = vshll.u32 %v154, 16
      %v407 = vrot.slane %v405, 5
      %v408 = vsel %vm312, %v403, %v407
      %v410 = vshrl.u32 %v155, 16
      %v412 = vrot.slane %v410, 4
      %v413 = vshll.u32 %v155, 16
      %v415 = vrot.slane %v413, 5
      %v416 = vor.u32 %v412, %v415
      %v417 = vrot.slane %v416, 4
      %v419 = vshll.u32 %v156, 16
      %v421 = vrot.slane %v419, 5
      %v422 = vsel %vm312, %v417, %v421
      %v423 = vshrl.u32 %v156, 16
      %v425 = vrot.slane %v423, 4
      %v426 = vor.u32 %v425, %v421
      %v427 = vrot.slane %v426, 4
      %v429 = vshll.u32 %v157, 16
      %v431 = vrot.slane %v429, 5
      %v432 = vsel %vm312, %v427, %v431
      %v434 = vshrl.u32 %v158, 16
      %v436 = vrot.slane %v434, 4
      %v437 = vshll.u32 %v158, 16
      %v439 = vrot.slane %v437, 5
      %v440 = vor.u32 %v436, %v439
      %v441 = vrot.slane %v440, 4
      %v443 = vshll.u32 %v159, 16
      %v445 = vrot.slane %v443, 5
      %v446 = vsel %vm312, %v441, %v445
      %v447 = vshrl.u32 %v159, 16
      %v449 = vrot.slane %v447, 4
      %v450 = vor.u32 %v449, %v445
      %v451 = vrot.slane %v450, 4
      %v453 = vshll.u32 %v160, 16
      %v455 = vrot.slane %v453, 5
      %v456 = vsel %vm312, %v451, %v455
      %v458 = vshrl.u32 %v161, 16
      %v460 = vrot.slane %v458, 4
      %v461 = vshll.u32 %v161, 16
      %v463 = vrot.slane %v461, 5
      %v464 = vor.u32 %v460, %v463
      %v465 = vrot.slane %v464, 4
      %v467 = vshll.u32 %v162, 16
      %v469 = vrot.slane %v467, 5
      %v470 = vsel %vm312, %v465, %v469
      %v471 = vshrl.u32 %v162, 16
      %v473 = vrot.slane %v471, 4
      %v474 = vor.u32 %v473, %v469
      %v475 = vrot.slane %v474, 4
      %v477 = vshll.u32 %v163, 16
      %v479 = vrot.slane %v477, 5
      %v480 = vsel %vm312, %v475, %v479
      %v482 = vshrl.u32 %v164, 16
      %v484 = vrot.slane %v482, 4
      %v485 = vshll.u32 %v164, 16
      %v487 = vrot.slane %v485, 5
      %v488 = vor.u32 %v484, %v487
      %v489 = vrot.slane %v488, 4
      %v491 = vshll.u32 %v165, 16
      %v493 = vrot.slane %v491, 5
      %v494 = vsel %vm312, %v489, %v493
      %v495 = vshrl.u32 %v165, 16
      %v497 = vrot.slane %v495, 4
      %v498 = vor.u32 %v497, %v493
      %v499 = vrot.slane %v498, 4
      %v501 = vshll.u32 %v166, 16
      %v503 = vrot.slane %v501, 5
      %v504 = vsel %vm312, %v499, %v503
      %v506 = vshrl.u32 %v167, 16
      %v508 = vrot.slane %v506, 4
      %v509 = vshll.u32 %v167, 16
      %v511 = vrot.slane %v509, 5
      %v512 = vor.u32 %v508, %v511
      %v513 = vrot.slane %v512, 4
      %v515 = vshll.u32 %v168, 16
      %v517 = vrot.slane %v515, 5
      %v518 = vsel %vm312, %v513, %v517
      %v519 = vshrl.u32 %v168, 16
      %v521 = vrot.slane %v519, 4
      %v522 = vor.u32 %v521, %v517
      %v523 = vrot.slane %v522, 4
      %v525 = vshll.u32 %v169, 16
      %v527 = vrot.slane %v525, 5
      %v528 = vsel %vm312, %v523, %v527
      %v530 = vshrl.u32 %v170, 16
      %v532 = vrot.slane %v530, 4
      %v533 = vshll.u32 %v170, 16
      %v535 = vrot.slane %v533, 5
      %v536 = vor.u32 %v532, %v535
      %v537 = vrot.slane %v536, 4
      %v539 = vshll.u32 %v171, 16
      %v541 = vrot.slane %v539, 5
      %v542 = vsel %vm312, %v537, %v541
      %v543 = vshrl.u32 %v171, 16
      %v545 = vrot.slane %v543, 4
      %v546 = vor.u32 %v545, %v541
      %v547 = vrot.slane %v546, 4
      %v549 = vshll.u32 %v172, 16
      %v551 = vrot.slane %v549, 5
      %v552 = vsel %vm312, %v547, %v551
      %v554 = vshrl.u32 %v173, 16
      %v556 = vrot.slane %v554, 4
      %v557 = vshll.u32 %v173, 16
      %v559 = vrot.slane %v557, 5
      %v560 = vor.u32 %v556, %v559
      %v561 = vrot.slane %v560, 4
      %v563 = vshll.u32 %v174, 16
      %v565 = vrot.slane %v563, 5
      %v566 = vsel %vm312, %v561, %v565
      %v567 = vshrl.u32 %v174, 16
      %v569 = vrot.slane %v567, 4
      %v570 = vor.u32 %v569, %v565
      %v571 = vrot.slane %v570, 4
      %v573 = vshll.u32 %v175, 16
      %v575 = vrot.slane %v573, 5
      %v576 = vsel %vm312, %v571, %v575
      %v578 = vshrl.u32 %v176, 16
      %v580 = vrot.slane %v578, 4
      %v581 = vshll.u32 %v176, 16
      %v583 = vrot.slane %v581, 5
      %v584 = vor.u32 %v580, %v583
      %v585 = vrot.slane %v584, 4
      %v587 = vshll.u32 %v177, 16
      %v589 = vrot.slane %v587, 5
      %v590 = vsel %vm312, %v585, %v589
      %v591 = vshrl.u32 %v177, 16
      %v593 = vrot.slane %v591, 4
      %v594 = vor.u32 %v593, %v589
      %v595 = vrot.slane %v594, 4
      %v597 = vshll.u32 %v178, 16
      %v599 = vrot.slane %v597, 5
      %v600 = vsel %vm312, %v595, %v599
      %v602 = vshrl.u32 %v179, 16
      %v604 = vrot.slane %v602, 4
      %v605 = vshll.u32 %v179, 16
      %v607 = vrot.slane %v605, 5
      %v608 = vor.u32 %v604, %v607
      %v609 = vrot.slane %v608, 4
      %v611 = vshll.u32 %v180, 16
      %v613 = vrot.slane %v611, 5
      %v614 = vsel %vm312, %v609, %v613
      %v615 = vshrl.u32 %v180, 16
      %v617 = vrot.slane %v615, 4
      %v618 = vor.u32 %v617, %v613
      %v619 = vrot.slane %v618, 4
      %v621 = vshll.u32 %v181, 16
      %v623 = vrot.slane %v621, 5
      %v624 = vsel %vm312, %v619, %v623
      %v626 = vshrl.u32 %v182, 16
      %v628 = vrot.slane %v626, 4
      %v629 = vshll.u32 %v182, 16
      %v631 = vrot.slane %v629, 5
      %v632 = vor.u32 %v628, %v631
      %v633 = vrot.slane %v632, 4
      %v635 = vshll.u32 %v183, 16
      %v637 = vrot.slane %v635, 5
      %v638 = vsel %vm312, %v633, %v637
      %v639 = vshrl.u32 %v183, 16
      %v641 = vrot.slane %v639, 4
      %v642 = vor.u32 %v641, %v637
      %v643 = vrot.slane %v642, 4
      %v645 = vshll.u32 %v184, 16
      %v647 = vrot.slane %v645, 5
      %v648 = vsel %vm312, %v643, %v647
      %v650 = vshrl.u32 %v185, 16
      %v652 = vrot.slane %v650, 4
      %v653 = vshll.u32 %v185, 16
      %v655 = vrot.slane %v653, 5
      %v656 = vor.u32 %v652, %v655
      %v657 = vrot.slane %v656, 4
      %v659 = vshll.u32 %v186, 16
      %v661 = vrot.slane %v659, 5
      %v662 = vsel %vm312, %v657, %v661
      %v663 = vshrl.u32 %v186, 16
      %v665 = vrot.slane %v663, 4
      %v666 = vor.u32 %v665, %v661
      %v667 = vrot.slane %v666, 4
      %v669 = vshll.u32 %v187, 16
      %v671 = vrot.slane %v669, 5
      %v672 = vsel %vm312, %v667, %v671
      %v674 = vshrl.u32 %v188, 16
      %v676 = vrot.slane %v674, 4
      %v677 = vshll.u32 %v188, 16
      %v679 = vrot.slane %v677, 5
      %v680 = vor.u32 %v676, %v679
      %v681 = vrot.slane %v680, 4
      %v683 = vshll.u32 %v189, 16
      %v685 = vrot.slane %v683, 5
      %v686 = vsel %vm312, %v681, %v685
      %v687 = vshrl.u32 %v189, 16
      %v689 = vrot.slane %v687, 4
      %v690 = vor.u32 %v689, %v685
      %v691 = vrot.slane %v690, 4
      %v693 = vshll.u32 %v190, 16
      %v695 = vrot.slane %v693, 5
      %v696 = vsel %vm312, %v691, %v695
      %v697 = vunpack.c.l.b16 %v326
      %v698 = vunpack.c.l.b16 %v336
      %v699 = vunpack.c.l.b16 %v350
      %v700 = vunpack.c.l.b16 %v360
      %v701 = vunpack.c.l.b16 %v374
      %v702 = vunpack.c.l.b16 %v384
      %v703 = vunpack.c.l.b16 %v398
      %v704 = vunpack.c.l.b16 %v408
      %v705 = vunpack.c.l.b16 %v422
      %v706 = vunpack.c.l.b16 %v432
      %v707 = vunpack.c.l.b16 %v446
      %v708 = vunpack.c.l.b16 %v456
      %v709 = vunpack.c.l.b16 %v470
      %v710 = vunpack.c.l.b16 %v480
      %v711 = vunpack.c.l.b16 %v494
      %v712 = vunpack.c.l.b16 %v504
      %v713 = vunpack.c.l.b16 %v518
      %v714 = vunpack.c.l.b16 %v528
      %v715 = vunpack.c.l.b16 %v542
      %v716 = vunpack.c.l.b16 %v552
      %v717 = vunpack.c.l.b16 %v566
      %v718 = vunpack.c.l.b16 %v576
      %v719 = vunpack.c.l.b16 %v590
      %v720 = vunpack.c.l.b16 %v600
      %v721 = vunpack.c.l.b16 %v614
      %v722 = vunpack.c.l.b16 %v624
      %v723 = vunpack.c.l.b16 %v638
      %v724 = vunpack.c.l.b16 %v648
      %v725 = vunpack.c.l.b16 %v662
      %v726 = vunpack.c.l.b16 %v672
      %v727 = vunpack.c.l.b16 %v686
      %v728 = vunpack.c.l.b16 %v696
      %v729 = vpack.c.b16 %v698, %v697
      %v730 = vpack.c.b16 %v700, %v699
      %v731 = vpack.c.b16 %v702, %v701
      %v732 = vpack.c.b16 %v704, %v703
      %v733 = vpack.c.b16 %v706, %v705
      %v734 = vpack.c.b16 %v708, %v707
      %v735 = vpack.c.b16 %v710, %v709
      %v736 = vpack.c.b16 %v712, %v711
      %v737 = vpack.c.b16 %v714, %v713
      %v738 = vpack.c.b16 %v716, %v715
      %v739 = vpack.c.b16 %v718, %v717
      %v740 = vpack.c.b16 %v720, %v719
      %v741 = vpack.c.b16 %v722, %v721
      %v742 = vpack.c.b16 %v724, %v723
      %v743 = vpack.c.b16 %v726, %v725
      %v744 = vpack.c.b16 %v728, %v727
      %745 = vrot.lane.b32.xlu0 %v729, 4
      %v746 = vpop.permute.xlu0 %745
      %747 = vrot.lane.b32.xlu0 %v730, 4
      %v748 = vpop.permute.xlu0 %747
      %749 = vrot.lane.b32.xlu0 %v731, 4
      %v750 = vpop.permute.xlu0 %749
      %751 = vrot.lane.b32.xlu0 %v732, 4
      %v752 = vpop.permute.xlu0 %751
      %753 = vrot.lane.b32.xlu0 %v733, 4
      %v754 = vpop.permute.xlu0 %753
      %755 = vrot.lane.b32.xlu0 %v734, 4
      %v756 = vpop.permute.xlu0 %755
      %757 = vrot.lane.b32.xlu0 %v735, 4
      %v758 = vpop.permute.xlu0 %757
      %759 = vrot.lane.b32.xlu0 %v736, 4
      %v760 = vpop.permute.xlu0 %759
      %761 = vrot.lane.b32.xlu0 %v737, 4
      %v762 = vpop.permute.xlu0 %761
      %763 = vrot.lane.b32.xlu0 %v738, 4
      %v764 = vpop.permute.xlu0 %763
      %765 = vrot.lane.b32.xlu0 %v739, 4
      %v766 = vpop.permute.xlu0 %765
      %767 = vrot.lane.b32.xlu0 %v740, 4
      %v768 = vpop.permute.xlu0 %767
      %769 = vrot.lane.b32.xlu0 %v741, 4
      %v770 = vpop.permute.xlu0 %769
      %771 = vrot.lane.b32.xlu0 %v742, 4
      %v772 = vpop.permute.xlu0 %771
      %773 = vrot.lane.b32.xlu0 %v743, 4
      %v774 = vpop.permute.xlu0 %773
      %775 = vrot.lane.b32.xlu0 %v744, 4
      %v776 = vpop.permute.xlu0 %775
      %vm793 = vcmask 64544
      %794 = vst.msk [vmem:[#allocation2] sm:$0xff] %vm793, %v746
      %795 = vst.msk [vmem:[#allocation2 + $0x8] sm:$0xff] %vm793, %v748
      %796 = vst.msk [vmem:[#allocation2 + $0x10] sm:$0xff] %vm793, %v750
      %797 = vst.msk [vmem:[#allocation2 + $0x18] sm:$0xff] %vm793, %v752
      %798 = vst.msk [vmem:[#allocation2 + $0x20] sm:$0xff] %vm793, %v754
      %799 = vst.msk [vmem:[#allocation2 + $0x28] sm:$0xff] %vm793, %v756
      %800 = vst.msk [vmem:[#allocation2 + $0x30] sm:$0xff] %vm793, %v758
      %801 = vst.msk [vmem:[#allocation2 + $0x38] sm:$0xff] %vm793, %v760
      %802 = vst.msk [vmem:[#allocation2 + $0x40] sm:$0xff] %vm793, %v762
      %803 = vst.msk [vmem:[#allocation2 + $0x48] sm:$0xff] %vm793, %v764
      %804 = vst.msk [vmem:[#allocation2 + $0x50] sm:$0xff] %vm793, %v766
      %805 = vst.msk [vmem:[#allocation2 + $0x58] sm:$0xff] %vm793, %v768
      %806 = vst.msk [vmem:[#allocation2 + $0x60] sm:$0xff] %vm793, %v770
      %807 = vst.msk [vmem:[#allocation2 + $0x68] sm:$0xff] %vm793, %v772
      %808 = vst.msk [vmem:[#allocation2 + $0x70] sm:$0xff] %vm793, %v774
      %809 = vst.msk [vmem:[#allocation2 + $0x78] sm:$0xff] %vm793, %v776
      %vm826 = vcmask 1042432
      %vm827 = vcmask 1046532
      %vm828 = vmor %vm826, %vm827
      %v829 = vrot.slane %v143, 5
      %v830 = vrot.slane %v829, 4
      %v831 = vrot.slane %v144, 5
      %v832 = vsel %vm828, %v830, %v831
      %v833 = vrot.slane %v831, 4
      %v834 = vrot.slane %v145, 5
      %v835 = vsel %vm828, %v833, %v834
      %v836 = vrot.slane %v146, 5
      %v837 = vrot.slane %v836, 4
      %v838 = vrot.slane %v147, 5
      %v839 = vsel %vm828, %v837, %v838
      %v840 = vrot.slane %v838, 4
      %v841 = vrot.slane %v148, 5
      %v842 = vsel %vm828, %v840, %v841
      %v843 = vrot.slane %v149, 5
      %v844 = vrot.slane %v843, 4
      %v845 = vrot.slane %v150, 5
      %v846 = vsel %vm828, %v844, %v845
      %v847 = vrot.slane %v845, 4
      %v848 = vrot.slane %v151, 5
      %v849 = vsel %vm828, %v847, %v848
      %v850 = vrot.slane %v152, 5
      %v851 = vrot.slane %v850, 4
      %v852 = vrot.slane %v153, 5
      %v853 = vsel %vm828, %v851, %v852
      %v854 = vrot.slane %v852, 4
      %v855 = vrot.slane %v154, 5
      %v856 = vsel %vm828, %v854, %v855
      %v857 = vrot.slane %v155, 5
      %v858 = vrot.slane %v857, 4
      %v859 = vrot.slane %v156, 5
      %v860 = vsel %vm828, %v858, %v859
      %v861 = vrot.slane %v859, 4
      %v862 = vrot.slane %v157, 5
      %v863 = vsel %vm828, %v861, %v862
      %v864 = vrot.slane %v158, 5
      %v865 = vrot.slane %v864, 4
      %v866 = vrot.slane %v159, 5
      %v867 = vsel %vm828, %v865, %v866
      %v868 = vrot.slane %v866, 4
      %v869 = vrot.slane %v160, 5
      %v870 = vsel %vm828, %v868, %v869
      %v871 = vrot.slane %v161, 5
      %v872 = vrot.slane %v871, 4
      %v873 = vrot.slane %v162, 5
      %v874 = vsel %vm828, %v872, %v873
      %v875 = vrot.slane %v873, 4
      %v876 = vrot.slane %v163, 5
      %v877 = vsel %vm828, %v875, %v876
      %v878 = vrot.slane %v164, 5
      %v879 = vrot.slane %v878, 4
      %v880 = vrot.slane %v165, 5
      %v881 = vsel %vm828, %v879, %v880
      %v882 = vrot.slane %v880, 4
      %v883 = vrot.slane %v166, 5
      %v884 = vsel %vm828, %v882, %v883
      %v885 = vrot.slane %v167, 5
      %v886 = vrot.slane %v885, 4
      %v887 = vrot.slane %v168, 5
      %v888 = vsel %vm828, %v886, %v887
      %v889 = vrot.slane %v887, 4
      %v890 = vrot.slane %v169, 5
      %v891 = vsel %vm828, %v889, %v890
      %v892 = vrot.slane %v170, 5
      %v893 = vrot.slane %v892, 4
      %v894 = vrot.slane %v171, 5
      %v895 = vsel %vm828, %v893, %v894
      %v896 = vrot.slane %v894, 4
      %v897 = vrot.slane %v172, 5
      %v898 = vsel %vm828, %v896, %v897
      %v899 = vrot.slane %v173, 5
      %v900 = vrot.slane %v899, 4
      %v901 = vrot.slane %v174, 5
      %v902 = vsel %vm828, %v900, %v901
      %v903 = vrot.slane %v901, 4
      %v904 = vrot.slane %v175, 5
      %v905 = vsel %vm828, %v903, %v904
      %v906 = vrot.slane %v176, 5
      %v907 = vrot.slane %v906, 4
      %v908 = vrot.slane %v177, 5
      %v909 = vsel %vm828, %v907, %v908
      %v910 = vrot.slane %v908, 4
      %v911 = vrot.slane %v178, 5
      %v912 = vsel %vm828, %v910, %v911
      %v913 = vrot.slane %v179, 5
      %v914 = vrot.slane %v913, 4
      %v915 = vrot.slane %v180, 5
      %v916 = vsel %vm828, %v914, %v915
      %v917 = vrot.slane %v915, 4
      %v918 = vrot.slane %v181, 5
      %v919 = vsel %vm828, %v917, %v918
      %v920 = vrot.slane %v182, 5
      %v921 = vrot.slane %v920, 4
      %v922 = vrot.slane %v183, 5
      %v923 = vsel %vm828, %v921, %v922
      %v924 = vrot.slane %v922, 4
      %v925 = vrot.slane %v184, 5
      %v926 = vsel %vm828, %v924, %v925
      %v927 = vrot.slane %v185, 5
      %v928 = vrot.slane %v927, 4
      %v929 = vrot.slane %v186, 5
      %v930 = vsel %vm828, %v928, %v929
      %v931 = vrot.slane %v929, 4
      %v932 = vrot.slane %v187, 5
      %v933 = vsel %vm828, %v931, %v932
      %v934 = vrot.slane %v188, 5
      %v935 = vrot.slane %v934, 4
      %v936 = vrot.slane %v189, 5
      %v937 = vsel %vm828, %v935, %v936
      %v938 = vrot.slane %v936, 4
      %v939 = vrot.slane %v190, 5
      %v940 = vsel %vm828, %v938, %v939
      %v941 = vunpack.c.l.b16 %v832
      %v942 = vunpack.c.l.b16 %v835
      %v943 = vunpack.c.l.b16 %v839
      %v944 = vunpack.c.l.b16 %v842
      %v945 = vunpack.c.l.b16 %v846
      %v946 = vunpack.c.l.b16 %v849
      %v947 = vunpack.c.l.b16 %v853
      %v948 = vunpack.c.l.b16 %v856
      %v949 = vunpack.c.l.b16 %v860
      %v950 = vunpack.c.l.b16 %v863
      %v951 = vunpack.c.l.b16 %v867
      %v952 = vunpack.c.l.b16 %v870
      %v953 = vunpack.c.l.b16 %v874
      %v954 = vunpack.c.l.b16 %v877
      %v955 = vunpack.c.l.b16 %v881
      %v956 = vunpack.c.l.b16 %v884
      %v957 = vunpack.c.l.b16 %v888
      %v958 = vunpack.c.l.b16 %v891
      %v959 = vunpack.c.l.b16 %v895
      %v960 = vunpack.c.l.b16 %v898
      %v961 = vunpack.c.l.b16 %v902
      %v962 = vunpack.c.l.b16 %v905
      %v963 = vunpack.c.l.b16 %v909
      %v964 = vunpack.c.l.b16 %v912
      %v965 = vunpack.c.l.b16 %v916
      %v966 = vunpack.c.l.b16 %v919
      %v967 = vunpack.c.l.b16 %v923
      %v968 = vunpack.c.l.b16 %v926
      %v969 = vunpack.c.l.b16 %v930
      %v970 = vunpack.c.l.b16 %v933
      %v971 = vunpack.c.l.b16 %v937
      %v972 = vunpack.c.l.b16 %v940
      %v973 = vpack.c.b16 %v942, %v941
      %v974 = vpack.c.b16 %v944, %v943
      %v975 = vpack.c.b16 %v946, %v945
      %v976 = vpack.c.b16 %v948, %v947
      %v977 = vpack.c.b16 %v950, %v949
      %v978 = vpack.c.b16 %v952, %v951
      %v979 = vpack.c.b16 %v954, %v953
      %v980 = vpack.c.b16 %v956, %v955
      %v981 = vpack.c.b16 %v958, %v957
      %v982 = vpack.c.b16 %v960, %v959
      %v983 = vpack.c.b16 %v962, %v961
      %v984 = vpack.c.b16 %v964, %v963
      %v985 = vpack.c.b16 %v966, %v965
      %v986 = vpack.c.b16 %v968, %v967
      %v987 = vpack.c.b16 %v970, %v969
      %v988 = vpack.c.b16 %v972, %v971
      %989 = vrot.lane.b32.xlu0 %v973, 8
      %v990 = vpop.permute.xlu0 %989
      %991 = vrot.lane.b32.xlu0 %v974, 8
      %v992 = vpop.permute.xlu0 %991
      %993 = vrot.lane.b32.xlu0 %v975, 8
      %v994 = vpop.permute.xlu0 %993
      %995 = vrot.lane.b32.xlu0 %v976, 8
      %v996 = vpop.permute.xlu0 %995
      %997 = vrot.lane.b32.xlu0 %v977, 8
      %v998 = vpop.permute.xlu0 %997
      %999 = vrot.lane.b32.xlu0 %v978, 8
      %v1000 = vpop.permute.xlu0 %999
      %1001 = vrot.lane.b32.xlu0 %v979, 8
      %v1002 = vpop.permute.xlu0 %1001
      %1003 = vrot.lane.b32.xlu0 %v980, 8
      %v1004 = vpop.permute.xlu0 %1003
      %1005 = vrot.lane.b32.xlu0 %v981, 8
      %v1006 = vpop.permute.xlu0 %1005
      %1007 = vrot.lane.b32.xlu0 %v982, 8
      %v1008 = vpop.permute.xlu0 %1007
      %1009 = vrot.lane.b32.xlu0 %v983, 8
      %v1010 = vpop.permute.xlu0 %1009
      %1011 = vrot.lane.b32.xlu0 %v984, 8
      %v1012 = vpop.permute.xlu0 %1011
      %1013 = vrot.lane.b32.xlu0 %v985, 8
      %v1014 = vpop.permute.xlu0 %1013
      %1015 = vrot.lane.b32.xlu0 %v986, 8
      %v1016 = vpop.permute.xlu0 %1015
      %1017 = vrot.lane.b32.xlu0 %v987, 8
      %v1018 = vpop.permute.xlu0 %1017
      %1019 = vrot.lane.b32.xlu0 %v988, 8
      %v1020 = vpop.permute.xlu0 %1019
      %vm1037 = vcmask 97344
      %1038 = vst.msk [vmem:[#allocation2] sm:$0xff] %vm1037, %v990
      %1039 = vst.msk [vmem:[#allocation2 + $0x8] sm:$0xff] %vm1037, %v992
      %1040 = vst.msk [vmem:[#allocation2 + $0x10] sm:$0xff] %vm1037, %v994
      %1041 = vst.msk [vmem:[#allocation2 + $0x18] sm:$0xff] %vm1037, %v996
      %1042 = vst.msk [vmem:[#allocation2 + $0x20] sm:$0xff] %vm1037, %v998
      %1043 = vst.msk [vmem:[#allocation2 + $0x28] sm:$0xff] %vm1037, %v1000
      %1044 = vst.msk [vmem:[#allocation2 + $0x30] sm:$0xff] %vm1037, %v1002
      %1045 = vst.msk [vmem:[#allocation2 + $0x38] sm:$0xff] %vm1037, %v1004
      %1046 = vst.msk [vmem:[#allocation2 + $0x40] sm:$0xff] %vm1037, %v1006
      %1047 = vst.msk [vmem:[#allocation2 + $0x48] sm:$0xff] %vm1037, %v1008
      %1048 = vst.msk [vmem:[#allocation2 + $0x50] sm:$0xff] %vm1037, %v1010
      %1049 = vst.msk [vmem:[#allocation2 + $0x58] sm:$0xff] %vm1037, %v1012
      %1050 = vst.msk [vmem:[#allocation2 + $0x60] sm:$0xff] %vm1037, %v1014
      %1051 = vst.msk [vmem:[#allocation2 + $0x68] sm:$0xff] %vm1037, %v1016
      %1052 = vst.msk [vmem:[#allocation2 + $0x70] sm:$0xff] %vm1037, %v1018
      %1053 = vst.msk [vmem:[#allocation2 + $0x78] sm:$0xff] %vm1037, %v1020
      %v1056 = vunpack.c.l.b16 %v191
      %v1057 = vunpack.c.l.b16 %v192
      %v1058 = vpack.c.b16 %v1057, %v1056
      %1059 = vrot.lane.b32.xlu0 %v262, 12
      %v1060 = vpop.permute.xlu0 %1059
      %1061 = vrot.lane.b32.xlu0 %v263, 12
      %v1062 = vpop.permute.xlu0 %1061
      %1063 = vrot.lane.b32.xlu0 %v264, 12
      %v1064 = vpop.permute.xlu0 %1063
      %1065 = vrot.lane.b32.xlu0 %v265, 12
      %v1066 = vpop.permute.xlu0 %1065
      %1067 = vrot.lane.b32.xlu0 %v266, 12
      %v1068 = vpop.permute.xlu0 %1067
      %1069 = vrot.lane.b32.xlu0 %v267, 12
      %v1070 = vpop.permute.xlu0 %1069
      %1071 = vrot.lane.b32.xlu0 %v268, 12
      %v1072 = vpop.permute.xlu0 %1071
      %1073 = vrot.lane.b32.xlu0 %v269, 12
      %v1074 = vpop.permute.xlu0 %1073
      %1075 = vrot.lane.b32.xlu0 %v270, 12
      %v1076 = vpop.permute.xlu0 %1075
      %1077 = vrot.lane.b32.xlu0 %v271, 12
      %v1078 = vpop.permute.xlu0 %1077
      %1079 = vrot.lane.b32.xlu0 %v272, 12
      %v1080 = vpop.permute.xlu0 %1079
      %1081 = vrot.lane.b32.xlu0 %v273, 12
      %v1082 = vpop.permute.xlu0 %1081
      %1083 = vrot.lane.b32.xlu0 %v274, 12
      %v1084 = vpop.permute.xlu0 %1083
      %1085 = vrot.lane.b32.xlu0 %v275, 12
      %v1086 = vpop.permute.xlu0 %1085
      %1087 = vrot.lane.b32.xlu0 %v276, 12
      %v1088 = vpop.permute.xlu0 %1087
      %1089 = vrot.lane.b32.xlu0 %v1058, 12
      %v1090 = vpop.permute.xlu0 %1089
      %vm1107 = vcmask 130144
      %1108 = vst.msk [vmem:[#allocation2] sm:$0xff] %vm1107, %v1060
      %1109 = vst.msk [vmem:[#allocation2 + $0x8] sm:$0xff] %vm1107, %v1062
      %1110 = vst.msk [vmem:[#allocation2 + $0x10] sm:$0xff] %vm1107, %v1064
      %1111 = vst.msk [vmem:[#allocation2 + $0x18] sm:$0xff] %vm1107, %v1066
      %1112 = vst.msk [vmem:[#allocation2 + $0x20] sm:$0xff] %vm1107, %v1068
      %1113 = vst.msk [vmem:[#allocation2 + $0x28] sm:$0xff] %vm1107, %v1070
      %1114 = vst.msk [vmem:[#allocation2 + $0x30] sm:$0xff] %vm1107, %v1072
      %1115 = vst.msk [vmem:[#allocation2 + $0x38] sm:$0xff] %vm1107, %v1074
      %1116 = vst.msk [vmem:[#allocation2 + $0x40] sm:$0xff] %vm1107, %v1076
      %1117 = vst.msk [vmem:[#allocation2 + $0x48] sm:$0xff] %vm1107, %v1078
      %1118 = vst.msk [vmem:[#allocation2 + $0x50] sm:$0xff] %vm1107, %v1080
      %1119 = vst.msk [vmem:[#allocation2 + $0x58] sm:$0xff] %vm1107, %v1082
      %1120 = vst.msk [vmem:[#allocation2 + $0x60] sm:$0xff] %vm1107, %v1084
      %1121 = vst.msk [vmem:[#allocation2 + $0x68] sm:$0xff] %vm1107, %v1086
      %1122 = vst.msk [vmem:[#allocation2 + $0x70] sm:$0xff] %vm1107, %v1088
      %1123 = vst.msk [vmem:[#allocation2 + $0x78] sm:$0xff] %vm1107, %v1090
      %v1125 = vshrl.u32 %v191, 16
      %v1127 = vrot.slane %v1125, 4
      %v1128 = vshll.u32 %v191, 16
      %v1130 = vrot.slane %v1128, 5
      %v1131 = vor.u32 %v1127, %v1130
      %v1132 = vrot.slane %v1131, 4
      %v1134 = vshll.u32 %v192, 16
      %v1136 = vrot.slane %v1134, 5
      %v1137 = vsel %vm312, %v1132, %v1136
      %v1138 = vshrl.u32 %v192, 16
      %v1140 = vrot.slane %v1138, 4
      %v1141 = vor.u32 %v1140, %v1136
      %v1142 = vrot.slane %v1141, 4
      %v1144 = vshll.u32 %v193, 16
      %v1146 = vrot.slane %v1144, 5
      %v1147 = vsel %vm312, %v1142, %v1146
      %v1148 = vunpack.c.l.b16 %v1137
      %v1149 = vunpack.c.l.b16 %v1147
      %v1150 = vpack.c.b16 %v1149, %v1148
      %1151 = vrot.lane.b32.xlu0 %v730, 16
      %v1152 = vpop.permute.xlu0 %1151
      %1153 = vrot.lane.b32.xlu0 %v731, 16
      %v1154 = vpop.permute.xlu0 %1153
      %1155 = vrot.lane.b32.xlu0 %v732, 16
      %v1156 = vpop.permute.xlu0 %1155
      %1157 = vrot.lane.b32.xlu0 %v733, 16
      %v1158 = vpop.permute.xlu0 %1157
      %1159 = vrot.lane.b32.xlu0 %v734, 16
      %v1160 = vpop.permute.xlu0 %1159
      %1161 = vrot.lane.b32.xlu0 %v735, 16
      %v1162 = vpop.permute.xlu0 %1161
      %1163 = vrot.lane.b32.xlu0 %v736, 16
      %v1164 = vpop.permute.xlu0 %1163
      %1165 = vrot.lane.b32.xlu0 %v737, 16
      %v1166 = vpop.permute.xlu0 %1165
      %1167 = vrot.lane.b32.xlu0 %v738, 16
      %v1168 = vpop.permute.xlu0 %1167
      %1169 = vrot.lane.b32.xlu0 %v739, 16
      %v1170 = vpop.permute.xlu0 %1169
      %1171 = vrot.lane.b32.xlu0 %v740, 16
      %v1172 = vpop.permute.xlu0 %1171
      %1173 = vrot.lane.b32.xlu0 %v741, 16
      %v1174 = vpop.permute.xlu0 %1173
      %1175 = vrot.lane.b32.xlu0 %v742, 16
      %v1176 = vpop.permute.xlu0 %1175
      %1177 = vrot.lane.b32.xlu0 %v743, 16
      %v1178 = vpop.permute.xlu0 %1177
      %1179 = vrot.lane.b32.xlu0 %v744, 16
      %v1180 = vpop.permute.xlu0 %1179
      %1181 = vrot.lane.b32.xlu0 %v1150, 16
      %v1182 = vpop.permute.xlu0 %1181
      %vm1199 = vcmask 162944
      %1200 = vst.msk [vmem:[#allocation2] sm:$0xff] %vm1199, %v1152
      %1201 = vst.msk [vmem:[#allocation2 + $0x8] sm:$0xff] %vm1199, %v1154
      %1202 = vst.msk [vmem:[#allocation2 + $0x10] sm:$0xff] %vm1199, %v1156
      %1203 = vst.msk [vmem:[#allocation2 + $0x18] sm:$0xff] %vm1199, %v1158
      %1204 = vst.msk [vmem:[#allocation2 + $0x20] sm:$0xff] %vm1199, %v1160
      %1205 = vst.msk [vmem:[#allocation2 + $0x28] sm:$0xff] %vm1199, %v1162
      %1206 = vst.msk [vmem:[#allocation2 + $0x30] sm:$0xff] %vm1199, %v1164
      %1207 = vst.msk [vmem:[#allocation2 + $0x38] sm:$0xff] %vm1199, %v1166
      %1208 = vst.msk [vmem:[#allocation2 + $0x40] sm:$0xff] %vm1199, %v1168
      %1209 = vst.msk [vmem:[#allocation2 + $0x48] sm:$0xff] %vm1199, %v1170
      %1210 = vst.msk [vmem:[#allocation2 + $0x50] sm:$0xff] %vm1199, %v1172
      %1211 = vst.msk [vmem:[#allocation2 + $0x58] sm:$0xff] %vm1199, %v1174
      %1212 = vst.msk [vmem:[#allocation2 + $0x60] sm:$0xff] %vm1199, %v1176
      %1213 = vst.msk [vmem:[#allocation2 + $0x68] sm:$0xff] %vm1199, %v1178
      %1214 = vst.msk [vmem:[#allocation2 + $0x70] sm:$0xff] %vm1199, %v1180
      %1215 = vst.msk [vmem:[#allocation2 + $0x78] sm:$0xff] %vm1199, %v1182
      %v1217 = vrot.slane %v191, 5
      %v1218 = vrot.slane %v1217, 4
      %v1219 = vrot.slane %v192, 5
      %v1220 = vsel %vm828, %v1218, %v1219
      %v1221 = vrot.slane %v1219, 4
      %v1222 = vrot.slane %v193, 5
      %v1223 = vsel %vm828, %v1221, %v1222
      %v1224 = vunpack.c.l.b16 %v1220
      %v1225 = vunpack.c.l.b16 %v1223
      %v1226 = vpack.c.b16 %v1225, %v1224
      %1227 = vrot.lane.b32.xlu0 %v974, 20
      %v1228 = vpop.permute.xlu0 %1227
      %1229 = vrot.lane.b32.xlu0 %v975, 20
      %v1230 = vpop.permute.xlu0 %1229
      %1231 = vrot.lane.b32.xlu0 %v976, 20
      %v1232 = vpop.permute.xlu0 %1231
      %1233 = vrot.lane.b32.xlu0 %v977, 20
      %v1234 = vpop.permute.xlu0 %1233
      %1235 = vrot.lane.b32.xlu0 %v978, 20
      %v1236 = vpop.permute.xlu0 %1235
      %1237 = vrot.lane.b32.xlu0 %v979, 20
      %v1238 = vpop.permute.xlu0 %1237
      %1239 = vrot.lane.b32.xlu0 %v980, 20
      %v1240 = vpop.permute.xlu0 %1239
      %1241 = vrot.lane.b32.xlu0 %v981, 20
      %v1242 = vpop.permute.xlu0 %1241
      %1243 = vrot.lane.b32.xlu0 %v982, 20
      %v1244 = vpop.permute.xlu0 %1243
      %1245 = vrot.lane.b32.xlu0 %v983, 20
      %v1246 = vpop.permute.xlu0 %1245
      %1247 = vrot.lane.b32.xlu0 %v984, 20
      %v1248 = vpop.permute.xlu0 %1247
      %1249 = vrot.lane.b32.xlu0 %v985, 20
      %v1250 = vpop.permute.xlu0 %1249
      %1251 = vrot.lane.b32.xlu0 %v986, 20
      %v1252 = vpop.permute.xlu0 %1251
      %1253 = vrot.lane.b32.xlu0 %v987, 20
      %v1254 = vpop.permute.xlu0 %1253
      %1255 = vrot.lane.b32.xlu0 %v988, 20
      %v1256 = vpop.permute.xlu0 %1255
      %1257 = vrot.lane.b32.xlu0 %v1226, 20
      %v1258 = vpop.permute.xlu0 %1257
      %vm1275 = vcmask 195744
      %1276 = vst.msk [vmem:[#allocation2] sm:$0xff] %vm1275, %v1228
      %1277 = vst.msk [vmem:[#allocation2 + $0x8] sm:$0xff] %vm1275, %v1230
      %1278 = vst.msk [vmem:[#allocation2 + $0x10] sm:$0xff] %vm1275, %v1232
      %1279 = vst.msk [vmem:[#allocation2 + $0x18] sm:$0xff] %vm1275, %v1234
      %1280 = vst.msk [vmem:[#allocation2 + $0x20] sm:$0xff] %vm1275, %v1236
      %1281 = vst.msk [vmem:[#allocation2 + $0x28] sm:$0xff] %vm1275, %v1238
      %1282 = vst.msk [vmem:[#allocation2 + $0x30] sm:$0xff] %vm1275, %v1240
      %1283 = vst.msk [vmem:[#allocation2 + $0x38] sm:$0xff] %vm1275, %v1242
      %1284 = vst.msk [vmem:[#allocation2 + $0x40] sm:$0xff] %vm1275, %v1244
      %1285 = vst.msk [vmem:[#allocation2 + $0x48] sm:$0xff] %vm1275, %v1246
      %1286 = vst.msk [vmem:[#allocation2 + $0x50] sm:$0xff] %vm1275, %v1248
      %1287 = vst.msk [vmem:[#allocation2 + $0x58] sm:$0xff] %vm1275, %v1250
      %1288 = vst.msk [vmem:[#allocation2 + $0x60] sm:$0xff] %vm1275, %v1252
      %1289 = vst.msk [vmem:[#allocation2 + $0x68] sm:$0xff] %vm1275, %v1254
      %1290 = vst.msk [vmem:[#allocation2 + $0x70] sm:$0xff] %vm1275, %v1256
      %1291 = vst.msk [vmem:[#allocation2 + $0x78] sm:$0xff] %vm1275, %v1258
      %v1294 = vunpack.c.l.b16 %v194
      %v1295 = vunpack.c.l.b16 %v195
      %v1296 = vpack.c.b16 %v1295, %v1294
      %1297 = vrot.lane.b32.xlu0 %v263, 24
      %v1298 = vpop.permute.xlu0 %1297
      %1299 = vrot.lane.b32.xlu0 %v264, 24
      %v1300 = vpop.permute.xlu0 %1299
      %1301 = vrot.lane.b32.xlu0 %v265, 24
      %v1302 = vpop.permute.xlu0 %1301
      %1303 = vrot.lane.b32.xlu0 %v266, 24
      %v1304 = vpop.permute.xlu0 %1303
      %1305 = vrot.lane.b32.xlu0 %v267, 24
      %v1306 = vpop.permute.xlu0 %1305
      %1307 = vrot.lane.b32.xlu0 %v268, 24
      %v1308 = vpop.permute.xlu0 %1307
      %1309 = vrot.lane.b32.xlu0 %v269, 24
      %v1310 = vpop.permute.xlu0 %1309
      %1311 = vrot.lane.b32.xlu0 %v270, 24
      %v1312 = vpop.permute.xlu0 %1311
      %1313 = vrot.lane.b32.xlu0 %v271, 24
      %v1314 = vpop.permute.xlu0 %1313
      %1315 = vrot.lane.b32.xlu0 %v272, 24
      %v1316 = vpop.permute.xlu0 %1315
      %1317 = vrot.lane.b32.xlu0 %v273, 24
      %v1318 = vpop.permute.xlu0 %1317
      %1319 = vrot.lane.b32.xlu0 %v274, 24
      %v1320 = vpop.permute.xlu0 %1319
      %1321 = vrot.lane.b32.xlu0 %v275, 24
      %v1322 = vpop.permute.xlu0 %1321
      %1323 = vrot.lane.b32.xlu0 %v276, 24
      %v1324 = vpop.permute.xlu0 %1323
      %1325 = vrot.lane.b32.xlu0 %v1058, 24
      %v1326 = vpop.permute.xlu0 %1325
      %1327 = vrot.lane.b32.xlu0 %v1296, 24
      %v1328 = vpop.permute.xlu0 %1327
      %vm1345 = vcmask 228544
      %1346 = vst.msk [vmem:[#allocation2] sm:$0xff] %vm1345, %v1298
      %1347 = vst.msk [vmem:[#allocation2 + $0x8] sm:$0xff] %vm1345, %v1300
      %1348 = vst.msk [vmem:[#allocation2 + $0x10] sm:$0xff] %vm1345, %v1302
      %1349 = vst.msk [vmem:[#allocation2 + $0x18] sm:$0xff] %vm1345, %v1304
      %1350 = vst.msk [vmem:[#allocation2 + $0x20] sm:$0xff] %vm1345, %v1306
      %1351 = vst.msk [vmem:[#allocation2 + $0x28] sm:$0xff] %vm1345, %v1308
      %1352 = vst.msk [vmem:[#allocation2 + $0x30] sm:$0xff] %vm1345, %v1310
      %1353 = vst.msk [vmem:[#allocation2 + $0x38] sm:$0xff] %vm1345, %v1312
      %1354 = vst.msk [vmem:[#allocation2 + $0x40] sm:$0xff] %vm1345, %v1314
      %1355 = vst.msk [vmem:[#allocation2 + $0x48] sm:$0xff] %vm1345, %v1316
      %1356 = vst.msk [vmem:[#allocation2 + $0x50] sm:$0xff] %vm1345, %v1318
      %1357 = vst.msk [vmem:[#allocation2 + $0x58] sm:$0xff] %vm1345, %v1320
      %1358 = vst.msk [vmem:[#allocation2 + $0x60] sm:$0xff] %vm1345, %v1322
      %1359 = vst.msk [vmem:[#allocation2 + $0x68] sm:$0xff] %vm1345, %v1324
      %1360 = vst.msk [vmem:[#allocation2 + $0x70] sm:$0xff] %vm1345, %v1326
      %1361 = vst.msk [vmem:[#allocation2 + $0x78] sm:$0xff] %vm1345, %v1328
      %v1363 = vshrl.u32 %v194, 16
      %v1365 = vrot.slane %v1363, 4
      %v1366 = vshll.u32 %v194, 16
      %v1368 = vrot.slane %v1366, 5
      %v1369 = vor.u32 %v1365, %v1368
      %v1370 = vrot.slane %v1369, 4
      %v1372 = vshll.u32 %v195, 16
      %v1374 = vrot.slane %v1372, 5
      %v1375 = vsel %vm312, %v1370, %v1374
      %v1376 = vshrl.u32 %v195, 16
      %v1378 = vrot.slane %v1376, 4
      %v1379 = vor.u32 %v1378, %v1374
      %v1380 = vrot.slane %v1379, 4
      %v1382 = vshll.u32 %v196, 16
      %v1384 = vrot.slane %v1382, 5
      %v1385 = vsel %vm312, %v1380, %v1384
      %v1386 = vunpack.c.l.b16 %v1375
      %v1387 = vunpack.c.l.b16 %v1385
      %v1388 = vpack.c.b16 %v1387, %v1386
      %1389 = vrot.lane.b32.xlu0 %v731, 28
      %v1390 = vpop.permute.xlu0 %1389
      %1391 = vrot.lane.b32.xlu0 %v732, 28
      %v1392 = vpop.permute.xlu0 %1391
      %1393 = vrot.lane.b32.xlu0 %v733, 28
      %v1394 = vpop.permute.xlu0 %1393
      %1395 = vrot.lane.b32.xlu0 %v734, 28
      %v1396 = vpop.permute.xlu0 %1395
      %1397 = vrot.lane.b32.xlu0 %v735, 28
      %v1398 = vpop.permute.xlu0 %1397
      %1399 = vrot.lane.b32.xlu0 %v736, 28
      %v1400 = vpop.permute.xlu0 %1399
      %1401 = vrot.lane.b32.xlu0 %v737, 28
      %v1402 = vpop.permute.xlu0 %1401
      %1403 = vrot.lane.b32.xlu0 %v738, 28
      %v1404 = vpop.permute.xlu0 %1403
      %1405 = vrot.lane.b32.xlu0 %v739, 28
      %v1406 = vpop.permute.xlu0 %1405
      %1407 = vrot.lane.b32.xlu0 %v740, 28
      %v1408 = vpop.permute.xlu0 %1407
      %1409 = vrot.lane.b32.xlu0 %v741, 28
      %v1410 = vpop.permute.xlu0 %1409
      %1411 = vrot.lane.b32.xlu0 %v742, 28
      %v1412 = vpop.permute.xlu0 %1411
      %1413 = vrot.lane.b32.xlu0 %v743, 28
      %v1414 = vpop.permute.xlu0 %1413
      %1415 = vrot.lane.b32.xlu0 %v744, 28
      %v1416 = vpop.permute.xlu0 %1415
      %1417 = vrot.lane.b32.xlu0 %v1150, 28
      %v1418 = vpop.permute.xlu0 %1417
      %1419 = vrot.lane.b32.xlu0 %v1388, 28
      %v1420 = vpop.permute.xlu0 %1419
      %vm1437 = vcmask 261344
      %1438 = vst.msk [vmem:[#allocation2] sm:$0xff] %vm1437, %v1390
      %1439 = vst.msk [vmem:[#allocation2 + $0x8] sm:$0xff] %vm1437, %v1392
      %1440 = vst.msk [vmem:[#allocation2 + $0x10] sm:$0xff] %vm1437, %v1394
      %1441 = vst.msk [vmem:[#allocation2 + $0x18] sm:$0xff] %vm1437, %v1396
      %1442 = vst.msk [vmem:[#allocation2 + $0x20] sm:$0xff] %vm1437, %v1398
      %1443 = vst.msk [vmem:[#allocation2 + $0x28] sm:$0xff] %vm1437, %v1400
      %1444 = vst.msk [vmem:[#allocation2 + $0x30] sm:$0xff] %vm1437, %v1402
      %1445 = vst.msk [vmem:[#allocation2 + $0x38] sm:$0xff] %vm1437, %v1404
      %1446 = vst.msk [vmem:[#allocation2 + $0x40] sm:$0xff] %vm1437, %v1406
      %1447 = vst.msk [vmem:[#allocation2 + $0x48] sm:$0xff] %vm1437, %v1408
      %1448 = vst.msk [vmem:[#allocation2 + $0x50] sm:$0xff] %vm1437, %v1410
      %1449 = vst.msk [vmem:[#allocation2 + $0x58] sm:$0xff] %vm1437, %v1412
      %1450 = vst.msk [vmem:[#allocation2 + $0x60] sm:$0xff] %vm1437, %v1414
      %1451 = vst.msk [vmem:[#allocation2 + $0x68] sm:$0xff] %vm1437, %v1416
      %1452 = vst.msk [vmem:[#allocation2 + $0x70] sm:$0xff] %vm1437, %v1418
      %1453 = vst.msk [vmem:[#allocation2 + $0x78] sm:$0xff] %vm1437, %v1420
      %v1455 = vrot.slane %v194, 5
      %v1456 = vrot.slane %v1455, 4
      %v1457 = vrot.slane %v195, 5
      %v1458 = vsel %vm828, %v1456, %v1457
      %v1459 = vrot.slane %v1457, 4
      %v1460 = vrot.slane %v196, 5
      %v1461 = vsel %vm828, %v1459, %v1460
      %v1462 = vunpack.c.l.b16 %v1458
      %v1463 = vunpack.c.l.b16 %v1461
      %v1464 = vpack.c.b16 %v1463, %v1462
      %1465 = vrot.lane.b32.xlu0 %v975, 32
      %v1466 = vpop.permute.xlu0 %1465
      %1467 = vrot.lane.b32.xlu0 %v976, 32
      %v1468 = vpop.permute.xlu0 %1467
      %1469 = vrot.lane.b32.xlu0 %v977, 32
      %v1470 = vpop.permute.xlu0 %1469
      %1471 = vrot.lane.b32.xlu0 %v978, 32
      %v1472 = vpop.permute.xlu0 %1471
      %1473 = vrot.lane.b32.xlu0 %v979, 32
      %v1474 = vpop.permute.xlu0 %1473
      %1475 = vrot.lane.b32.xlu0 %v980, 32
      %v1476 = vpop.permute.xlu0 %1475
      %1477 = vrot.lane.b32.xlu0 %v981, 32
      %v1478 = vpop.permute.xlu0 %1477
      %1479 = vrot.lane.b32.xlu0 %v982, 32
      %v1480 = vpop.permute.xlu0 %1479
      %1481 = vrot.lane.b32.xlu0 %v983, 32
      %v1482 = vpop.permute.xlu0 %1481
      %1483 = vrot.lane.b32.xlu0 %v984, 32
      %v1484 = vpop.permute.xlu0 %1483
      %1485 = vrot.lane.b32.xlu0 %v985, 32
      %v1486 = vpop.permute.xlu0 %1485
      %1487 = vrot.lane.b32.xlu0 %v986, 32
      %v1488 = vpop.permute.xlu0 %1487
      %1489 = vrot.lane.b32.xlu0 %v987, 32
      %v1490 = vpop.permute.xlu0 %1489
      %1491 = vrot.lane.b32.xlu0 %v988, 32
      %v1492 = vpop.permute.xlu0 %1491
      %1493 = vrot.lane.b32.xlu0 %v1226, 32
      %v1494 = vpop.permute.xlu0 %1493
      %1495 = vrot.lane.b32.xlu0 %v1464, 32
      %v1496 = vpop.permute.xlu0 %1495
      %vm1513 = vcmask 294144
      %1514 = vst.msk [vmem:[#allocation2] sm:$0xff] %vm1513, %v1466
      %1515 = vst.msk [vmem:[#allocation2 + $0x8] sm:$0xff] %vm1513, %v1468
      %1516 = vst.msk [vmem:[#allocation2 + $0x10] sm:$0xff] %vm1513, %v1470
      %1517 = vst.msk [vmem:[#allocation2 + $0x18] sm:$0xff] %vm1513, %v1472
      %1518 = vst.msk [vmem:[#allocation2 + $0x20] sm:$0xff] %vm1513, %v1474
      %1519 = vst.msk [vmem:[#allocation2 + $0x28] sm:$0xff] %vm1513, %v1476
      %1520 = vst.msk [vmem:[#allocation2 + $0x30] sm:$0xff] %vm1513, %v1478
      %1521 = vst.msk [vmem:[#allocation2 + $0x38] sm:$0xff] %vm1513, %v1480
      %1522 = vst.msk [vmem:[#allocation2 + $0x40] sm:$0xff] %vm1513, %v1482
      %1523 = vst.msk [vmem:[#allocation2 + $0x48] sm:$0xff] %vm1513, %v1484
      %1524 = vst.msk [vmem:[#allocation2 + $0x50] sm:$0xff] %vm1513, %v1486
      %1525 = vst.msk [vmem:[#allocation2 + $0x58] sm:$0xff] %vm1513, %v1488
      %1526 = vst.msk [vmem:[#allocation2 + $0x60] sm:$0xff] %vm1513, %v1490
      %1527 = vst.msk [vmem:[#allocation2 + $0x68] sm:$0xff] %vm1513, %v1492
      %1528 = vst.msk [vmem:[#allocation2 + $0x70] sm:$0xff] %vm1513, %v1494
      %1529 = vst.msk [vmem:[#allocation2 + $0x78] sm:$0xff] %vm1513, %v1496
      %v1530 = vld [vmem:[#allocation2] sm:$0xff]
      %v1531 = vld [vmem:[#allocation2 + $0x8] sm:$0xff]
      %v1532 = vld [vmem:[#allocation2 + $0x10] sm:$0xff]
      %v1533 = vld [vmem:[#allocation2 + $0x18] sm:$0xff]
      %v1534 = vld [vmem:[#allocation2 + $0x20] sm:$0xff]
      %v1535 = vld [vmem:[#allocation2 + $0x28] sm:$0xff]
      %v1536 = vld [vmem:[#allocation2 + $0x30] sm:$0xff]
      %v1537 = vld [vmem:[#allocation2 + $0x38] sm:$0xff]
      %v1538 = vld [vmem:[#allocation2 + $0x40] sm:$0xff]
      %v1539 = vld [vmem:[#allocation2 + $0x48] sm:$0xff]
      %v1540 = vld [vmem:[#allocation2 + $0x50] sm:$0xff]
      %v1541 = vld [vmem:[#allocation2 + $0x58] sm:$0xff]
      %v1542 = vld [vmem:[#allocation2 + $0x60] sm:$0xff]
      %v1543 = vld [vmem:[#allocation2 + $0x68] sm:$0xff]
      %v1544 = vld [vmem:[#allocation2 + $0x70] sm:$0xff]
      %v1545 = vld [vmem:[#allocation2 + $0x78] sm:$0xff]
      %v1546 = vld [vmem:[%s1] sm:$0xf]
      %v1547 = vld [vmem:[%s1 + $0x4] sm:$0xf]
      %v1548 = vld [vmem:[%s1 + $0x8] sm:$0xf]
      %v1549 = vld [vmem:[%s1 + $0xc] sm:$0xf]
      %v1550 = vld [vmem:[%s1 + $0x10] sm:$0x3]
      %v1556 = vunpack.c.l.b16 %v1546
      %v1557 = vunpack.c.l.b16 %v1547
      %v1558 = vunpack.c.l.b16 %v1548
      %v1559 = vunpack.c.l.b16 %v1549
      %v1560 = vunpack.c.l.b16 %v1550
      %v1561 = vpack.c.b16 %v1557, %v1556
      %v1562 = vpack.c.b16 %v1559, %v1558
      %v1563 = vpack.c.b16 %v1560, %v1560
      %vm1566 = vcmask 293888
      %v1568 = vsel %vm1566, %v1530, 0
      %v1571 = vsel %vm1566, %v1531, 0
      %v1574 = vsel %vm1566, %v1532, 0
      %v1577 = vsel %vm1566, %v1533, 0
      %v1580 = vsel %vm1566, %v1534, 0
      %v1583 = vsel %vm1566, %v1535, 0
      %v1586 = vsel %vm1566, %v1536, 0
      %v1589 = vsel %vm1566, %v1537, 0
      %v1592 = vsel %vm1566, %v1538, 0
      %v1595 = vsel %vm1566, %v1539, 0
      %v1598 = vsel %vm1566, %v1540, 0
      %v1601 = vsel %vm1566, %v1541, 0
      %v1604 = vsel %vm1566, %v1542, 0
      %v1607 = vsel %vm1566, %v1543, 0
      %v1610 = vsel %vm1566, %v1544, 0
      %v1613 = vsel %vm1566, %v1545, 0
      %vm1615 = vcmask 1041408
      %v1617 = vsel %vm1615, %v1563, 0
      %1619 = vmatprep.subr.bf16.mxu0 0
      %1620 = vmatpush1.bf16.msra.mxu0 %v1561
      %1621 = vmatprep.subr.bf16.mxu0 0
      %1622 = vmatpush1.bf16.msra.mxu0 %v1562
      %1623 = vmatprep.subr.bf16.mxu0 0
      %1624 = vmatpush1.bf16.msra.mxu0 %v1617
      %1625 = vmatprep.subr.bf16.mxu0 0
      %1626 = vmatpush1.bf16.msra.mxu0 0
      %1627 = vmatprep.subr.bf16.mxu0 0
      %1628 = vmatpush1.bf16.msra.mxu0 0
      %1629 = vmatprep.subr.bf16.mxu0 0
      %1630 = vmatpush1.bf16.msra.mxu0 0
      %1631 = vmatprep.subr.bf16.mxu0 0
      %1632 = vmatpush1.bf16.msra.mxu0 0
      %1633 = vmatprep.subr.bf16.mxu0 0
      %1634 = vmatpush1.bf16.msra.mxu0 0
      %1635 = vmatprep.subr.bf16.mxu0 0
      %1636 = vmatpush1.bf16.msra.mxu0 0
      %1637 = vmatprep.subr.bf16.mxu0 0
      %1638 = vmatpush1.bf16.msra.mxu0 0
      %1639 = vmatprep.subr.bf16.mxu0 0
      %1640 = vmatpush1.bf16.msra.mxu0 0
      %1641 = vmatprep.subr.bf16.mxu0 0
      %1642 = vmatpush1.bf16.msra.mxu0 0
      %1643 = vmatprep.subr.bf16.mxu0 0
      %1644 = vmatpush1.bf16.msra.mxu0 0
      %1645 = vmatprep.subr.bf16.mxu0 0
      %1646 = vmatpush1.bf16.msra.mxu0 0
      %1647 = vmatprep.subr.bf16.mxu0 0
      %1648 = vmatpush1.bf16.msra.mxu0 0
      %1649 = vmatprep.subr.bf16.mxu0 0
      %1650 = vmatpush1.bf16.msra.mxu0 0
      %1651 = vmatprep.mubr.bf16.mxu0 0
      %1652 = vmatmul.mubr.bf16.gmra.mrb[0].mxu0 %v1568
      %v1653 = vpop.f32.mrb[0].mxu0
      %v1654 = vadd.f32 0.0, %v1653
      %v1655 = vpop.f32.mrb[0].mxu0
      %v1656 = vpop.f32.mrb[0].mxu0
      %v1657 = vadd.f32 0.0, %v1656
      %v1658 = vpop.f32.mrb[0].mxu0
      %1659 = vmatprep.mubr.bf16.mxu0 0
      %1660 = vmatmul.mubr.bf16.gmra.mrb[0].mxu0 %v1571
      %v1661 = vpop.f32.mrb[0].mxu0
      %v1662 = vadd.f32 0.0, %v1661
      %v1663 = vpop.f32.mrb[0].mxu0
      %v1664 = vpop.f32.mrb[0].mxu0
      %v1665 = vadd.f32 0.0, %v1664
      %v1666 = vpop.f32.mrb[0].mxu0
      %1667 = vmatprep.mubr.bf16.mxu0 0
      %1668 = vmatmul.mubr.bf16.gmra.mrb[0].mxu0 %v1574
      %v1669 = vpop.f32.mrb[0].mxu0
      %v1670 = vadd.f32 0.0, %v1669
      %v1671 = vpop.f32.mrb[0].mxu0
      %v1672 = vpop.f32.mrb[0].mxu0
      %v1673 = vadd.f32 0.0, %v1672
      %v1674 = vpop.f32.mrb[0].mxu0
      %1675 = vmatprep.mubr.bf16.mxu0 0
      %1676 = vmatmul.mubr.bf16.gmra.mrb[0].mxu0 %v1577
      %v1677 = vpop.f32.mrb[0].mxu0
      %v1678 = vadd.f32 0.0, %v1677
      %v1679 = vpop.f32.mrb[0].mxu0
      %v1680 = vpop.f32.mrb[0].mxu0
      %v1681 = vadd.f32 0.0, %v1680
      %v1682 = vpop.f32.mrb[0].mxu0
      %1683 = vmatprep.mubr.bf16.mxu0 0
      %1684 = vmatmul.mubr.bf16.gmra.mrb[0].mxu0 %v1580
      %v1685 = vpop.f32.mrb[0].mxu0
      %v1686 = vadd.f32 0.0, %v1685
      %v1687 = vpop.f32.mrb[0].mxu0
      %v1688 = vpop.f32.mrb[0].mxu0
      %v1689 = vadd.f32 0.0, %v1688
      %v1690 = vpop.f32.mrb[0].mxu0
      %1691 = vmatprep.mubr.bf16.mxu0 0
      %1692 = vmatmul.mubr.bf16.gmra.mrb[0].mxu0 %v1583
      %v1693 = vpop.f32.mrb[0].mxu0
      %v1694 = vadd.f32 0.0, %v1693
      %v1695 = vpop.f32.mrb[0].mxu0
      %v1696 = vpop.f32.mrb[0].mxu0
      %v1697 = vadd.f32 0.0, %v1696
      %v1698 = vpop.f32.mrb[0].mxu0
      %1699 = vmatprep.mubr.bf16.mxu0 0
      %1700 = vmatmul.mubr.bf16.gmra.mrb[0].mxu0 %v1586
      %v1701 = vpop.f32.mrb[0].mxu0
      %v1702 = vadd.f32 0.0, %v1701
      %v1703 = vpop.f32.mrb[0].mxu0
      %v1704 = vpop.f32.mrb[0].mxu0
      %v1705 = vadd.f32 0.0, %v1704
      %v1706 = vpop.f32.mrb[0].mxu0
      %1707 = vmatprep.mubr.bf16.mxu0 0
      %1708 = vmatmul.mubr.bf16.gmra.mrb[0].mxu0 %v1589
      %v1709 = vpop.f32.mrb[0].mxu0
      %v1710 = vadd.f32 0.0, %v1709
      %v1711 = vpop.f32.mrb[0].mxu0
      %v1712 = vpop.f32.mrb[0].mxu0
      %v1713 = vadd.f32 0.0, %v1712
      %v1714 = vpop.f32.mrb[0].mxu0
      %1715 = vmatprep.mubr.bf16.mxu0 0
      %1716 = vmatmul.mubr.bf16.gmra.mrb[0].mxu0 %v1592
      %v1717 = vpop.f32.mrb[0].mxu0
      %v1718 = vadd.f32 0.0, %v1717
      %v1719 = vpop.f32.mrb[0].mxu0
      %v1720 = vpop.f32.mrb[0].mxu0
      %v1721 = vadd.f32 0.0, %v1720
      %v1722 = vpop.f32.mrb[0].mxu0
      %1723 = vmatprep.mubr.bf16.mxu0 0
      %1724 = vmatmul.mubr.bf16.gmra.mrb[0].mxu0 %v1595
      %v1725 = vpop.f32.mrb[0].mxu0
      %v1726 = vadd.f32 0.0, %v1725
      %v1727 = vpop.f32.mrb[0].mxu0
      %v1728 = vpop.f32.mrb[0].mxu0
      %v1729 = vadd.f32 0.0, %v1728
      %v1730 = vpop.f32.mrb[0].mxu0
      %1731 = vmatprep.mubr.bf16.mxu0 0
      %1732 = vmatmul.mubr.bf16.gmra.mrb[0].mxu0 %v1598
      %v1733 = vpop.f32.mrb[0].mxu0
      %v1734 = vadd.f32 0.0, %v1733
      %v1735 = vpop.f32.mrb[0].mxu0
      %v1736 = vpop.f32.mrb[0].mxu0
      %v1737 = vadd.f32 0.0, %v1736
      %v1738 = vpop.f32.mrb[0].mxu0
      %1739 = vmatprep.mubr.bf16.mxu0 0
      %1740 = vmatmul.mubr.bf16.gmra.mrb[0].mxu0 %v1601
      %v1741 = vpop.f32.mrb[0].mxu0
      %v1742 = vadd.f32 0.0, %v1741
      %v1743 = vpop.f32.mrb[0].mxu0
      %v1744 = vpop.f32.mrb[0].mxu0
      %v1745 = vadd.f32 0.0, %v1744
      %v1746 = vpop.f32.mrb[0].mxu0
      %1747 = vmatprep.mubr.bf16.mxu0 0
      %1748 = vmatmul.mubr.bf16.gmra.mrb[0].mxu0 %v1604
      %v1749 = vpop.f32.mrb[0].mxu0
      %v1750 = vadd.f32 0.0, %v1749
      %v1751 = vpop.f32.mrb[0].mxu0
      %v1752 = vpop.f32.mrb[0].mxu0
      %v1753 = vadd.f32 0.0, %v1752
      %v1754 = vpop.f32.mrb[0].mxu0
      %1755 = vmatprep.mubr.bf16.mxu0 0
      %1756 = vmatmul.mubr.bf16.gmra.mrb[0].mxu0 %v1607
      %v1757 = vpop.f32.mrb[0].mxu0
      %v1758 = vadd.f32 0.0, %v1757
      %v1759 = vpop.f32.mrb[0].mxu0
      %v1760 = vpop.f32.mrb[0].mxu0
      %v1761 = vadd.f32 0.0, %v1760
      %v1762 = vpop.f32.mrb[0].mxu0
      %1763 = vmatprep.mubr.bf16.mxu0 0
      %1764 = vmatmul.mubr.bf16.gmra.mrb[0].mxu0 %v1610
      %v1765 = vpop.f32.mrb[0].mxu0
      %v1766 = vadd.f32 0.0, %v1765
      %v1767 = vpop.f32.mrb[0].mxu0
      %v1768 = vpop.f32.mrb[0].mxu0
      %v1769 = vadd.f32 0.0, %v1768
      %v1770 = vpop.f32.mrb[0].mxu0
      %1771 = vmatprep.mubr.bf16.mxu0 0
      %1772 = vmatmul.mubr.bf16.gmra.mrb[0].mxu0 %v1613
      %v1773 = vpop.f32.mrb[0].mxu0
      %v1774 = vadd.f32 0.0, %v1773
      %v1775 = vpop.f32.mrb[0].mxu0
      %v1776 = vpop.f32.mrb[0].mxu0
      %v1777 = vadd.f32 0.0, %v1776
      %v1778 = vpop.f32.mrb[0].mxu0
      %1779 = vdwg.mxu0
      %v1780 = vadd.f32 %v1654, %v1657
      %v1781 = vadd.f32 %v1780, %v1662
      %v1782 = vadd.f32 %v1781, %v1665
      %v1783 = vadd.f32 %v1782, %v1670
      %v1784 = vadd.f32 %v1783, %v1673
      %v1785 = vadd.f32 %v1784, %v1678
      %v1786 = vadd.f32 %v1785, %v1681
      %v1787 = vadd.f32 %v1786, %v1686
      %v1788 = vadd.f32 %v1787, %v1689
      %v1789 = vadd.f32 %v1788, %v1694
      %v1790 = vadd.f32 %v1789, %v1697
      %v1791 = vadd.f32 %v1790, %v1702
      %v1792 = vadd.f32 %v1791, %v1705
      %v1793 = vadd.f32 %v1792, %v1710
      %v1794 = vadd.f32 %v1793, %v1713
      %v1795 = vadd.f32 %v1794, %v1718
      %v1796 = vadd.f32 %v1795, %v1721
      %v1797 = vadd.f32 %v1796, %v1726
      %v1798 = vadd.f32 %v1797, %v1729
      %v1799 = vadd.f32 %v1798, %v1734
      %v1800 = vadd.f32 %v1799, %v1737
      %v1801 = vadd.f32 %v1800, %v1742
      %v1802 = vadd.f32 %v1801, %v1745
      %v1803 = vadd.f32 %v1802, %v1750
      %v1804 = vadd.f32 %v1803, %v1753
      %v1805 = vadd.f32 %v1804, %v1758
      %v1806 = vadd.f32 %v1805, %v1761
      %v1807 = vadd.f32 %v1806, %v1766
      %v1808 = vadd.f32 %v1807, %v1769
      %v1809 = vadd.f32 %v1808, %v1774
      %v1810 = vadd.f32 %v1809, %v1777
      %v1811 = vrot.slane %v1810, 4
      %v1812 = vadd.f32 %v1810, %v1811
      %v1813 = vrot.slane %v1812, 2
      %v1814 = vadd.f32 %v1812, %v1813
      %v1815 = vrot.slane %v1814, 1
      %v1816 = vadd.f32 %v1814, %v1815
      %v1817 = vmul.f32 %v1816, 0.00390625
      %v1818 = vsub.f32 %v1654, %v1817
      %v1819 = vsub.f32 %v1657, %v1817
      %v1820 = vsub.f32 %v1662, %v1817
      %v1821 = vsub.f32 %v1665, %v1817
      %v1822 = vsub.f32 %v1670, %v1817
      %v1823 = vsub.f32 %v1673, %v1817
      %v1824 = vsub.f32 %v1678, %v1817
      %v1825 = vsub.f32 %v1681, %v1817
      %v1826 = vsub.f32 %v1686, %v1817
      %v1827 = vsub.f32 %v1689, %v1817
      %v1828 = vsub.f32 %v1694, %v1817
      %v1829 = vsub.f32 %v1697, %v1817
      %v1830 = vsub.f32 %v1702, %v1817
      %v1831 = vsub.f32 %v1705, %v1817
      %v1832 = vsub.f32 %v1710, %v1817
      %v1833 = vsub.f32 %v1713, %v1817
      %v1834 = vsub.f32 %v1718, %v1817
      %v1835 = vsub.f32 %v1721, %v1817
      %v1836 = vsub.f32 %v1726, %v1817
      %v1837 = vsub.f32 %v1729, %v1817
      %v1838 = vsub.f32 %v1734, %v1817
      %v1839 = vsub.f32 %v1737, %v1817
      %v1840 = vsub.f32 %v1742, %v1817
      %v1841 = vsub.f32 %v1745, %v1817
      %v1842 = vsub.f32 %v1750, %v1817
      %v1843 = vsub.f32 %v1753, %v1817
      %v1844 = vsub.f32 %v1758, %v1817
      %v1845 = vsub.f32 %v1761, %v1817
      %v1846 = vsub.f32 %v1766, %v1817
      %v1847 = vsub.f32 %v1769, %v1817
      %v1848 = vsub.f32 %v1774, %v1817
      %v1849 = vsub.f32 %v1777, %v1817
      %1850 = vst [vmem:[%s141] sm:$0x1] %v1816
      %v1851 = vmul.f32 %v1818, %v1818
      %v1852 = vmul.f32 %v1819, %v1819
      %v1853 = vmul.f32 %v1820, %v1820
      %v1854 = vmul.f32 %v1821, %v1821
      %v1855 = vmul.f32 %v1822, %v1822
      %v1856 = vmul.f32 %v1823, %v1823
      %v1857 = vmul.f32 %v1824, %v1824
      %v1858 = vmul.f32 %v1825, %v1825
      %v1859 = vmul.f32 %v1826, %v1826
      %v1860 = vmul.f32 %v1827, %v1827
      %v1861 = vmul.f32 %v1828, %v1828
      %v1862 = vmul.f32 %v1829, %v1829
      %v1863 = vmul.f32 %v1830, %v1830
      %v1864 = vmul.f32 %v1831, %v1831
      %v1865 = vmul.f32 %v1832, %v1832
      %v1866 = vmul.f32 %v1833, %v1833
      %v1867 = vmul.f32 %v1834, %v1834
      %v1868 = vmul.f32 %v1835, %v1835
      %v1869 = vmul.f32 %v1836, %v1836
      %v1870 = vmul.f32 %v1837, %v1837
      %v1871 = vmul.f32 %v1838, %v1838
      %v1872 = vmul.f32 %v1839, %v1839
      %v1873 = vmul.f32 %v1840, %v1840
      %v1874 = vmul.f32 %v1841, %v1841
      %v1875 = vmul.f32 %v1842, %v1842
      %v1876 = vmul.f32 %v1843, %v1843
      %v1877 = vmul.f32 %v1844, %v1844
      %v1878 = vmul.f32 %v1845, %v1845
      %v1879 = vmul.f32 %v1846, %v1846
      %v1880 = vmul.f32 %v1847, %v1847
      %v1881 = vmul.f32 %v1848, %v1848
      %v1882 = vmul.f32 %v1849, %v1849
      %v1883 = vadd.f32 %v1851, %v1852
      %v1884 = vadd.f32 %v1883, %v1853
      %v1885 = vadd.f32 %v1884, %v1854
      %v1886 = vadd.f32 %v1885, %v1855
      %v1887 = vadd.f32 %v1886, %v1856
      %v1888 = vadd.f32 %v1887, %v1857
      %v1889 = vadd.f32 %v1888, %v1858
      %v1890 = vadd.f32 %v1889, %v1859
      %v1891 = vadd.f32 %v1890, %v1860
      %v1892 = vadd.f32 %v1891, %v1861
      %v1893 = vadd.f32 %v1892, %v1862
      %v1894 = vadd.f32 %v1893, %v1863
      %v1895 = vadd.f32 %v1894, %v1864
      %v1896 = vadd.f32 %v1895, %v1865
      %v1897 = vadd.f32 %v1896, %v1866
      %v1898 = vadd.f32 %v1897, %v1867
      %v1899 = vadd.f32 %v1898, %v1868
      %v1900 = vadd.f32 %v1899, %v1869
      %v1901 = vadd.f32 %v1900, %v1870
      %v1902 = vadd.f32 %v1901, %v1871
      %v1903 = vadd.f32 %v1902, %v1872
      %v1904 = vadd.f32 %v1903, %v1873
      %v1905 = vadd.f32 %v1904, %v1874
      %v1906 = vadd.f32 %v1905, %v1875
      %v1907 = vadd.f32 %v1906, %v1876
      %v1908 = vadd.f32 %v1907, %v1877
      %v1909 = vadd.f32 %v1908, %v1878
      %v1910 = vadd.f32 %v1909, %v1879
      %v1911 = vadd.f32 %v1910, %v1880
      %v1912 = vadd.f32 %v1911, %v1881
      %v1913 = vadd.f32 %v1912, %v1882
      %v1914 = vrot.slane %v1913, 4
      %v1915 = vadd.f32 %v1913, %v1914
      %v1916 = vrot.slane %v1915, 2
      %v1917 = vadd.f32 %v1915, %v1916
      %v1918 = vrot.slane %v1917, 1
      %v1919 = vadd.f32 %v1917, %v1918
      %1920 = vst [vmem:[%s141 + $0x1] sm:$0x1] %v1919
      %p1921 = scmp.lt.s32.totalorder %s13, 1
      %s1922 = scalar_select %p1921, %s13, 1
      %s1923 = smul.addr %s1922, 2
      %s1924 = scalar_lea.vmem %s2, %s1923
      // Predicated region
      $region29: #{conv_block_forward.2} parent=27 // pred_check
        %p1925 = pneg %p78
      $region30: #{conv_block_forward.2} parent=27 // pred_check_branch
        %1927 = sbr.rel (%p1925) target = $region32
      $region31: #{conv_block_forward.2} parent=27 // pred_region
        _
      $region32: #{conv_block_forward.2} parent=27 // pred_fallthru
        _
    $region28: #{conv_block_forward.2} parent=5 // pred_fallthru
      _
    %p1928 = scmp.le.s32.totalorder 2, %s8
    // Predicated region
    $region33: #{conv_block_forward.2} parent=5 // pred_check
      %p1929 = pneg %p1928
    $region34: #{conv_block_forward.2} parent=5 // pred_check_branch
      %1931 = sbr.rel (%p1929) target = $region36
    $region35: #{conv_block_forward.2} parent=5 // pred_region
      %s1932 = ssub.s32 %s8, 2
      // Predicated region
      $region37: #{conv_block_forward.2} parent=35 // pred_check
        %p1933 = pneg %p84
      $region38: #{conv_block_forward.2} parent=35 // pred_check_branch
        %1935 = sbr.rel (%p1933) target = $region40
      $region39: #{conv_block_forward.2} parent=35 // pred_region
        %p1936 = scmp.lt.s32.totalorder %s14, 1
        %s1937 = scalar_select %p1936, %s14, 1
        %s1938 = smul.addr %s1937, 2
        %s1939 = scalar_lea.vmem %s2, %s1938
      $region40: #{conv_block_forward.2} parent=35 // pred_fallthru
        _
    $region36: #{conv_block_forward.2} parent=5 // pred_fallthru
      _
  $region6: #{conv_block_forward.2} parent=0 // loop_footer
    %s12 = sadd.s32 1, %s8
  $region7: #{conv_block_forward.2} parent=0 // loop_footer_branch
    %7 = sbr.rel target = $region3
  $region8: #{conv_block_forward.2} parent=0 // loop_exit
    _

</llo_original>
